<compile_context>
chip_gen: v7x
topology: tpu7x:2x2x1
jax: 0.10.0
libtpu: 0.0.40
codegen_flags: <defaults>
</compile_context>

<pallas_src>
import functools

import jax
import jax.numpy as jnp
from jax.experimental import pallas as pl
from jax.experimental.pallas import tpu as pltpu

KSIZE = 5
PAD = 2
EPS = 1e-5


def _postnet_kernel(x_ref, w_ref, b_ref, o_ref, *, nb, l_pad, l_valid):
    # x_ref: (C_in, nb*l_pad)   bf16  nb batch segments packed along the lane axis
    # w_ref: (K, C_out, C_in)   bf16  full conv weights (resident, fetched once)
    # b_ref: (C_out, 1)         f32   conv bias column
    # o_ref: (C_out, nb*l_pad)  f32   output in the same packed layout
    c_out, lanes = o_ref.shape
    x = x_ref[...]

    # Per-segment (local) lane index and tap edge masks, hoisted out of the tap
    # loop.  They enforce the conv's zero padding at segment edges and stop
    # rolled data from wrapping across packed segments / the array ends.
    ll = jax.lax.broadcasted_iota(jnp.int32, (1, lanes), 1)
    if nb > 1:
        ll = ll % l_pad
    edge_mask = {
        2: ll >= 2,
        1: ll >= 1,
        -1: ll < (l_pad - 1),
        -2: ll < (l_pad - 2),
    }

    # Conv1d as 5 MXU matmuls with lane-rolled accumulation (f32 accumulator).
    acc = jnp.zeros((c_out, lanes), jnp.float32)
    for k in range(KSIZE):                               # static unrolled taps
        p = jnp.dot(w_ref[k], x, preferred_element_type=jnp.float32)
        s = PAD - k                                      # out[:, l] += p[:, l - s]
        if s != 0:
            p = pltpu.roll(p, shift=s % lanes, axis=1)   # XLU lane rotate
            p = jnp.where(edge_mask[s], p, 0.0)          # zero the wrapped lanes
        acc = acc + p

    y = jnp.tanh(acc + b_ref[...])                       # bias bcast; EUP tanh (f32)

    # InstanceNorm1d (affine=False): per (segment, channel) stats over the true
    # L columns only (padded lanes hold tanh(bias) != 0 and must be excluded).
    inv_l = 1.0 / l_valid
    col_valid = None
    if l_pad != l_valid:
        col_valid = jax.lax.broadcasted_iota(jnp.int32, (1, l_pad), 1) < l_valid
    for b in range(nb):                                  # static, nb is tiny (1..4)
        seg = y[:, b * l_pad:(b + 1) * l_pad]
        segv = seg if col_valid is None else jnp.where(col_valid, seg, 0.0)
        mean = jnp.sum(segv, axis=1, keepdims=True) * inv_l
        mean_sq = jnp.sum(segv * segv, axis=1, keepdims=True) * inv_l
        var = jnp.maximum(mean_sq - mean * mean, 0.0)    # biased var, like PyTorch
        o_ref[:, b * l_pad:(b + 1) * l_pad] = (
            (seg - mean) * jax.lax.rsqrt(var + EPS)).astype(o_ref.dtype)


def postnet_block(x_ncl, weight, bias):
    """x_ncl: (N, C_in, L) f32.  weight: (C_out, C_in, K) f32.  bias: (C_out,) f32."""
    N, c_in, L = x_ncl.shape
    c_out, _, k = weight.shape
    assert k == KSIZE

    # Lane-dense geometry: pad L to a multiple of 128 and, for short sequences,
    # pack nb batch elements along the lane axis (target ~512 lanes / matmul).
    # Keep >= 2 grid steps whenever N >= 2 so both v7x TensorCores get work.
    l_pad = ((L + 127) // 128) * 128
    nb = max(1, min(N, 512 // l_pad, max(1, N // 2)))
    while N % nb:
        nb -= 1
    g = N // nb
    lanes = nb * l_pad

    # HBM-side prep: bf16 x (half the DMA bytes), zero pad, optional packing.
    x_bf = x_ncl.astype(jnp.bfloat16)
    if l_pad != L:
        x_bf = jnp.pad(x_bf, ((0, 0), (0, 0), (0, l_pad - L)))
    if nb > 1:
        x_pk = (x_bf.reshape(g, nb, c_in, l_pad)
                .transpose(0, 2, 1, 3)
                .reshape(g, c_in, lanes))
    else:
        x_pk = x_bf.reshape(g, c_in, lanes)

    w_koi = jnp.transpose(weight, (2, 0, 1)).astype(jnp.bfloat16)   # (K, C_out, C_in)
    b_col = bias.astype(jnp.float32).reshape(c_out, 1)              # (C_out, 1)

    kernel = functools.partial(_postnet_kernel, nb=nb, l_pad=l_pad, l_valid=L)

    flops = 2 * g * lanes * KSIZE * c_in * c_out
    # Weights are fetched once (constant block index), x/out once per grid step.
    bytes_accessed = (x_pk.size * 2 + w_koi.size * 2 + b_col.size * 4
                      + g * c_out * lanes * 4)

    out = pl.pallas_call(
        kernel,
        out_shape=jax.ShapeDtypeStruct((g, c_out, lanes), jnp.float32),
        grid_spec=pltpu.PrefetchScalarGridSpec(
            num_scalar_prefetch=0,
            grid=(g,),
            in_specs=[
                pl.BlockSpec((None, c_in, lanes), lambda i: (i, 0, 0)),
                # Constant block index -> full weights DMA'd into VMEM only once.
                pl.BlockSpec((KSIZE, c_out, c_in), lambda i: (0, 0, 0)),
                pl.BlockSpec((c_out, 1), lambda i: (0, 0)),
            ],
            out_specs=pl.BlockSpec((None, c_out, lanes), lambda i: (i, 0, 0)),
        ),
        compiler_params=pltpu.CompilerParams(
            dimension_semantics=("parallel",),
            vmem_limit_bytes=40 * 1024 * 1024,   # <=62% of v7x's 64 MiB VMEM
        ),
        cost_estimate=pl.CostEstimate(
            flops=flops,
            transcendentals=g * c_out * lanes,
            bytes_accessed=bytes_accessed,
        ),
    )(x_pk, w_koi, b_col)

    # Undo packing / padding (cheap XLA glue on the small parameter-free output).
    if nb > 1:
        out = (out.reshape(g, c_out, nb, l_pad)
               .transpose(0, 2, 1, 3)
               .reshape(N, c_out, l_pad))
    else:
        out = out.reshape(N, c_out, l_pad)
    if l_pad != L:
        out = out[:, :, :L]
    return out.astype(x_ncl.dtype)


def postnet_block_ref(x_ncl, weight, bias):
    """Pure-JAX reference matching PyTorch semantics (f32 throughout)."""
    y = jax.lax.conv_general_dilated(
        x_ncl, weight, window_strides=(1,), padding=[(PAD, PAD)],
        dimension_numbers=("NCH", "OIH", "NCH"),
    ) + bias[None, :, None]
    y = jnp.tanh(y)
    mean = jnp.mean(y, axis=2, keepdims=True)
    var = jnp.mean((y - mean) ** 2, axis=2, keepdims=True)
    return (y - mean) * jax.lax.rsqrt(var + EPS)


if __name__ == "__main__":
    # Module fixes in_channels=512; small out_channels / length for the test.
    N, C_IN, C_OUT, L = 2, 512, 256, 64

    key = jax.random.PRNGKey(0)
    kx, kw, kb = jax.random.split(key, 3)

    # Deterministic synthetic parameters (PyTorch-style uniform fan-in bound).
    fan_in = C_IN * KSIZE
    bound = 1.0 / (fan_in ** 0.5)
    weight = jax.random.uniform(kw, (C_OUT, C_IN, KSIZE), jnp.float32, -bound, bound)
    bias = jax.random.uniform(kb, (C_OUT,), jnp.float32, -bound, bound)
    x = jax.random.normal(kx, (N, C_IN, L), jnp.float32)

    out = jax.block_until_ready(postnet_block(x, weight, bias))
    ref = jax.block_until_ready(postnet_block_ref(x, weight, bias))
    assert out.shape == (N, C_OUT, L)
    err = jnp.max(jnp.abs(out - ref))
    assert jnp.allclose(out, ref, atol=3e-2, rtol=3e-2), f"max abs err {err}"

    # Second config exercises the batch-packing (nb=2) + L-padding + mask paths.
    N2, L2 = 4, 48
    x2 = jax.random.normal(jax.random.PRNGKey(1), (N2, C_IN, L2), jnp.float32)
    out2 = jax.block_until_ready(postnet_block(x2, weight, bias))
    ref2 = jax.block_until_ready(postnet_block_ref(x2, weight, bias))
    assert out2.shape == (N2, C_OUT, L2)
    err2 = jnp.max(jnp.abs(out2 - ref2))
    assert jnp.allclose(out2, ref2, atol=3e-2, rtol=3e-2), f"max abs err {err2}"

    print("KERNEL_OK")
</pallas_src>

<mosaic_0001>
module attributes {stable_mosaic.version = 11 : i64} {
  func.func @_postnet_kernel(%arg0: i32, %arg1: memref<1x512x128xbf16, #tpu.memory_space<vmem>>, %arg2: memref<5x256x512xbf16, #tpu.memory_space<vmem>>, %arg3: memref<256x1xf32, #tpu.memory_space<vmem>>, %arg4: memref<1x256x128xf32, #tpu.memory_space<vmem>>) attributes {dimension_semantics = [#tpu.dimension_semantics<parallel>], iteration_bounds = array<i64: 2>, scalar_prefetch = 0 : i64, scratch_operands = 0 : i64, tpu.core_type = #tpu.core_type<tc>, window_params = [{transform_indices = @transform_0, window_bounds = array<i64: 1, 512, 128>}, {pipeline_mode = #tpu.pipeline_mode<synchronous>, transform_indices = @transform_1, window_bounds = array<i64: 5, 256, 512>}, {pipeline_mode = #tpu.pipeline_mode<synchronous>, transform_indices = @transform_2, window_bounds = array<i64: 256, 1>}, {transform_indices = @transform_3, window_bounds = array<i64: 1, 256, 128>}]} {
    %c0 = arith.constant 0 : index
    %c0_0 = arith.constant 0 : index
    %c0_1 = arith.constant 0 : index
    %0 = vector.load %arg1[%c0, %c0_0, %c0_1] : memref<1x512x128xbf16, #tpu.memory_space<vmem>>, vector<1x512x128xbf16>
    %1 = vector.shape_cast %0 : vector<1x512x128xbf16> to vector<512x128xbf16>
    %2 = tpu.iota {dimensions = array<i32: 1>} : vector<1x128xi32>
    %c2_i32 = arith.constant 2 : i32
    %3 = vector.broadcast %c2_i32 : i32 to vector<1x128xi32>
    %4 = arith.cmpi sge, %2, %3 : vector<1x128xi32>
    %c1_i32 = arith.constant 1 : i32
    %5 = vector.broadcast %c1_i32 : i32 to vector<1x128xi32>
    %6 = arith.cmpi sge, %2, %5 : vector<1x128xi32>
    %c127_i32 = arith.constant 127 : i32
    %7 = vector.broadcast %c127_i32 : i32 to vector<1x128xi32>
    %8 = arith.cmpi slt, %2, %7 : vector<1x128xi32>
    %c126_i32 = arith.constant 126 : i32
    %9 = vector.broadcast %c126_i32 : i32 to vector<1x128xi32>
    %10 = arith.cmpi slt, %2, %9 : vector<1x128xi32>
    %cst = arith.constant 0.000000e+00 : f32
    %11 = vector.broadcast %cst : f32 to vector<256x128xf32>
    %c0_2 = arith.constant 0 : index
    %c0_3 = arith.constant 0 : index
    %c0_4 = arith.constant 0 : index
    %12 = vector.load %arg2[%c0_2, %c0_3, %c0_4] : memref<5x256x512xbf16, #tpu.memory_space<vmem>>, vector<1x256x512xbf16>
    %13 = vector.shape_cast %12 : vector<1x256x512xbf16> to vector<256x512xbf16>
    %cst_5 = arith.constant dense<0.000000e+00> : vector<256x128xf32>
    %14 = tpu.matmul %13, %1, %cst_5 {dimension_numbers = #tpu.dot_dimension_numbers<[1], [0], [0], [1], [0, 0, 1, 1], [], []>} : vector<256x512xbf16>, vector<512x128xbf16>, vector<256x128xf32> -> vector<256x128xf32>
    %c2_i32_6 = arith.constant 2 : i32
    %15 = tpu.dynamic_rotate %14 by %c2_i32_6 dim 1 : vector<256x128xf32>, i32 -> vector<256x128xf32>
    %cst_7 = arith.constant 0.000000e+00 : f32
    %16 = vector.shape_cast %4 : vector<1x128xi1> to vector<1x128xi1>
    %17 = vector.broadcast %16 : vector<1x128xi1> to vector<256x128xi1>
    %18 = vector.broadcast %cst_7 : f32 to vector<256x128xf32>
    %19 = arith.select %17, %15, %18 : vector<256x128xi1>, vector<256x128xf32>
    %20 = arith.addf %11, %19 : vector<256x128xf32>
    %c1 = arith.constant 1 : index
    %c0_8 = arith.constant 0 : index
    %c0_9 = arith.constant 0 : index
    %21 = vector.load %arg2[%c1, %c0_8, %c0_9] : memref<5x256x512xbf16, #tpu.memory_space<vmem>>, vector<1x256x512xbf16>
    %22 = vector.shape_cast %21 : vector<1x256x512xbf16> to vector<256x512xbf16>
    %cst_10 = arith.constant dense<0.000000e+00> : vector<256x128xf32>
    %23 = tpu.matmul %22, %1, %cst_10 {dimension_numbers = #tpu.dot_dimension_numbers<[1], [0], [0], [1], [0, 0, 1, 1], [], []>} : vector<256x512xbf16>, vector<512x128xbf16>, vector<256x128xf32> -> vector<256x128xf32>
    %c1_i32_11 = arith.constant 1 : i32
    %24 = tpu.dynamic_rotate %23 by %c1_i32_11 dim 1 : vector<256x128xf32>, i32 -> vector<256x128xf32>
    %cst_12 = arith.constant 0.000000e+00 : f32
    %25 = vector.shape_cast %6 : vector<1x128xi1> to vector<1x128xi1>
    %26 = vector.broadcast %25 : vector<1x128xi1> to vector<256x128xi1>
    %27 = vector.broadcast %cst_12 : f32 to vector<256x128xf32>
    %28 = arith.select %26, %24, %27 : vector<256x128xi1>, vector<256x128xf32>
    %29 = arith.addf %20, %28 : vector<256x128xf32>
    %c2 = arith.constant 2 : index
    %c0_13 = arith.constant 0 : index
    %c0_14 = arith.constant 0 : index
    %30 = vector.load %arg2[%c2, %c0_13, %c0_14] : memref<5x256x512xbf16, #tpu.memory_space<vmem>>, vector<1x256x512xbf16>
    %31 = vector.shape_cast %30 : vector<1x256x512xbf16> to vector<256x512xbf16>
    %cst_15 = arith.constant dense<0.000000e+00> : vector<256x128xf32>
    %32 = tpu.matmul %31, %1, %cst_15 {dimension_numbers = #tpu.dot_dimension_numbers<[1], [0], [0], [1], [0, 0, 1, 1], [], []>} : vector<256x512xbf16>, vector<512x128xbf16>, vector<256x128xf32> -> vector<256x128xf32>
    %33 = arith.addf %29, %32 : vector<256x128xf32>
    %c3 = arith.constant 3 : index
    %c0_16 = arith.constant 0 : index
    %c0_17 = arith.constant 0 : index
    %34 = vector.load %arg2[%c3, %c0_16, %c0_17] : memref<5x256x512xbf16, #tpu.memory_space<vmem>>, vector<1x256x512xbf16>
    %35 = vector.shape_cast %34 : vector<1x256x512xbf16> to vector<256x512xbf16>
    %cst_18 = arith.constant dense<0.000000e+00> : vector<256x128xf32>
    %36 = tpu.matmul %35, %1, %cst_18 {dimension_numbers = #tpu.dot_dimension_numbers<[1], [0], [0], [1], [0, 0, 1, 1], [], []>} : vector<256x512xbf16>, vector<512x128xbf16>, vector<256x128xf32> -> vector<256x128xf32>
    %c127_i32_19 = arith.constant 127 : i32
    %37 = tpu.dynamic_rotate %36 by %c127_i32_19 dim 1 : vector<256x128xf32>, i32 -> vector<256x128xf32>
    %cst_20 = arith.constant 0.000000e+00 : f32
    %38 = vector.shape_cast %8 : vector<1x128xi1> to vector<1x128xi1>
    %39 = vector.broadcast %38 : vector<1x128xi1> to vector<256x128xi1>
    %40 = vector.broadcast %cst_20 : f32 to vector<256x128xf32>
    %41 = arith.select %39, %37, %40 : vector<256x128xi1>, vector<256x128xf32>
    %42 = arith.addf %33, %41 : vector<256x128xf32>
    %c4 = arith.constant 4 : index
    %c0_21 = arith.constant 0 : index
    %c0_22 = arith.constant 0 : index
    %43 = vector.load %arg2[%c4, %c0_21, %c0_22] : memref<5x256x512xbf16, #tpu.memory_space<vmem>>, vector<1x256x512xbf16>
    %44 = vector.shape_cast %43 : vector<1x256x512xbf16> to vector<256x512xbf16>
    %cst_23 = arith.constant dense<0.000000e+00> : vector<256x128xf32>
    %45 = tpu.matmul %44, %1, %cst_23 {dimension_numbers = #tpu.dot_dimension_numbers<[1], [0], [0], [1], [0, 0, 1, 1], [], []>} : vector<256x512xbf16>, vector<512x128xbf16>, vector<256x128xf32> -> vector<256x128xf32>
    %c126_i32_24 = arith.constant 126 : i32
    %46 = tpu.dynamic_rotate %45 by %c126_i32_24 dim 1 : vector<256x128xf32>, i32 -> vector<256x128xf32>
    %cst_25 = arith.constant 0.000000e+00 : f32
    %47 = vector.shape_cast %10 : vector<1x128xi1> to vector<1x128xi1>
    %48 = vector.broadcast %47 : vector<1x128xi1> to vector<256x128xi1>
    %49 = vector.broadcast %cst_25 : f32 to vector<256x128xf32>
    %50 = arith.select %48, %46, %49 : vector<256x128xi1>, vector<256x128xf32>
    %51 = arith.addf %42, %50 : vector<256x128xf32>
    %c0_26 = arith.constant 0 : index
    %c0_27 = arith.constant 0 : index
    %52 = vector.load %arg3[%c0_26, %c0_27] : memref<256x1xf32, #tpu.memory_space<vmem>>, vector<256x1xf32>
    %53 = vector.broadcast %52 : vector<256x1xf32> to vector<256x128xf32>
    %54 = arith.addf %51, %53 : vector<256x128xf32>
    %55 = math.tanh %54 : vector<256x128xf32>
    %56 = tpu.iota {dimensions = array<i32: 1>} : vector<1x128xi32>
    %c64_i32 = arith.constant 64 : i32
    %57 = vector.broadcast %c64_i32 : i32 to vector<1x128xi32>
    %58 = arith.cmpi slt, %56, %57 : vector<1x128xi32>
    %cst_28 = arith.constant 0.000000e+00 : f32
    %59 = vector.shape_cast %58 : vector<1x128xi1> to vector<1x128xi1>
    %60 = vector.broadcast %59 : vector<1x128xi1> to vector<256x128xi1>
    %61 = vector.broadcast %cst_28 : f32 to vector<256x128xf32>
    %62 = arith.select %60, %55, %61 : vector<256x128xi1>, vector<256x128xf32>
    %cst_29 = arith.constant dense<0.000000e+00> : vector<256xf32>
    %63 = vector.multi_reduction <add>, %62, %cst_29 [1] : vector<256x128xf32> to vector<256xf32>
    %64 = vector.shape_cast %63 : vector<256xf32> to vector<256x1xf32>
    %cst_30 = arith.constant 1.562500e-02 : f32
    %65 = vector.broadcast %cst_30 : f32 to vector<256x1xf32>
    %66 = arith.mulf %64, %65 : vector<256x1xf32>
    %67 = arith.mulf %62, %62 : vector<256x128xf32>
    %cst_31 = arith.constant dense<0.000000e+00> : vector<256xf32>
    %68 = vector.multi_reduction <add>, %67, %cst_31 [1] : vector<256x128xf32> to vector<256xf32>
    %69 = vector.shape_cast %68 : vector<256xf32> to vector<256x1xf32>
    %cst_32 = arith.constant 1.562500e-02 : f32
    %70 = vector.broadcast %cst_32 : f32 to vector<256x1xf32>
    %71 = arith.mulf %69, %70 : vector<256x1xf32>
    %72 = arith.mulf %66, %66 : vector<256x1xf32>
    %73 = arith.subf %71, %72 : vector<256x1xf32>
    %cst_33 = arith.constant 0.000000e+00 : f32
    %74 = vector.broadcast %cst_33 : f32 to vector<256x1xf32>
    %75 = arith.maximumf %73, %74 : vector<256x1xf32>
    %76 = vector.broadcast %66 : vector<256x1xf32> to vector<256x128xf32>
    %77 = arith.subf %55, %76 : vector<256x128xf32>
    %cst_34 = arith.constant 9.99999974E-6 : f32
    %78 = vector.broadcast %cst_34 : f32 to vector<256x1xf32>
    %79 = arith.addf %75, %78 : vector<256x1xf32>
    %80 = math.rsqrt %79 : vector<256x1xf32>
    %81 = vector.broadcast %80 : vector<256x1xf32> to vector<256x128xf32>
    %82 = arith.mulf %77, %81 : vector<256x128xf32>
    %c0_35 = arith.constant 0 : index
    %c0_36 = arith.constant 0 : index
    %c0_37 = arith.constant 0 : index
    %83 = vector.load %arg4[%c0_35, %c0_36, %c0_37] : memref<1x256x128xf32, #tpu.memory_space<vmem>>, vector<1x256x128xf32>
    %84 = vector.shape_cast %83 : vector<1x256x128xf32> to vector<256x128xf32>
    %85 = vector.shape_cast %82 : vector<256x128xf32> to vector<1x256x128xf32>
    tpu.vector_store %arg4[%c0_35, %c0_36, %c0_37], %85 {strides = array<i32>} : memref<1x256x128xf32, #tpu.memory_space<vmem>>, vector<1x256x128xf32>,
    return
  }
  func.func @transform_0(%arg0: i32) -> (i32, i32, i32) {
    %c0_i32 = arith.constant 0 : i32
    %c0_i32_0 = arith.constant 0 : i32
    %c0_i32_1 = arith.constant 0 : i32
    return %arg0, %c0_i32, %c0_i32_0 : i32, i32, i32
  }
  func.func @transform_1(%arg0: i32) -> (i32, i32, i32) {
    %c0_i32 = arith.constant 0 : i32
    %c0_i32_0 = arith.constant 0 : i32
    %c0_i32_1 = arith.constant 0 : i32
    %c0_i32_2 = arith.constant 0 : i32
    return %c0_i32, %c0_i32_0, %c0_i32_1 : i32, i32, i32
  }
  func.func @transform_2(%arg0: i32) -> (i32, i32) {
    %c0_i32 = arith.constant 0 : i32
    %c0_i32_0 = arith.constant 0 : i32
    %c0_i32_1 = arith.constant 0 : i32
    return %c0_i32, %c0_i32_0 : i32, i32
  }
  func.func @transform_3(%arg0: i32) -> (i32, i32, i32) {
    %c0_i32 = arith.constant 0 : i32
    %c0_i32_0 = arith.constant 0 : i32
    %c0_i32_1 = arith.constant 0 : i32
    return %arg0, %c0_i32, %c0_i32_0 : i32, i32, i32
  }
}

</mosaic_0001>

<llo_original>
// kernel: tpu_custom_call.1
$region0: #{tpu_custom_call.1}
  #allocation0 [shape = 'u32[]', space=smem, size = 0x4, offset = 0x4, fixed_abs, tag = 'smem constant byte address 0x4 - core index']
  #allocation1 [shape = 'u32[144,128]{1,0:T(1,128)}', space=vmem, size = 0x12000, scoped, tag = 'internal scratch']
  %s0 = inlined_call_operand.hbm [shape: bf16[2,512,128], index: 0, kind: input, shape index: {}]
  %s1 = inlined_call_operand.hbm [shape: bf16[5,256,512], index: 1, kind: input, shape index: {}]
  %s2 = inlined_call_operand.vmem [shape: f32[256,1], index: 2, kind: input, shape index: {}]
  %s3 = inlined_call_operand.hbm [shape: f32[2,256,128], index: 3, kind: output, shape index: {}]
  %s4 = sld [smem:[#allocation0]]
  $region53: #{tpu_custom_call.1} parent=0
    _
  %s6 = ssub.s32 1, %s4
  %s7 = scalar_select 0, %s6, %s4
  $region1: #{tpu_custom_call.1} parent=0
    #allocation2 [shape = 'u8[262144]{0}', space=vmem, size = 0x40000, scoped, tag = 'input window, operand 0']
    #allocation3 [shape = 's32[2]{0}', space=sflag, size = 0x8, scoped, tag = 'scoped memory for tpu_custom_call.1']
    #allocation4 [shape = 's32[2]{0}', space=sflag, size = 0x8, scoped, tag = 'scoped memory for tpu_custom_call.1']
    #allocation5 [shape = 'u8[1310720]{0}', space=vmem, size = 0x140000, scoped, tag = 'input window, operand 1, single buffered']
    #allocation6 [shape = 's32[1]{0}', space=sflag, size = 0x4, scoped, tag = 'scoped memory for tpu_custom_call.1']
    #allocation7 [shape = 'u8[262144]{0}', space=vmem, size = 0x40000, scoped, tag = 'output window, operand 0']
    %8 = vsyncpa [#allocation3], 0
    %s9 = scalar_lea.sflag [#allocation3], 1
    %10 = vsyncpa %s9, 0
    %11 = vsyncpa [#allocation6], 0
    %12 = vsyncpa [#allocation4], 0
    %s13 = scalar_lea.sflag [#allocation4], 1
    %14 = vsyncpa %s13, 0
    loop: start=0, step=1, limit=4
    $region2: #{tpu_custom_call.1} parent=1 // loop_pre_header
      _
    $region3: #{tpu_custom_call.1} parent=1 // loop_header
      %s16 = sphi 0, %s20
      %p17 = scmp.ge.s32.totalorder %s16, 4
      %s26 = sphi 0, %s28
      %s29 = sphi 0, %s26
      %s30 = sphi 0, %s29
      %s46 = sphi 0, %s30
      %s50 = sphi 0, %s50
      %s52 = sphi 0, %s50
      %s53 = sphi 0, %s52
      %s67 = sphi 0, %s53
      %s71 = sphi 0, %s71
      %s73 = sphi 0, %s71
      %s74 = sphi 0, %s73
      %s88 = sphi 0, %s74
      %s94 = sphi 0, %s96
      %s97 = sphi 0, %s94
      %s98 = sphi 0, %s97
      %s114 = sphi 0, %s98
    $region4: #{tpu_custom_call.1} parent=1 // loop_header_branch
      %19 = sbr.rel (%p17) target = $region8
    $region5: #{tpu_custom_call.1} parent=1 // loop_body
      %s21 = ssub.s32 %s16, 1
      %s22 = ssub.s32 %s16, 2
      %s23 = sadd.s32 %s16, 1
      %s24 = ssub.s32 %s16, %s23
      %p25 = scmp.eq.s32.totalorder %s24, 0
      %s27 = sadd.s32 %s26, 1
      %s28 = scalar_select %p25, %s26, %s27
      %p31 = pneg %p25
      %p32 = scmp.eq.s32.totalorder %s16, 1
      %p33 = por %p31, %p32
      %p34 = scmp.ne.s32.totalorder %s26, %s29
      %p35 = scmp.eq.s32.totalorder %s16, 0
      %p36 = por %p34, %p35
      %p37 = scmp.ne.s32.totalorder %s26, %s29
      %p38 = scmp.eq.s32.totalorder %s21, 1
      %p39 = por %p37, %p38
      %p40 = scmp.ne.s32.totalorder %s29, %s30
      %p41 = scmp.eq.s32.totalorder %s21, 0
      %p42 = por %p40, %p41
      %p43 = scmp.ne.s32.totalorder %s29, %s30
      %p44 = scmp.eq.s32.totalorder %s22, 1
      %p45 = por %p43, %p44
      %p47 = scmp.ne.s32.totalorder %s30, %s46
      %p48 = scmp.eq.s32.totalorder %s22, 0
      %p49 = por %p47, %p48
      %s51 = sadd.s32 %s50, 1
      %p54 = scmp.eq.s32.totalorder %s16, 1
      %p55 = scmp.ne.s32.totalorder %s50, %s52
      %p56 = scmp.eq.s32.totalorder %s16, 0
      %p57 = por %p55, %p56
      %p58 = scmp.ne.s32.totalorder %s50, %s52
      %p59 = scmp.eq.s32.totalorder %s21, 1
      %p60 = por %p58, %p59
      %p61 = scmp.ne.s32.totalorder %s52, %s53
      %p62 = scmp.eq.s32.totalorder %s21, 0
      %p63 = por %p61, %p62
      %p64 = scmp.ne.s32.totalorder %s52, %s53
      %p65 = scmp.eq.s32.totalorder %s22, 1
      %p66 = por %p64, %p65
      %p68 = scmp.ne.s32.totalorder %s53, %s67
      %p69 = scmp.eq.s32.totalorder %s22, 0
      %p70 = por %p68, %p69
      %s72 = sadd.s32 %s71, 1
      %p75 = scmp.eq.s32.totalorder %s16, 1
      %p76 = scmp.ne.s32.totalorder %s71, %s73
      %p77 = scmp.eq.s32.totalorder %s16, 0
      %p78 = por %p76, %p77
      %p79 = scmp.ne.s32.totalorder %s71, %s73
      %p80 = scmp.eq.s32.totalorder %s21, 1
      %p81 = por %p79, %p80
      %p82 = scmp.ne.s32.totalorder %s73, %s74
      %p83 = scmp.eq.s32.totalorder %s21, 0
      %p84 = por %p82, %p83
      %p85 = scmp.ne.s32.totalorder %s73, %s74
      %p86 = scmp.eq.s32.totalorder %s22, 1
      %p87 = por %p85, %p86
      %p89 = scmp.ne.s32.totalorder %s74, %s88
      %p90 = scmp.eq.s32.totalorder %s22, 0
      %p91 = por %p89, %p90
      %s92 = ssub.s32 %s16, %s23
      %p93 = scmp.eq.s32.totalorder %s92, 0
      %s95 = sadd.s32 %s94, 1
      %s96 = scalar_select %p93, %s94, %s95
      %p99 = pneg %p93
      %p100 = scmp.eq.s32.totalorder %s16, 1
      %p101 = por %p99, %p100
      %p102 = scmp.ne.s32.totalorder %s94, %s97
      %p103 = scmp.eq.s32.totalorder %s16, 0
      %p104 = por %p102, %p103
      %p105 = scmp.ne.s32.totalorder %s94, %s97
      %p106 = scmp.eq.s32.totalorder %s21, 1
      %p107 = por %p105, %p106
      %p108 = scmp.ne.s32.totalorder %s97, %s98
      %p109 = scmp.eq.s32.totalorder %s21, 0
      %p110 = por %p108, %p109
      %p111 = scmp.ne.s32.totalorder %s97, %s98
      %p112 = scmp.eq.s32.totalorder %s22, 1
      %p113 = por %p111, %p112
      %p115 = scmp.ne.s32.totalorder %s98, %s114
      %p116 = scmp.eq.s32.totalorder %s22, 0
      %p117 = por %p115, %p116
      %p118 = scmp.le.s32.totalorder 1, %s16
      %p119 = scmp.lt.s32.totalorder %s16, 3
      %p120 = pnand %p118, %p119
      %p121 = pneg %p120
      // Predicated region
      $region9: #{tpu_custom_call.1} parent=5 // pred_check
        _
      $region10: #{tpu_custom_call.1} parent=5 // pred_check_branch
        %123 = sbr.rel (%p120) target = $region12
      $region11: #{tpu_custom_call.1} parent=5 // pred_region
        %s124 = ssub.s32 %s16, 1
        // Predicated region
        $region13: #{tpu_custom_call.1} parent=11 // pred_check
          %p125 = pneg %p63
        $region14: #{tpu_custom_call.1} parent=11 // pred_check_branch
          %127 = sbr.rel (%p125) target = $region16
        $region15: #{tpu_custom_call.1} parent=11 // pred_region
          %s129 = ssub.s32 40960, 40960
          %130 = vsyncadd [#allocation6], %s129
          %s131 = sshll.u32 [#allocation5], 4
          %s132 = int_to_ptr.vmem [resolvable:$true] %s131
          %137 = dma.hbm_to_vmem [thread:$0]  %s1, 40960, %s132, [#allocation6], 256, 256, 16
        $region16: #{tpu_custom_call.1} parent=11 // pred_fallthru
          _
        // Predicated region
        $region17: #{tpu_custom_call.1} parent=11 // pred_check
          %p138 = pneg %p84
        $region18: #{tpu_custom_call.1} parent=11 // pred_check_branch
          %140 = sbr.rel (%p138) target = $region20
        $region19: #{tpu_custom_call.1} parent=11 // pred_region
          _
        $region20: #{tpu_custom_call.1} parent=11 // pred_fallthru
          _
      $region12: #{tpu_custom_call.1} parent=5 // pred_fallthru
        _
      %p141 = scmp.lt.s32.totalorder %s16, 2
      // Predicated region
      $region21: #{tpu_custom_call.1} parent=5 // pred_check
        %p142 = pneg %p141
      $region22: #{tpu_custom_call.1} parent=5 // pred_check_branch
        %144 = sbr.rel (%p142) target = $region24
      $region23: #{tpu_custom_call.1} parent=5 // pred_region
        // Predicated region
        $region25: #{tpu_custom_call.1} parent=23 // pred_check
          %p145 = pneg %p36
        $region26: #{tpu_custom_call.1} parent=23 // pred_check_branch
          %147 = sbr.rel (%p145) target = $region28
        $region27: #{tpu_custom_call.1} parent=23 // pred_region
          %s148 = sand.u32 %s26, 1
          %s149 = scalar_lea.sflag [#allocation3], %s148
          %s150 = sand.u32 %s26, 1
          %s151 = smul.addr %s150, 256
          %s152 = scalar_lea.vmem [#allocation2], %s151
          %s154 = ssub.s32 4096, 4096
          %155 = vsyncadd %s149, %s154
          %s156 = smul.addr %s16, 64
          %s157 = smul.addr %s156, 64
          %s158 = scalar_lea.hbm %s0, %s157
          %s159 = sshll.u32 %s152, 4
          %s160 = int_to_ptr.vmem [resolvable:$true] %s159
          %165 = dma.hbm_to_vmem [thread:$0]  %s158, 4096, %s160, %s149, 64, 64, 4
        $region28: #{tpu_custom_call.1} parent=23 // pred_fallthru
          _
      $region24: #{tpu_custom_call.1} parent=5 // pred_fallthru
        _
      %p166 = scmp.le.s32.totalorder 1, %s16
      %p167 = scmp.lt.s32.totalorder %s16, 3
      %p168 = pnand %p166, %p167
      %p169 = pneg %p168
      // Predicated region
      $region29: #{tpu_custom_call.1} parent=5 // pred_check
        _
      $region30: #{tpu_custom_call.1} parent=5 // pred_check_branch
        %171 = sbr.rel (%p168) target = $region32
      $region31: #{tpu_custom_call.1} parent=5 // pred_region
        %s172 = ssub.s32 %s16, 1
        %s173 = sand.u32 %s29, 1
        %s174 = scalar_lea.sflag [#allocation3], %s173
        %s175 = sand.u32 %s29, 1
        %s176 = smul.addr %s175, 256
        %s177 = scalar_lea.vmem [#allocation2], %s176
        // Predicated region
        $region33: #{tpu_custom_call.1} parent=31 // pred_check
          %p178 = pneg %p42
        $region34: #{tpu_custom_call.1} parent=31 // pred_check_branch
          %180 = sbr.rel (%p178) target = $region36
        $region35: #{tpu_custom_call.1} parent=31 // pred_region
          %181 = dma.done %s174, 4096
        $region36: #{tpu_custom_call.1} parent=31 // pred_fallthru
          _
        // Predicated region
        $region37: #{tpu_custom_call.1} parent=31 // pred_check
          %p182 = pneg %p63
        $region38: #{tpu_custom_call.1} parent=31 // pred_check_branch
          %184 = sbr.rel (%p182) target = $region40
        $region39: #{tpu_custom_call.1} parent=31 // pred_region
          %185 = dma.done [#allocation6], 40960
        $region40: #{tpu_custom_call.1} parent=31 // pred_fallthru
          _
        %s186 = sand.u32 %s29, 1
        %s187 = scalar_lea.sflag [#allocation3], %s186
        %s188 = sand.u32 %s29, 1
        %s189 = smul.addr %s188, 256
        %s190 = scalar_lea.vmem [#allocation2], %s189
        %p191 = pneg %p42
        %p192 = pneg %p39
        %p193 = pneg %p63
        %p194 = pneg %p60
        %p195 = pneg %p84
        %p196 = pneg %p81
        %p197 = pneg %p110
        %p198 = pneg %p107
        %s199 = sand.u32 %s97, 1
        %s200 = scalar_lea.sflag [#allocation4], %s199
        %s201 = sand.u32 %s97, 1
        %s202 = smul.addr %s201, 256
        %s203 = scalar_lea.vmem [#allocation7], %s202
        %v205 = vld [vmem:[%s177] sm:$0xf]
        %v206 = vld [vmem:[%s177 + $0x4] sm:$0xf]
        %v207 = vld [vmem:[%s177 + $0x8] sm:$0xf]
        %v208 = vld [vmem:[%s177 + $0xc] sm:$0xf]
        %v209 = vld [vmem:[%s177 + $0x10] sm:$0xf]
        %v210 = vld [vmem:[%s177 + $0x14] sm:$0xf]
        %v211 = vld [vmem:[%s177 + $0x18] sm:$0xf]
        %v212 = vld [vmem:[%s177 + $0x1c] sm:$0xf]
        %v213 = vld [vmem:[%s177 + $0x20] sm:$0xf]
        %v214 = vld [vmem:[%s177 + $0x24] sm:$0xf]
        %v215 = vld [vmem:[%s177 + $0x28] sm:$0xf]
        %v216 = vld [vmem:[%s177 + $0x2c] sm:$0xf]
        %v217 = vld [vmem:[%s177 + $0x30] sm:$0xf]
        %v218 = vld [vmem:[%s177 + $0x34] sm:$0xf]
        %v219 = vld [vmem:[%s177 + $0x38] sm:$0xf]
        %v220 = vld [vmem:[%s177 + $0x3c] sm:$0xf]
        %v221 = vld [vmem:[%s177 + $0x40] sm:$0xf]
        %v222 = vld [vmem:[%s177 + $0x44] sm:$0xf]
        %v223 = vld [vmem:[%s177 + $0x48] sm:$0xf]
        %v224 = vld [vmem:[%s177 + $0x4c] sm:$0xf]
        %v225 = vld [vmem:[%s177 + $0x50] sm:$0xf]
        %v226 = vld [vmem:[%s177 + $0x54] sm:$0xf]
        %v227 = vld [vmem:[%s177 + $0x58] sm:$0xf]
        %v228 = vld [vmem:[%s177 + $0x5c] sm:$0xf]
        %v229 = vld [vmem:[%s177 + $0x60] sm:$0xf]
        %v230 = vld [vmem:[%s177 + $0x64] sm:$0xf]
        %v231 = vld [vmem:[%s177 + $0x68] sm:$0xf]
        %v232 = vld [vmem:[%s177 + $0x6c] sm:$0xf]
        %v233 = vld [vmem:[%s177 + $0x70] sm:$0xf]
        %v234 = vld [vmem:[%s177 + $0x74] sm:$0xf]
        %v235 = vld [vmem:[%s177 + $0x78] sm:$0xf]
        %v236 = vld [vmem:[%s177 + $0x7c] sm:$0xf]
        %v237 = vld [vmem:[%s177 + $0x80] sm:$0xf]
        %v238 = vld [vmem:[%s177 + $0x84] sm:$0xf]
        %v239 = vld [vmem:[%s177 + $0x88] sm:$0xf]
        %v240 = vld [vmem:[%s177 + $0x8c] sm:$0xf]
        %v241 = vld [vmem:[%s177 + $0x90] sm:$0xf]
        %v242 = vld [vmem:[%s177 + $0x94] sm:$0xf]
        %v243 = vld [vmem:[%s177 + $0x98] sm:$0xf]
        %v244 = vld [vmem:[%s177 + $0x9c] sm:$0xf]
        %v245 = vld [vmem:[%s177 + $0xa0] sm:$0xf]
        %v246 = vld [vmem:[%s177 + $0xa4] sm:$0xf]
        %v247 = vld [vmem:[%s177 + $0xa8] sm:$0xf]
        %v248 = vld [vmem:[%s177 + $0xac] sm:$0xf]
        %v249 = vld [vmem:[%s177 + $0xb0] sm:$0xf]
        %v250 = vld [vmem:[%s177 + $0xb4] sm:$0xf]
        %v251 = vld [vmem:[%s177 + $0xb8] sm:$0xf]
        %v252 = vld [vmem:[%s177 + $0xbc] sm:$0xf]
        %v253 = vld [vmem:[%s177 + $0xc0] sm:$0xf]
        %v254 = vld [vmem:[%s177 + $0xc4] sm:$0xf]
        %v255 = vld [vmem:[%s177 + $0xc8] sm:$0xf]
        %v256 = vld [vmem:[%s177 + $0xcc] sm:$0xf]
        %v257 = vld [vmem:[%s177 + $0xd0] sm:$0xf]
        %v258 = vld [vmem:[%s177 + $0xd4] sm:$0xf]
        %v259 = vld [vmem:[%s177 + $0xd8] sm:$0xf]
        %v260 = vld [vmem:[%s177 + $0xdc] sm:$0xf]
        %v261 = vld [vmem:[%s177 + $0xe0] sm:$0xf]
        %v262 = vld [vmem:[%s177 + $0xe4] sm:$0xf]
        %v263 = vld [vmem:[%s177 + $0xe8] sm:$0xf]
        %v264 = vld [vmem:[%s177 + $0xec] sm:$0xf]
        %v265 = vld [vmem:[%s177 + $0xf0] sm:$0xf]
        %v266 = vld [vmem:[%s177 + $0xf4] sm:$0xf]
        %v267 = vld [vmem:[%s177 + $0xf8] sm:$0xf]
        %v268 = vld [vmem:[%s177 + $0xfc] sm:$0xf]
        %v269 = vlaneseq
        %v270 = vand.u32 %v269, 127
        %vm271 = vcmp.ge.s32.totalorder %v270, 2
        %vm272 = vcmp.ge.s32.totalorder %v270, 1
        %vm273 = vcmp.lt.s32.totalorder %v270, 127
        %vm274 = vcmp.lt.s32.totalorder %v270, 126
        %v275 = vld [vmem:[#allocation5] sm:$0xff]
        %v276 = vld [vmem:[#allocation5 + $0x8] sm:$0xff]
        %v277 = vld [vmem:[#allocation5 + $0x10] sm:$0xff]
        %v278 = vld [vmem:[#allocation5 + $0x18] sm:$0xff]
        %v279 = vld [vmem:[#allocation5 + $0x20] sm:$0xff]
        %v280 = vld [vmem:[#allocation5 + $0x28] sm:$0xff]
        %v281 = vld [vmem:[#allocation5 + $0x30] sm:$0xff]
        %v282 = vld [vmem:[#allocation5 + $0x38] sm:$0xff]
        %v283 = vld [vmem:[#allocation5 + $0x40] sm:$0xff]
        %v284 = vld [vmem:[#allocation5 + $0x48] sm:$0xff]
        %v285 = vld [vmem:[#allocation5 + $0x50] sm:$0xff]
        %v286 = vld [vmem:[#allocation5 + $0x58] sm:$0xff]
        %v287 = vld [vmem:[#allocation5 + $0x60] sm:$0xff]
        %v288 = vld [vmem:[#allocation5 + $0x68] sm:$0xff]
        %v289 = vld [vmem:[#allocation5 + $0x70] sm:$0xff]
        %v290 = vld [vmem:[#allocation5 + $0x78] sm:$0xff]
        %v291 = vld [vmem:[#allocation5 + $0x80] sm:$0xff]
        %v292 = vld [vmem:[#allocation5 + $0x88] sm:$0xff]
        %v293 = vld [vmem:[#allocation5 + $0x90] sm:$0xff]
        %v294 = vld [vmem:[#allocation5 + $0x98] sm:$0xff]
        %v295 = vld [vmem:[#allocation5 + $0xa0] sm:$0xff]
        %v296 = vld [vmem:[#allocation5 + $0xa8] sm:$0xff]
        %v297 = vld [vmem:[#allocation5 + $0xb0] sm:$0xff]
        %v298 = vld [vmem:[#allocation5 + $0xb8] sm:$0xff]
        %v299 = vld [vmem:[#allocation5 + $0xc0] sm:$0xff]
        %v300 = vld [vmem:[#allocation5 + $0xc8] sm:$0xff]
        %v301 = vld [vmem:[#allocation5 + $0xd0] sm:$0xff]
        %v302 = vld [vmem:[#allocation5 + $0xd8] sm:$0xff]
        %v303 = vld [vmem:[#allocation5 + $0xe0] sm:$0xff]
        %v304 = vld [vmem:[#allocation5 + $0xe8] sm:$0xff]
        %v305 = vld [vmem:[#allocation5 + $0xf0] sm:$0xff]
        %v306 = vld [vmem:[#allocation5 + $0xf8] sm:$0xff]
        %v307 = vld [vmem:[#allocation5 + $0x100] sm:$0xff]
        %v308 = vld [vmem:[#allocation5 + $0x108] sm:$0xff]
        %v309 = vld [vmem:[#allocation5 + $0x110] sm:$0xff]
        %v310 = vld [vmem:[#allocation5 + $0x118] sm:$0xff]
        %v311 = vld [vmem:[#allocation5 + $0x120] sm:$0xff]
        %v312 = vld [vmem:[#allocation5 + $0x128] sm:$0xff]
        %v313 = vld [vmem:[#allocation5 + $0x130] sm:$0xff]
        %v314 = vld [vmem:[#allocation5 + $0x138] sm:$0xff]
        %v315 = vld [vmem:[#allocation5 + $0x140] sm:$0xff]
        %v316 = vld [vmem:[#allocation5 + $0x148] sm:$0xff]
        %v317 = vld [vmem:[#allocation5 + $0x150] sm:$0xff]
        %v318 = vld [vmem:[#allocation5 + $0x158] sm:$0xff]
        %v319 = vld [vmem:[#allocation5 + $0x160] sm:$0xff]
        %v320 = vld [vmem:[#allocation5 + $0x168] sm:$0xff]
        %v321 = vld [vmem:[#allocation5 + $0x170] sm:$0xff]
        %v322 = vld [vmem:[#allocation5 + $0x178] sm:$0xff]
        %v323 = vld [vmem:[#allocation5 + $0x180] sm:$0xff]
        %v324 = vld [vmem:[#allocation5 + $0x188] sm:$0xff]
        %v325 = vld [vmem:[#allocation5 + $0x190] sm:$0xff]
        %v326 = vld [vmem:[#allocation5 + $0x198] sm:$0xff]
        %v327 = vld [vmem:[#allocation5 + $0x1a0] sm:$0xff]
        %v328 = vld [vmem:[#allocation5 + $0x1a8] sm:$0xff]
        %v329 = vld [vmem:[#allocation5 + $0x1b0] sm:$0xff]
        %v330 = vld [vmem:[#allocation5 + $0x1b8] sm:$0xff]
        %v331 = vld [vmem:[#allocation5 + $0x1c0] sm:$0xff]
        %v332 = vld [vmem:[#allocation5 + $0x1c8] sm:$0xff]
        %v333 = vld [vmem:[#allocation5 + $0x1d0] sm:$0xff]
        %v334 = vld [vmem:[#allocation5 + $0x1d8] sm:$0xff]
        %v335 = vld [vmem:[#allocation5 + $0x1e0] sm:$0xff]
        %v336 = vld [vmem:[#allocation5 + $0x1e8] sm:$0xff]
        %v337 = vld [vmem:[#allocation5 + $0x1f0] sm:$0xff]
        %v338 = vld [vmem:[#allocation5 + $0x1f8] sm:$0xff]
        %v403 = vunpack.c.l.b16 %v275
        %v404 = vunpack.c.h.b16 %v275
        %v405 = vunpack.c.l.b16 %v276
        %v406 = vunpack.c.h.b16 %v276
        %v407 = vunpack.c.l.b16 %v277
        %v408 = vunpack.c.h.b16 %v277
        %v409 = vunpack.c.l.b16 %v278
        %v410 = vunpack.c.h.b16 %v278
        %v411 = vunpack.c.l.b16 %v279
        %v412 = vunpack.c.h.b16 %v279
        %v413 = vunpack.c.l.b16 %v280
        %v414 = vunpack.c.h.b16 %v280
        %v415 = vunpack.c.l.b16 %v281
        %v416 = vunpack.c.h.b16 %v281
        %v417 = vunpack.c.l.b16 %v282
        %v418 = vunpack.c.h.b16 %v282
        %v419 = vunpack.c.l.b16 %v283
        %v420 = vunpack.c.h.b16 %v283
        %v421 = vunpack.c.l.b16 %v284
        %v422 = vunpack.c.h.b16 %v284
        %v423 = vunpack.c.l.b16 %v285
        %v424 = vunpack.c.h.b16 %v285
        %v425 = vunpack.c.l.b16 %v286
        %v426 = vunpack.c.h.b16 %v286
        %v427 = vunpack.c.l.b16 %v287
        %v428 = vunpack.c.h.b16 %v287
        %v429 = vunpack.c.l.b16 %v288
        %v430 = vunpack.c.h.b16 %v288
        %v431 = vunpack.c.l.b16 %v289
        %v432 = vunpack.c.h.b16 %v289
        %v433 = vunpack.c.l.b16 %v290
        %v434 = vunpack.c.h.b16 %v290
        %v435 = vunpack.c.l.b16 %v291
        %v436 = vunpack.c.h.b16 %v291
        %v437 = vunpack.c.l.b16 %v292
        %v438 = vunpack.c.h.b16 %v292
        %v439 = vunpack.c.l.b16 %v293
        %v440 = vunpack.c.h.b16 %v293
        %v441 = vunpack.c.l.b16 %v294
        %v442 = vunpack.c.h.b16 %v294
        %v443 = vunpack.c.l.b16 %v295
        %v444 = vunpack.c.h.b16 %v295
        %v445 = vunpack.c.l.b16 %v296
        %v446 = vunpack.c.h.b16 %v296
        %v447 = vunpack.c.l.b16 %v297
        %v448 = vunpack.c.h.b16 %v297
        %v449 = vunpack.c.l.b16 %v298
        %v450 = vunpack.c.h.b16 %v298
        %v451 = vunpack.c.l.b16 %v299
        %v452 = vunpack.c.h.b16 %v299
        %v453 = vunpack.c.l.b16 %v300
        %v454 = vunpack.c.h.b16 %v300
        %v455 = vunpack.c.l.b16 %v301
        %v456 = vunpack.c.h.b16 %v301
        %v457 = vunpack.c.l.b16 %v302
        %v458 = vunpack.c.h.b16 %v302
        %v459 = vunpack.c.l.b16 %v303
        %v460 = vunpack.c.h.b16 %v303
        %v461 = vunpack.c.l.b16 %v304
        %v462 = vunpack.c.h.b16 %v304
        %v463 = vunpack.c.l.b16 %v305
        %v464 = vunpack.c.h.b16 %v305
        %v465 = vunpack.c.l.b16 %v306
        %v466 = vunpack.c.h.b16 %v306
        %v467 = vunpack.c.l.b16 %v307
        %v468 = vunpack.c.h.b16 %v307
        %v469 = vunpack.c.l.b16 %v308
        %v470 = vunpack.c.h.b16 %v308
        %v471 = vunpack.c.l.b16 %v309
        %v472 = vunpack.c.h.b16 %v309
        %v473 = vunpack.c.l.b16 %v310
        %v474 = vunpack.c.h.b16 %v310
        %v475 = vunpack.c.l.b16 %v311
        %v476 = vunpack.c.h.b16 %v311
        %v477 = vunpack.c.l.b16 %v312
        %v478 = vunpack.c.h.b16 %v312
        %v479 = vunpack.c.l.b16 %v313
        %v480 = vunpack.c.h.b16 %v313
        %v481 = vunpack.c.l.b16 %v314
        %v482 = vunpack.c.h.b16 %v314
        %v483 = vunpack.c.l.b16 %v315
        %v484 = vunpack.c.h.b16 %v315
        %v485 = vunpack.c.l.b16 %v316
        %v486 = vunpack.c.h.b16 %v316
        %v487 = vunpack.c.l.b16 %v317
        %v488 = vunpack.c.h.b16 %v317
        %v489 = vunpack.c.l.b16 %v318
        %v490 = vunpack.c.h.b16 %v318
        %v491 = vunpack.c.l.b16 %v319
        %v492 = vunpack.c.h.b16 %v319
        %v493 = vunpack.c.l.b16 %v320
        %v494 = vunpack.c.h.b16 %v320
        %v495 = vunpack.c.l.b16 %v321
        %v496 = vunpack.c.h.b16 %v321
        %v497 = vunpack.c.l.b16 %v322
        %v498 = vunpack.c.h.b16 %v322
        %v499 = vunpack.c.l.b16 %v323
        %v500 = vunpack.c.h.b16 %v323
        %v501 = vunpack.c.l.b16 %v324
        %v502 = vunpack.c.h.b16 %v324
        %v503 = vunpack.c.l.b16 %v325
        %v504 = vunpack.c.h.b16 %v325
        %v505 = vunpack.c.l.b16 %v326
        %v506 = vunpack.c.h.b16 %v326
        %v507 = vunpack.c.l.b16 %v327
        %v508 = vunpack.c.h.b16 %v327
        %v509 = vunpack.c.l.b16 %v328
        %v510 = vunpack.c.h.b16 %v328
        %v511 = vunpack.c.l.b16 %v329
        %v512 = vunpack.c.h.b16 %v329
        %v513 = vunpack.c.l.b16 %v330
        %v514 = vunpack.c.h.b16 %v330
        %v515 = vunpack.c.l.b16 %v331
        %v516 = vunpack.c.h.b16 %v331
        %v517 = vunpack.c.l.b16 %v332
        %v518 = vunpack.c.h.b16 %v332
        %v519 = vunpack.c.l.b16 %v333
        %v520 = vunpack.c.h.b16 %v333
        %v521 = vunpack.c.l.b16 %v334
        %v522 = vunpack.c.h.b16 %v334
        %v523 = vunpack.c.l.b16 %v335
        %v524 = vunpack.c.h.b16 %v335
        %v525 = vunpack.c.l.b16 %v336
        %v526 = vunpack.c.h.b16 %v336
        %v527 = vunpack.c.l.b16 %v337
        %v528 = vunpack.c.h.b16 %v337
        %v529 = vunpack.c.l.b16 %v338
        %v530 = vunpack.c.h.b16 %v338
        %v531 = vpack.c.b16 %v407, %v403
        %v532 = vpack.c.b16 %v408, %v404
        %v533 = vpack.c.b16 %v409, %v405
        %v534 = vpack.c.b16 %v410, %v406
        %v535 = vpack.c.b16 %v415, %v411
        %v536 = vpack.c.b16 %v416, %v412
        %v537 = vpack.c.b16 %v417, %v413
        %v538 = vpack.c.b16 %v418, %v414
        %v539 = vpack.c.b16 %v423, %v419
        %v540 = vpack.c.b16 %v424, %v420
        %v541 = vpack.c.b16 %v425, %v421
        %v542 = vpack.c.b16 %v426, %v422
        %v543 = vpack.c.b16 %v431, %v427
        %v544 = vpack.c.b16 %v432, %v428
        %v545 = vpack.c.b16 %v433, %v429
        %v546 = vpack.c.b16 %v434, %v430
        %v547 = vpack.c.b16 %v439, %v435
        %v548 = vpack.c.b16 %v440, %v436
        %v549 = vpack.c.b16 %v441, %v437
        %v550 = vpack.c.b16 %v442, %v438
        %v551 = vpack.c.b16 %v447, %v443
        %v552 = vpack.c.b16 %v448, %v444
        %v553 = vpack.c.b16 %v449, %v445
        %v554 = vpack.c.b16 %v450, %v446
        %v555 = vpack.c.b16 %v455, %v451
        %v556 = vpack.c.b16 %v456, %v452
        %v557 = vpack.c.b16 %v457, %v453
        %v558 = vpack.c.b16 %v458, %v454
        %v559 = vpack.c.b16 %v463, %v459
        %v560 = vpack.c.b16 %v464, %v460
        %v561 = vpack.c.b16 %v465, %v461
        %v562 = vpack.c.b16 %v466, %v462
        %v563 = vpack.c.b16 %v471, %v467
        %v564 = vpack.c.b16 %v472, %v468
        %v565 = vpack.c.b16 %v473, %v469
        %v566 = vpack.c.b16 %v474, %v470
        %v567 = vpack.c.b16 %v479, %v475
        %v568 = vpack.c.b16 %v480, %v476
        %v569 = vpack.c.b16 %v481, %v477
        %v570 = vpack.c.b16 %v482, %v478
        %v571 = vpack.c.b16 %v487, %v483
        %v572 = vpack.c.b16 %v488, %v484
        %v573 = vpack.c.b16 %v489, %v485
        %v574 = vpack.c.b16 %v490, %v486
        %v575 = vpack.c.b16 %v495, %v491
        %v576 = vpack.c.b16 %v496, %v492
        %v577 = vpack.c.b16 %v497, %v493
        %v578 = vpack.c.b16 %v498, %v494
        %v579 = vpack.c.b16 %v503, %v499
        %v580 = vpack.c.b16 %v504, %v500
        %v581 = vpack.c.b16 %v505, %v501
        %v582 = vpack.c.b16 %v506, %v502
        %v583 = vpack.c.b16 %v511, %v507
        %v584 = vpack.c.b16 %v512, %v508
        %v585 = vpack.c.b16 %v513, %v509
        %v586 = vpack.c.b16 %v514, %v510
        %v587 = vpack.c.b16 %v519, %v515
        %v588 = vpack.c.b16 %v520, %v516
        %v589 = vpack.c.b16 %v521, %v517
        %v590 = vpack.c.b16 %v522, %v518
        %v591 = vpack.c.b16 %v527, %v523
        %v592 = vpack.c.b16 %v528, %v524
        %v593 = vpack.c.b16 %v529, %v525
        %v594 = vpack.c.b16 %v530, %v526
        %v723 = vunpack.c.l.b16 %v205
        %v724 = vunpack.c.l.b16 %v206
        %v725 = vunpack.c.l.b16 %v207
        %v726 = vunpack.c.l.b16 %v208
        %v727 = vunpack.c.l.b16 %v209
        %v728 = vunpack.c.l.b16 %v210
        %v729 = vunpack.c.l.b16 %v211
        %v730 = vunpack.c.l.b16 %v212
        %v731 = vunpack.c.l.b16 %v213
        %v732 = vunpack.c.l.b16 %v214
        %v733 = vunpack.c.l.b16 %v215
        %v734 = vunpack.c.l.b16 %v216
        %v735 = vunpack.c.l.b16 %v217
        %v736 = vunpack.c.l.b16 %v218
        %v737 = vunpack.c.l.b16 %v219
        %v738 = vunpack.c.l.b16 %v220
        %v739 = vunpack.c.l.b16 %v221
        %v740 = vunpack.c.l.b16 %v222
        %v741 = vunpack.c.l.b16 %v223
        %v742 = vunpack.c.l.b16 %v224
        %v743 = vunpack.c.l.b16 %v225
        %v744 = vunpack.c.l.b16 %v226
        %v745 = vunpack.c.l.b16 %v227
        %v746 = vunpack.c.l.b16 %v228
        %v747 = vunpack.c.l.b16 %v229
        %v748 = vunpack.c.l.b16 %v230
        %v749 = vunpack.c.l.b16 %v231
        %v750 = vunpack.c.l.b16 %v232
        %v751 = vunpack.c.l.b16 %v233
        %v752 = vunpack.c.l.b16 %v234
        %v753 = vunpack.c.l.b16 %v235
        %v754 = vunpack.c.l.b16 %v236
        %v755 = vunpack.c.l.b16 %v237
        %v756 = vunpack.c.l.b16 %v238
        %v757 = vunpack.c.l.b16 %v239
        %v758 = vunpack.c.l.b16 %v240
        %v759 = vunpack.c.l.b16 %v241
        %v760 = vunpack.c.l.b16 %v242
        %v761 = vunpack.c.l.b16 %v243
        %v762 = vunpack.c.l.b16 %v244
        %v763 = vunpack.c.l.b16 %v245
        %v764 = vunpack.c.l.b16 %v246
        %v765 = vunpack.c.l.b16 %v247
        %v766 = vunpack.c.l.b16 %v248
        %v767 = vunpack.c.l.b16 %v249
        %v768 = vunpack.c.l.b16 %v250
        %v769 = vunpack.c.l.b16 %v251
        %v770 = vunpack.c.l.b16 %v252
        %v771 = vunpack.c.l.b16 %v253
        %v772 = vunpack.c.l.b16 %v254
        %v773 = vunpack.c.l.b16 %v255
        %v774 = vunpack.c.l.b16 %v256
        %v775 = vunpack.c.l.b16 %v257
        %v776 = vunpack.c.l.b16 %v258
        %v777 = vunpack.c.l.b16 %v259
        %v778 = vunpack.c.l.b16 %v260
        %v779 = vunpack.c.l.b16 %v261
        %v780 = vunpack.c.l.b16 %v262
        %v781 = vunpack.c.l.b16 %v263
        %v782 = vunpack.c.l.b16 %v264
        %v783 = vunpack.c.l.b16 %v265
        %v784 = vunpack.c.l.b16 %v266
        %v785 = vunpack.c.l.b16 %v267
        %v786 = vunpack.c.l.b16 %v268
        %v787 = vpack.c.b16 %v724, %v723
        %v788 = vpack.c.b16 %v726, %v725
        %v789 = vpack.c.b16 %v728, %v727
        %v790 = vpack.c.b16 %v730, %v729
        %v791 = vpack.c.b16 %v732, %v731
        %v792 = vpack.c.b16 %v734, %v733
        %v793 = vpack.c.b16 %v736, %v735
        %v794 = vpack.c.b16 %v738, %v737
        %v795 = vpack.c.b16 %v740, %v739
        %v796 = vpack.c.b16 %v742, %v741
        %v797 = vpack.c.b16 %v744, %v743
        %v798 = vpack.c.b16 %v746, %v745
        %v799 = vpack.c.b16 %v748, %v747
        %v800 = vpack.c.b16 %v750, %v749
        %v801 = vpack.c.b16 %v752, %v751
        %v802 = vpack.c.b16 %v754, %v753
        %v803 = vpack.c.b16 %v756, %v755
        %v804 = vpack.c.b16 %v758, %v757
        %v805 = vpack.c.b16 %v760, %v759
        %v806 = vpack.c.b16 %v762, %v761
        %v807 = vpack.c.b16 %v764, %v763
        %v808 = vpack.c.b16 %v766, %v765
        %v809 = vpack.c.b16 %v768, %v767
        %v810 = vpack.c.b16 %v770, %v769
        %v811 = vpack.c.b16 %v772, %v771
        %v812 = vpack.c.b16 %v774, %v773
        %v813 = vpack.c.b16 %v776, %v775
        %v814 = vpack.c.b16 %v778, %v777
        %v815 = vpack.c.b16 %v780, %v779
        %v816 = vpack.c.b16 %v782, %v781
        %v817 = vpack.c.b16 %v784, %v783
        %v818 = vpack.c.b16 %v786, %v785
        %851 = vmatprep.subr.bf16.mxu0 0
        %852 = vmatpush1.bf16.msra.mxu0 %v787
        %853 = vmatprep.subr.bf16.mxu0 0
        %854 = vmatpush1.bf16.msra.mxu0 %v788
        %855 = vmatprep.subr.bf16.mxu0 0
        %856 = vmatpush1.bf16.msra.mxu0 %v789
        %857 = vmatprep.subr.bf16.mxu0 0
        %858 = vmatpush1.bf16.msra.mxu0 %v790
        %859 = vmatprep.subr.bf16.mxu0 0
        %860 = vmatpush1.bf16.msra.mxu0 %v791
        %861 = vmatprep.subr.bf16.mxu0 0
        %862 = vmatpush1.bf16.msra.mxu0 %v792
        %863 = vmatprep.subr.bf16.mxu0 0
        %864 = vmatpush1.bf16.msra.mxu0 %v793
        %865 = vmatprep.subr.bf16.mxu0 0
        %866 = vmatpush1.bf16.msra.mxu0 %v794
        %867 = vmatprep.subr.bf16.mxu0 0
        %868 = vmatpush1.bf16.msra.mxu0 %v795
        %869 = vmatprep.subr.bf16.mxu0 0
        %870 = vmatpush1.bf16.msra.mxu0 %v796
        %871 = vmatprep.subr.bf16.mxu0 0
        %872 = vmatpush1.bf16.msra.mxu0 %v797
        %873 = vmatprep.subr.bf16.mxu0 0
        %874 = vmatpush1.bf16.msra.mxu0 %v798
        %875 = vmatprep.subr.bf16.mxu0 0
        %876 = vmatpush1.bf16.msra.mxu0 %v799
        %877 = vmatprep.subr.bf16.mxu0 0
        %878 = vmatpush1.bf16.msra.mxu0 %v800
        %879 = vmatprep.subr.bf16.mxu0 0
        %880 = vmatpush1.bf16.msra.mxu0 %v801
        %881 = vmatprep.subr.bf16.mxu0 0
        %882 = vmatpush1.bf16.msra.mxu0 %v802
        %883 = vmatprep.mubr.bf16.mxu0 %v532
        %884 = vmatmul.mubr.bf16.gmra.mrb[0].mxu0 %v531
        %v885 = vpop.f32.mrb[0].mxu0
        %v886 = vadd.f32 0.0, %v885
        %v887 = vpop.f32.mrb[0].mxu0
        %v888 = vpop.f32.mrb[0].mxu0
        %v889 = vadd.f32 0.0, %v888
        %v890 = vpop.f32.mrb[0].mxu0
        %891 = vmatprep.mubr.bf16.mxu0 %v536
        %892 = vmatmul.mubr.bf16.gmra.mrb[0].mxu0 %v535
        %v893 = vpop.f32.mrb[0].mxu0
        %v894 = vadd.f32 0.0, %v893
        %v895 = vpop.f32.mrb[0].mxu0
        %v896 = vpop.f32.mrb[0].mxu0
        %v897 = vadd.f32 0.0, %v896
        %v898 = vpop.f32.mrb[0].mxu0
        %899 = vmatprep.mubr.bf16.mxu0 %v540
        %900 = vmatmul.mubr.bf16.gmra.mrb[0].mxu0 %v539
        %v901 = vpop.f32.mrb[0].mxu0
        %v902 = vadd.f32 0.0, %v901
        %v903 = vpop.f32.mrb[0].mxu0
        %v904 = vpop.f32.mrb[0].mxu0
        %v905 = vadd.f32 0.0, %v904
        %v906 = vpop.f32.mrb[0].mxu0
        %907 = vmatprep.mubr.bf16.mxu0 %v544
        %908 = vmatmul.mubr.bf16.gmra.mrb[0].mxu0 %v543
        %v909 = vpop.f32.mrb[0].mxu0
        %v910 = vadd.f32 0.0, %v909
        %v911 = vpop.f32.mrb[0].mxu0
        %v912 = vpop.f32.mrb[0].mxu0
        %v913 = vadd.f32 0.0, %v912
        %v914 = vpop.f32.mrb[0].mxu0
        %915 = vmatprep.mubr.bf16.mxu0 %v548
        %916 = vmatmul.mubr.bf16.gmra.mrb[0].mxu0 %v547
        %v917 = vpop.f32.mrb[0].mxu0
        %v918 = vadd.f32 0.0, %v917
        %v919 = vpop.f32.mrb[0].mxu0
        %v920 = vpop.f32.mrb[0].mxu0
        %v921 = vadd.f32 0.0, %v920
        %v922 = vpop.f32.mrb[0].mxu0
        %923 = vmatprep.mubr.bf16.mxu0 %v552
        %924 = vmatmul.mubr.bf16.gmra.mrb[0].mxu0 %v551
        %v925 = vpop.f32.mrb[0].mxu0
        %v926 = vadd.f32 0.0, %v925
        %v927 = vpop.f32.mrb[0].mxu0
        %v928 = vpop.f32.mrb[0].mxu0
        %v929 = vadd.f32 0.0, %v928
        %v930 = vpop.f32.mrb[0].mxu0
        %931 = vmatprep.mubr.bf16.mxu0 %v556
        %932 = vmatmul.mubr.bf16.gmra.mrb[0].mxu0 %v555
        %v933 = vpop.f32.mrb[0].mxu0
        %v934 = vadd.f32 0.0, %v933
        %v935 = vpop.f32.mrb[0].mxu0
        %v936 = vpop.f32.mrb[0].mxu0
        %v937 = vadd.f32 0.0, %v936
        %v938 = vpop.f32.mrb[0].mxu0
        %939 = vmatprep.mubr.bf16.mxu0 %v560
        %940 = vmatmul.mubr.bf16.gmra.mrb[0].mxu0 %v559
        %v941 = vpop.f32.mrb[0].mxu0
        %v942 = vadd.f32 0.0, %v941
        %v943 = vpop.f32.mrb[0].mxu0
        %v944 = vpop.f32.mrb[0].mxu0
        %v945 = vadd.f32 0.0, %v944
        %v946 = vpop.f32.mrb[0].mxu0
        %947 = vmatprep.mubr.bf16.mxu0 %v564
        %948 = vmatmul.mubr.bf16.gmra.mrb[0].mxu0 %v563
        %v949 = vpop.f32.mrb[0].mxu0
        %v950 = vadd.f32 0.0, %v949
        %v951 = vpop.f32.mrb[0].mxu0
        %v952 = vpop.f32.mrb[0].mxu0
        %v953 = vadd.f32 0.0, %v952
        %v954 = vpop.f32.mrb[0].mxu0
        %955 = vmatprep.mubr.bf16.mxu0 %v568
        %956 = vmatmul.mubr.bf16.gmra.mrb[0].mxu0 %v567
        %v957 = vpop.f32.mrb[0].mxu0
        %v958 = vadd.f32 0.0, %v957
        %v959 = vpop.f32.mrb[0].mxu0
        %v960 = vpop.f32.mrb[0].mxu0
        %v961 = vadd.f32 0.0, %v960
        %v962 = vpop.f32.mrb[0].mxu0
        %963 = vmatprep.mubr.bf16.mxu0 %v572
        %964 = vmatmul.mubr.bf16.gmra.mrb[0].mxu0 %v571
        %v965 = vpop.f32.mrb[0].mxu0
        %v966 = vadd.f32 0.0, %v965
        %v967 = vpop.f32.mrb[0].mxu0
        %v968 = vpop.f32.mrb[0].mxu0
        %v969 = vadd.f32 0.0, %v968
        %v970 = vpop.f32.mrb[0].mxu0
        %971 = vmatprep.mubr.bf16.mxu0 %v576
        %972 = vmatmul.mubr.bf16.gmra.mrb[0].mxu0 %v575
        %v973 = vpop.f32.mrb[0].mxu0
        %v974 = vadd.f32 0.0, %v973
        %v975 = vpop.f32.mrb[0].mxu0
        %v976 = vpop.f32.mrb[0].mxu0
        %v977 = vadd.f32 0.0, %v976
        %v978 = vpop.f32.mrb[0].mxu0
        %979 = vmatprep.mubr.bf16.mxu0 %v580
        %980 = vmatmul.mubr.bf16.gmra.mrb[0].mxu0 %v579
        %v981 = vpop.f32.mrb[0].mxu0
        %v982 = vadd.f32 0.0, %v981
        %v983 = vpop.f32.mrb[0].mxu0
        %v984 = vpop.f32.mrb[0].mxu0
        %v985 = vadd.f32 0.0, %v984
        %v986 = vpop.f32.mrb[0].mxu0
        %987 = vmatprep.mubr.bf16.mxu0 %v584
        %988 = vmatmul.mubr.bf16.gmra.mrb[0].mxu0 %v583
        %v989 = vpop.f32.mrb[0].mxu0
        %v990 = vadd.f32 0.0, %v989
        %v991 = vpop.f32.mrb[0].mxu0
        %v992 = vpop.f32.mrb[0].mxu0
        %v993 = vadd.f32 0.0, %v992
        %v994 = vpop.f32.mrb[0].mxu0
        %995 = vmatprep.mubr.bf16.mxu0 %v588
        %996 = vmatmul.mubr.bf16.gmra.mrb[0].mxu0 %v587
        %v997 = vpop.f32.mrb[0].mxu0
        %v998 = vadd.f32 0.0, %v997
        %v999 = vpop.f32.mrb[0].mxu0
        %v1000 = vpop.f32.mrb[0].mxu0
        %v1001 = vadd.f32 0.0, %v1000
        %v1002 = vpop.f32.mrb[0].mxu0
        %1003 = vmatprep.mubr.bf16.mxu0 %v592
        %1004 = vmatmul.mubr.bf16.gmra.mrb[0].mxu0 %v591
        %v1005 = vpop.f32.mrb[0].mxu0
        %v1006 = vadd.f32 0.0, %v1005
        %v1007 = vpop.f32.mrb[0].mxu0
        %v1008 = vpop.f32.mrb[0].mxu0
        %v1009 = vadd.f32 0.0, %v1008
        %v1010 = vpop.f32.mrb[0].mxu0
        %1011 = vdwg.mxu0
        %1012 = vmatprep.subr.bf16.mxu0 0
        %1013 = vmatpush1.bf16.msra.mxu0 %v803
        %1014 = vmatprep.subr.bf16.mxu0 0
        %1015 = vmatpush1.bf16.msra.mxu0 %v804
        %1016 = vmatprep.subr.bf16.mxu0 0
        %1017 = vmatpush1.bf16.msra.mxu0 %v805
        %1018 = vmatprep.subr.bf16.mxu0 0
        %1019 = vmatpush1.bf16.msra.mxu0 %v806
        %1020 = vmatprep.subr.bf16.mxu0 0
        %1021 = vmatpush1.bf16.msra.mxu0 %v807
        %1022 = vmatprep.subr.bf16.mxu0 0
        %1023 = vmatpush1.bf16.msra.mxu0 %v808
        %1024 = vmatprep.subr.bf16.mxu0 0
        %1025 = vmatpush1.bf16.msra.mxu0 %v809
        %1026 = vmatprep.subr.bf16.mxu0 0
        %1027 = vmatpush1.bf16.msra.mxu0 %v810
        %1028 = vmatprep.subr.bf16.mxu0 0
        %1029 = vmatpush1.bf16.msra.mxu0 %v811
        %1030 = vmatprep.subr.bf16.mxu0 0
        %1031 = vmatpush1.bf16.msra.mxu0 %v812
        %1032 = vmatprep.subr.bf16.mxu0 0
        %1033 = vmatpush1.bf16.msra.mxu0 %v813
        %1034 = vmatprep.subr.bf16.mxu0 0
        %1035 = vmatpush1.bf16.msra.mxu0 %v814
        %1036 = vmatprep.subr.bf16.mxu0 0
        %1037 = vmatpush1.bf16.msra.mxu0 %v815
        %1038 = vmatprep.subr.bf16.mxu0 0
        %1039 = vmatpush1.bf16.msra.mxu0 %v816
        %1040 = vmatprep.subr.bf16.mxu0 0
        %1041 = vmatpush1.bf16.msra.mxu0 %v817
        %1042 = vmatprep.subr.bf16.mxu0 0
        %1043 = vmatpush1.bf16.msra.mxu0 %v818
        %1044 = vmatprep.mubr.bf16.mxu0 %v534
        %1045 = vmatmul.mubr.bf16.gmra.mrb[0].mxu0 %v533
        %v1046 = vpop.f32.mrb[0].mxu0
        %v1047 = vadd.f32 %v886, %v1046
        %v1048 = vpop.f32.mrb[0].mxu0
        %v1049 = vpop.f32.mrb[0].mxu0
        %v1050 = vadd.f32 %v889, %v1049
        %v1051 = vpop.f32.mrb[0].mxu0
        %1052 = vmatprep.mubr.bf16.mxu0 %v538
        %1053 = vmatmul.mubr.bf16.gmra.mrb[0].mxu0 %v537
        %v1054 = vpop.f32.mrb[0].mxu0
        %v1055 = vadd.f32 %v894, %v1054
        %v1056 = vpop.f32.mrb[0].mxu0
        %v1057 = vpop.f32.mrb[0].mxu0
        %v1058 = vadd.f32 %v897, %v1057
        %v1059 = vpop.f32.mrb[0].mxu0
        %1060 = vmatprep.mubr.bf16.mxu0 %v542
        %1061 = vmatmul.mubr.bf16.gmra.mrb[0].mxu0 %v541
        %v1062 = vpop.f32.mrb[0].mxu0
        %v1063 = vadd.f32 %v902, %v1062
        %v1064 = vpop.f32.mrb[0].mxu0
        %v1065 = vpop.f32.mrb[0].mxu0
        %v1066 = vadd.f32 %v905, %v1065
        %v1067 = vpop.f32.mrb[0].mxu0
        %1068 = vmatprep.mubr.bf16.mxu0 %v546
        %1069 = vmatmul.mubr.bf16.gmra.mrb[0].mxu0 %v545
        %v1070 = vpop.f32.mrb[0].mxu0
        %v1071 = vadd.f32 %v910, %v1070
        %v1072 = vpop.f32.mrb[0].mxu0
        %v1073 = vpop.f32.mrb[0].mxu0
        %v1074 = vadd.f32 %v913, %v1073
        %v1075 = vpop.f32.mrb[0].mxu0
        %1076 = vmatprep.mubr.bf16.mxu0 %v550
        %1077 = vmatmul.mubr.bf16.gmra.mrb[0].mxu0 %v549
        %v1078 = vpop.f32.mrb[0].mxu0
        %v1079 = vadd.f32 %v918, %v1078
        %v1080 = vpop.f32.mrb[0].mxu0
        %v1081 = vpop.f32.mrb[0].mxu0
        %v1082 = vadd.f32 %v921, %v1081
        %v1083 = vpop.f32.mrb[0].mxu0
        %1084 = vmatprep.mubr.bf16.mxu0 %v554
        %1085 = vmatmul.mubr.bf16.gmra.mrb[0].mxu0 %v553
        %v1086 = vpop.f32.mrb[0].mxu0
        %v1087 = vadd.f32 %v926, %v1086
        %v1088 = vpop.f32.mrb[0].mxu0
        %v1089 = vpop.f32.mrb[0].mxu0
        %v1090 = vadd.f32 %v929, %v1089
        %v1091 = vpop.f32.mrb[0].mxu0
        %1092 = vmatprep.mubr.bf16.mxu0 %v558
        %1093 = vmatmul.mubr.bf16.gmra.mrb[0].mxu0 %v557
        %v1094 = vpop.f32.mrb[0].mxu0
        %v1095 = vadd.f32 %v934, %v1094
        %v1096 = vpop.f32.mrb[0].mxu0
        %v1097 = vpop.f32.mrb[0].mxu0
        %v1098 = vadd.f32 %v937, %v1097
        %v1099 = vpop.f32.mrb[0].mxu0
        %1100 = vmatprep.mubr.bf16.mxu0 %v562
        %1101 = vmatmul.mubr.bf16.gmra.mrb[0].mxu0 %v561
        %v1102 = vpop.f32.mrb[0].mxu0
        %v1103 = vadd.f32 %v942, %v1102
        %v1104 = vpop.f32.mrb[0].mxu0
        %v1105 = vpop.f32.mrb[0].mxu0
        %v1106 = vadd.f32 %v945, %v1105
        %v1107 = vpop.f32.mrb[0].mxu0
        %1108 = vmatprep.mubr.bf16.mxu0 %v566
        %1109 = vmatmul.mubr.bf16.gmra.mrb[0].mxu0 %v565
        %v1110 = vpop.f32.mrb[0].mxu0
        %v1111 = vadd.f32 %v950, %v1110
        %v1112 = vpop.f32.mrb[0].mxu0
        %v1113 = vpop.f32.mrb[0].mxu0
        %v1114 = vadd.f32 %v953, %v1113
        %v1115 = vpop.f32.mrb[0].mxu0
        %1116 = vmatprep.mubr.bf16.mxu0 %v570
        %1117 = vmatmul.mubr.bf16.gmra.mrb[0].mxu0 %v569
        %v1118 = vpop.f32.mrb[0].mxu0
        %v1119 = vadd.f32 %v958, %v1118
        %v1120 = vpop.f32.mrb[0].mxu0
        %v1121 = vpop.f32.mrb[0].mxu0
        %v1122 = vadd.f32 %v961, %v1121
        %v1123 = vpop.f32.mrb[0].mxu0
        %1124 = vmatprep.mubr.bf16.mxu0 %v574
        %1125 = vmatmul.mubr.bf16.gmra.mrb[0].mxu0 %v573
        %v1126 = vpop.f32.mrb[0].mxu0
        %v1127 = vadd.f32 %v966, %v1126
        %v1128 = vpop.f32.mrb[0].mxu0
        %v1129 = vpop.f32.mrb[0].mxu0
        %v1130 = vadd.f32 %v969, %v1129
        %v1131 = vpop.f32.mrb[0].mxu0
        %1132 = vmatprep.mubr.bf16.mxu0 %v578
        %1133 = vmatmul.mubr.bf16.gmra.mrb[0].mxu0 %v577
        %v1134 = vpop.f32.mrb[0].mxu0
        %v1135 = vadd.f32 %v974, %v1134
        %v1136 = vpop.f32.mrb[0].mxu0
        %v1137 = vpop.f32.mrb[0].mxu0
        %v1138 = vadd.f32 %v977, %v1137
        %v1139 = vpop.f32.mrb[0].mxu0
        %1140 = vmatprep.mubr.bf16.mxu0 %v582
        %1141 = vmatmul.mubr.bf16.gmra.mrb[0].mxu0 %v581
        %v1142 = vpop.f32.mrb[0].mxu0
        %v1143 = vadd.f32 %v982, %v1142
        %v1144 = vpop.f32.mrb[0].mxu0
        %v1145 = vpop.f32.mrb[0].mxu0
        %v1146 = vadd.f32 %v985, %v1145
        %v1147 = vpop.f32.mrb[0].mxu0
        %1148 = vmatprep.mubr.bf16.mxu0 %v586
        %1149 = vmatmul.mubr.bf16.gmra.mrb[0].mxu0 %v585
        %v1150 = vpop.f32.mrb[0].mxu0
        %v1151 = vadd.f32 %v990, %v1150
        %v1152 = vpop.f32.mrb[0].mxu0
        %v1153 = vpop.f32.mrb[0].mxu0
        %v1154 = vadd.f32 %v993, %v1153
        %v1155 = vpop.f32.mrb[0].mxu0
        %1156 = vmatprep.mubr.bf16.mxu0 %v590
        %1157 = vmatmul.mubr.bf16.gmra.mrb[0].mxu0 %v589
        %v1158 = vpop.f32.mrb[0].mxu0
        %v1159 = vadd.f32 %v998, %v1158
        %v1160 = vpop.f32.mrb[0].mxu0
        %v1161 = vpop.f32.mrb[0].mxu0
        %v1162 = vadd.f32 %v1001, %v1161
        %v1163 = vpop.f32.mrb[0].mxu0
        %1164 = vmatprep.mubr.bf16.mxu0 %v594
        %1165 = vmatmul.mubr.bf16.gmra.mrb[0].mxu0 %v593
        %v1166 = vpop.f32.mrb[0].mxu0
        %v1167 = vadd.f32 %v1006, %v1166
        %v1168 = vpop.f32.mrb[0].mxu0
        %v1169 = vpop.f32.mrb[0].mxu0
        %v1170 = vadd.f32 %v1009, %v1169
        %v1171 = vpop.f32.mrb[0].mxu0
        %1172 = vdwg.mxu0
        %1173 = vrot.lane.b32.xlu0 %v1047, 2
        %v1174 = vpop.permute.xlu0 %1173
        %1175 = vrot.lane.b32.xlu0 %v1050, 2
        %v1176 = vpop.permute.xlu0 %1175
        %1177 = vrot.lane.b32.xlu0 %v1055, 2
        %v1178 = vpop.permute.xlu0 %1177
        %1179 = vrot.lane.b32.xlu0 %v1058, 2
        %v1180 = vpop.permute.xlu0 %1179
        %1181 = vrot.lane.b32.xlu0 %v1063, 2
        %v1182 = vpop.permute.xlu0 %1181
        %1183 = vrot.lane.b32.xlu0 %v1066, 2
        %v1184 = vpop.permute.xlu0 %1183
        %1185 = vrot.lane.b32.xlu0 %v1071, 2
        %v1186 = vpop.permute.xlu0 %1185
        %1187 = vrot.lane.b32.xlu0 %v1074, 2
        %v1188 = vpop.permute.xlu0 %1187
        %1189 = vrot.lane.b32.xlu0 %v1079, 2
        %v1190 = vpop.permute.xlu0 %1189
        %1191 = vrot.lane.b32.xlu0 %v1082, 2
        %v1192 = vpop.permute.xlu0 %1191
        %1193 = vrot.lane.b32.xlu0 %v1087, 2
        %v1194 = vpop.permute.xlu0 %1193
        %1195 = vrot.lane.b32.xlu0 %v1090, 2
        %v1196 = vpop.permute.xlu0 %1195
        %1197 = vrot.lane.b32.xlu0 %v1095, 2
        %v1198 = vpop.permute.xlu0 %1197
        %1199 = vrot.lane.b32.xlu0 %v1098, 2
        %v1200 = vpop.permute.xlu0 %1199
        %1201 = vrot.lane.b32.xlu0 %v1103, 2
        %v1202 = vpop.permute.xlu0 %1201
        %1203 = vrot.lane.b32.xlu0 %v1106, 2
        %v1204 = vpop.permute.xlu0 %1203
        %1205 = vrot.lane.b32.xlu0 %v1111, 2
        %v1206 = vpop.permute.xlu0 %1205
        %1207 = vrot.lane.b32.xlu0 %v1114, 2
        %v1208 = vpop.permute.xlu0 %1207
        %1209 = vrot.lane.b32.xlu0 %v1119, 2
        %v1210 = vpop.permute.xlu0 %1209
        %1211 = vrot.lane.b32.xlu0 %v1122, 2
        %v1212 = vpop.permute.xlu0 %1211
        %1213 = vrot.lane.b32.xlu0 %v1127, 2
        %v1214 = vpop.permute.xlu0 %1213
        %1215 = vrot.lane.b32.xlu0 %v1130, 2
        %v1216 = vpop.permute.xlu0 %1215
        %1217 = vrot.lane.b32.xlu0 %v1135, 2
        %v1218 = vpop.permute.xlu0 %1217
        %1219 = vrot.lane.b32.xlu0 %v1138, 2
        %v1220 = vpop.permute.xlu0 %1219
        %1221 = vrot.lane.b32.xlu0 %v1143, 2
        %v1222 = vpop.permute.xlu0 %1221
        %1223 = vrot.lane.b32.xlu0 %v1146, 2
        %v1224 = vpop.permute.xlu0 %1223
        %1225 = vrot.lane.b32.xlu0 %v1151, 2
        %v1226 = vpop.permute.xlu0 %1225
        %1227 = vrot.lane.b32.xlu0 %v1154, 2
        %v1228 = vpop.permute.xlu0 %1227
        %1229 = vrot.lane.b32.xlu0 %v1159, 2
        %v1230 = vpop.permute.xlu0 %1229
        %1231 = vrot.lane.b32.xlu0 %v1162, 2
        %v1232 = vpop.permute.xlu0 %1231
        %1233 = vrot.lane.b32.xlu0 %v1167, 2
        %v1234 = vpop.permute.xlu0 %1233
        %1235 = vrot.lane.b32.xlu0 %v1170, 2
        %v1236 = vpop.permute.xlu0 %1235
        %v1237 = vsel %vm271, 1, 0
        %vm1238 = vcmp.eq.s32.totalorder %v1237, 1
        %v1239 = vsel %vm1238, %v1174, 0.0
        %v1240 = vsel %vm1238, %v1176, 0.0
        %v1241 = vsel %vm1238, %v1178, 0.0
        %v1242 = vsel %vm1238, %v1180, 0.0
        %v1243 = vsel %vm1238, %v1182, 0.0
        %v1244 = vsel %vm1238, %v1184, 0.0
        %v1245 = vsel %vm1238, %v1186, 0.0
        %v1246 = vsel %vm1238, %v1188, 0.0
        %v1247 = vsel %vm1238, %v1190, 0.0
        %v1248 = vsel %vm1238, %v1192, 0.0
        %v1249 = vsel %vm1238, %v1194, 0.0
        %v1250 = vsel %vm1238, %v1196, 0.0
        %v1251 = vsel %vm1238, %v1198, 0.0
        %v1252 = vsel %vm1238, %v1200, 0.0
        %v1253 = vsel %vm1238, %v1202, 0.0
        %v1254 = vsel %vm1238, %v1204, 0.0
        %v1255 = vsel %vm1238, %v1206, 0.0
        %v1256 = vsel %vm1238, %v1208, 0.0
        %v1257 = vsel %vm1238, %v1210, 0.0
        %v1258 = vsel %vm1238, %v1212, 0.0
        %v1259 = vsel %vm1238, %v1214, 0.0
        %v1260 = vsel %vm1238, %v1216, 0.0
        %v1261 = vsel %vm1238, %v1218, 0.0
        %v1262 = vsel %vm1238, %v1220, 0.0
        %v1263 = vsel %vm1238, %v1222, 0.0
        %v1264 = vsel %vm1238, %v1224, 0.0
        %v1265 = vsel %vm1238, %v1226, 0.0
        %v1266 = vsel %vm1238, %v1228, 0.0
        %v1267 = vsel %vm1238, %v1230, 0.0
        %v1268 = vsel %vm1238, %v1232, 0.0
        %v1269 = vsel %vm1238, %v1234, 0.0
        %v1270 = vsel %vm1238, %v1236, 0.0
        %v1271 = vadd.f32 %v1239, 0.0
        %v1272 = vadd.f32 %v1240, 0.0
        %v1273 = vadd.f32 %v1241, 0.0
        %v1274 = vadd.f32 %v1242, 0.0
        %v1275 = vadd.f32 %v1243, 0.0
        %v1276 = vadd.f32 %v1244, 0.0
        %v1277 = vadd.f32 %v1245, 0.0
        %v1278 = vadd.f32 %v1246, 0.0
        %v1279 = vadd.f32 %v1247, 0.0
        %v1280 = vadd.f32 %v1248, 0.0
        %v1281 = vadd.f32 %v1249, 0.0
        %v1282 = vadd.f32 %v1250, 0.0
        %v1283 = vadd.f32 %v1251, 0.0
        %v1284 = vadd.f32 %v1252, 0.0
        %v1285 = vadd.f32 %v1253, 0.0
        %v1286 = vadd.f32 %v1254, 0.0
        %v1287 = vadd.f32 %v1255, 0.0
        %v1288 = vadd.f32 %v1256, 0.0
        %v1289 = vadd.f32 %v1257, 0.0
        %v1290 = vadd.f32 %v1258, 0.0
        %v1291 = vadd.f32 %v1259, 0.0
        %v1292 = vadd.f32 %v1260, 0.0
        %v1293 = vadd.f32 %v1261, 0.0
        %v1294 = vadd.f32 %v1262, 0.0
        %v1295 = vadd.f32 %v1263, 0.0
        %v1296 = vadd.f32 %v1264, 0.0
        %v1297 = vadd.f32 %v1265, 0.0
        %v1298 = vadd.f32 %v1266, 0.0
        %v1299 = vadd.f32 %v1267, 0.0
        %v1300 = vadd.f32 %v1268, 0.0
        %v1301 = vadd.f32 %v1269, 0.0
        %v1302 = vadd.f32 %v1270, 0.0
        %s1303 = scalar_lea.vmem [#allocation5], 512
        %v1304 = vld [vmem:[%s1303] sm:$0xff]
        %v1305 = vld [vmem:[%s1303 + $0x8] sm:$0xff]
        %v1306 = vld [vmem:[%s1303 + $0x10] sm:$0xff]
        %v1307 = vld [vmem:[%s1303 + $0x18] sm:$0xff]
        %v1308 = vld [vmem:[%s1303 + $0x20] sm:$0xff]
        %v1309 = vld [vmem:[%s1303 + $0x28] sm:$0xff]
        %v1310 = vld [vmem:[%s1303 + $0x30] sm:$0xff]
        %v1311 = vld [vmem:[%s1303 + $0x38] sm:$0xff]
        %v1312 = vld [vmem:[%s1303 + $0x40] sm:$0xff]
        %v1313 = vld [vmem:[%s1303 + $0x48] sm:$0xff]
        %v1314 = vld [vmem:[%s1303 + $0x50] sm:$0xff]
        %v1315 = vld [vmem:[%s1303 + $0x58] sm:$0xff]
        %v1316 = vld [vmem:[%s1303 + $0x60] sm:$0xff]
        %v1317 = vld [vmem:[%s1303 + $0x68] sm:$0xff]
        %v1318 = vld [vmem:[%s1303 + $0x70] sm:$0xff]
        %v1319 = vld [vmem:[%s1303 + $0x78] sm:$0xff]
        %v1320 = vld [vmem:[%s1303 + $0x80] sm:$0xff]
        %v1321 = vld [vmem:[%s1303 + $0x88] sm:$0xff]
        %v1322 = vld [vmem:[%s1303 + $0x90] sm:$0xff]
        %v1323 = vld [vmem:[%s1303 + $0x98] sm:$0xff]
        %v1324 = vld [vmem:[%s1303 + $0xa0] sm:$0xff]
        %v1325 = vld [vmem:[%s1303 + $0xa8] sm:$0xff]
        %v1326 = vld [vmem:[%s1303 + $0xb0] sm:$0xff]
        %v1327 = vld [vmem:[%s1303 + $0xb8] sm:$0xff]
        %v1328 = vld [vmem:[%s1303 + $0xc0] sm:$0xff]
        %v1329 = vld [vmem:[%s1303 + $0xc8] sm:$0xff]
        %v1330 = vld [vmem:[%s1303 + $0xd0] sm:$0xff]
        %v1331 = vld [vmem:[%s1303 + $0xd8] sm:$0xff]
        %v1332 = vld [vmem:[%s1303 + $0xe0] sm:$0xff]
        %v1333 = vld [vmem:[%s1303 + $0xe8] sm:$0xff]
        %v1334 = vld [vmem:[%s1303 + $0xf0] sm:$0xff]
        %v1335 = vld [vmem:[%s1303 + $0xf8] sm:$0xff]
        %v1336 = vld [vmem:[%s1303 + $0x100] sm:$0xff]
        %v1337 = vld [vmem:[%s1303 + $0x108] sm:$0xff]
        %v1338 = vld [vmem:[%s1303 + $0x110] sm:$0xff]
        %v1339 = vld [vmem:[%s1303 + $0x118] sm:$0xff]
        %v1340 = vld [vmem:[%s1303 + $0x120] sm:$0xff]
        %v1341 = vld [vmem:[%s1303 + $0x128] sm:$0xff]
        %v1342 = vld [vmem:[%s1303 + $0x130] sm:$0xff]
        %v1343 = vld [vmem:[%s1303 + $0x138] sm:$0xff]
        %v1344 = vld [vmem:[%s1303 + $0x140] sm:$0xff]
        %v1345 = vld [vmem:[%s1303 + $0x148] sm:$0xff]
        %v1346 = vld [vmem:[%s1303 + $0x150] sm:$0xff]
        %v1347 = vld [vmem:[%s1303 + $0x158] sm:$0xff]
        %v1348 = vld [vmem:[%s1303 + $0x160] sm:$0xff]
        %v1349 = vld [vmem:[%s1303 + $0x168] sm:$0xff]
        %v1350 = vld [vmem:[%s1303 + $0x170] sm:$0xff]
        %v1351 = vld [vmem:[%s1303 + $0x178] sm:$0xff]
        %v1352 = vld [vmem:[%s1303 + $0x180] sm:$0xff]
        %v1353 = vld [vmem:[%s1303 + $0x188] sm:$0xff]
        %v1354 = vld [vmem:[%s1303 + $0x190] sm:$0xff]
        %v1355 = vld [vmem:[%s1303 + $0x198] sm:$0xff]
        %v1356 = vld [vmem:[%s1303 + $0x1a0] sm:$0xff]
        %v1357 = vld [vmem:[%s1303 + $0x1a8] sm:$0xff]
        %v1358 = vld [vmem:[%s1303 + $0x1b0] sm:$0xff]
        %v1359 = vld [vmem:[%s1303 + $0x1b8] sm:$0xff]
        %v1360 = vld [vmem:[%s1303 + $0x1c0] sm:$0xff]
        %v1361 = vld [vmem:[%s1303 + $0x1c8] sm:$0xff]
        %v1362 = vld [vmem:[%s1303 + $0x1d0] sm:$0xff]
        %v1363 = vld [vmem:[%s1303 + $0x1d8] sm:$0xff]
        %v1364 = vld [vmem:[%s1303 + $0x1e0] sm:$0xff]
        %v1365 = vld [vmem:[%s1303 + $0x1e8] sm:$0xff]
        %v1366 = vld [vmem:[%s1303 + $0x1f0] sm:$0xff]
        %v1367 = vld [vmem:[%s1303 + $0x1f8] sm:$0xff]
        %v1432 = vunpack.c.l.b16 %v1304
        %v1433 = vunpack.c.h.b16 %v1304
        %v1434 = vunpack.c.l.b16 %v1305
        %v1435 = vunpack.c.h.b16 %v1305
        %v1436 = vunpack.c.l.b16 %v1306
        %v1437 = vunpack.c.h.b16 %v1306
        %v1438 = vunpack.c.l.b16 %v1307
        %v1439 = vunpack.c.h.b16 %v1307
        %v1440 = vunpack.c.l.b16 %v1308
        %v1441 = vunpack.c.h.b16 %v1308
        %v1442 = vunpack.c.l.b16 %v1309
        %v1443 = vunpack.c.h.b16 %v1309
        %v1444 = vunpack.c.l.b16 %v1310
        %v1445 = vunpack.c.h.b16 %v1310
        %v1446 = vunpack.c.l.b16 %v1311
        %v1447 = vunpack.c.h.b16 %v1311
        %v1448 = vunpack.c.l.b16 %v1312
        %v1449 = vunpack.c.h.b16 %v1312
        %v1450 = vunpack.c.l.b16 %v1313
        %v1451 = vunpack.c.h.b16 %v1313
        %v1452 = vunpack.c.l.b16 %v1314
        %v1453 = vunpack.c.h.b16 %v1314
        %v1454 = vunpack.c.l.b16 %v1315
        %v1455 = vunpack.c.h.b16 %v1315
        %v1456 = vunpack.c.l.b16 %v1316
        %v1457 = vunpack.c.h.b16 %v1316
        %v1458 = vunpack.c.l.b16 %v1317
        %v1459 = vunpack.c.h.b16 %v1317
        %v1460 = vunpack.c.l.b16 %v1318
        %v1461 = vunpack.c.h.b16 %v1318
        %v1462 = vunpack.c.l.b16 %v1319
        %v1463 = vunpack.c.h.b16 %v1319
        %v1464 = vunpack.c.l.b16 %v1320
        %v1465 = vunpack.c.h.b16 %v1320
        %v1466 = vunpack.c.l.b16 %v1321
        %v1467 = vunpack.c.h.b16 %v1321
        %v1468 = vunpack.c.l.b16 %v1322
        %v1469 = vunpack.c.h.b16 %v1322
        %v1470 = vunpack.c.l.b16 %v1323
        %v1471 = vunpack.c.h.b16 %v1323
        %v1472 = vunpack.c.l.b16 %v1324
        %v1473 = vunpack.c.h.b16 %v1324
        %v1474 = vunpack.c.l.b16 %v1325
        %v1475 = vunpack.c.h.b16 %v1325
        %v1476 = vunpack.c.l.b16 %v1326
        %v1477 = vunpack.c.h.b16 %v1326
        %v1478 = vunpack.c.l.b16 %v1327
        %v1479 = vunpack.c.h.b16 %v1327
        %v1480 = vunpack.c.l.b16 %v1328
        %v1481 = vunpack.c.h.b16 %v1328
        %v1482 = vunpack.c.l.b16 %v1329
        %v1483 = vunpack.c.h.b16 %v1329
        %v1484 = vunpack.c.l.b16 %v1330
        %v1485 = vunpack.c.h.b16 %v1330
        %v1486 = vunpack.c.l.b16 %v1331
        %v1487 = vunpack.c.h.b16 %v1331
        %v1488 = vunpack.c.l.b16 %v1332
        %v1489 = vunpack.c.h.b16 %v1332
        %v1490 = vunpack.c.l.b16 %v1333
        %v1491 = vunpack.c.h.b16 %v1333
        %v1492 = vunpack.c.l.b16 %v1334
        %v1493 = vunpack.c.h.b16 %v1334
        %v1494 = vunpack.c.l.b16 %v1335
        %v1495 = vunpack.c.h.b16 %v1335
        %v1496 = vunpack.c.l.b16 %v1336
        %v1497 = vunpack.c.h.b16 %v1336
        %v1498 = vunpack.c.l.b16 %v1337
        %v1499 = vunpack.c.h.b16 %v1337
        %v1500 = vunpack.c.l.b16 %v1338
        %v1501 = vunpack.c.h.b16 %v1338
        %v1502 = vunpack.c.l.b16 %v1339
        %v1503 = vunpack.c.h.b16 %v1339
        %v1504 = vunpack.c.l.b16 %v1340
        %v1505 = vunpack.c.h.b16 %v1340
        %v1506 = vunpack.c.l.b16 %v1341
        %v1507 = vunpack.c.h.b16 %v1341
        %v1508 = vunpack.c.l.b16 %v1342
        %v1509 = vunpack.c.h.b16 %v1342
        %v1510 = vunpack.c.l.b16 %v1343
        %v1511 = vunpack.c.h.b16 %v1343
        %v1512 = vunpack.c.l.b16 %v1344
        %v1513 = vunpack.c.h.b16 %v1344
        %v1514 = vunpack.c.l.b16 %v1345
        %v1515 = vunpack.c.h.b16 %v1345
        %v1516 = vunpack.c.l.b16 %v1346
        %v1517 = vunpack.c.h.b16 %v1346
        %v1518 = vunpack.c.l.b16 %v1347
        %v1519 = vunpack.c.h.b16 %v1347
        %v1520 = vunpack.c.l.b16 %v1348
        %v1521 = vunpack.c.h.b16 %v1348
        %v1522 = vunpack.c.l.b16 %v1349
        %v1523 = vunpack.c.h.b16 %v1349
        %v1524 = vunpack.c.l.b16 %v1350
        %v1525 = vunpack.c.h.b16 %v1350
        %v1526 = vunpack.c.l.b16 %v1351
        %v1527 = vunpack.c.h.b16 %v1351
        %v1528 = vunpack.c.l.b16 %v1352
        %v1529 = vunpack.c.h.b16 %v1352
        %v1530 = vunpack.c.l.b16 %v1353
        %v1531 = vunpack.c.h.b16 %v1353
        %v1532 = vunpack.c.l.b16 %v1354
        %v1533 = vunpack.c.h.b16 %v1354
        %v1534 = vunpack.c.l.b16 %v1355
        %v1535 = vunpack.c.h.b16 %v1355
        %v1536 = vunpack.c.l.b16 %v1356
        %v1537 = vunpack.c.h.b16 %v1356
        %v1538 = vunpack.c.l.b16 %v1357
        %v1539 = vunpack.c.h.b16 %v1357
        %v1540 = vunpack.c.l.b16 %v1358
        %v1541 = vunpack.c.h.b16 %v1358
        %v1542 = vunpack.c.l.b16 %v1359
        %v1543 = vunpack.c.h.b16 %v1359
        %v1544 = vunpack.c.l.b16 %v1360
        %v1545 = vunpack.c.h.b16 %v1360
        %v1546 = vunpack.c.l.b16 %v1361
        %v1547 = vunpack.c.h.b16 %v1361
        %v1548 = vunpack.c.l.b16 %v1362
        %v1549 = vunpack.c.h.b16 %v1362
        %v1550 = vunpack.c.l.b16 %v1363
        %v1551 = vunpack.c.h.b16 %v1363
        %v1552 = vunpack.c.l.b16 %v1364
        %v1553 = vunpack.c.h.b16 %v1364
        %v1554 = vunpack.c.l.b16 %v1365
        %v1555 = vunpack.c.h.b16 %v1365
        %v1556 = vunpack.c.l.b16 %v1366
        %v1557 = vunpack.c.h.b16 %v1366
        %v1558 = vunpack.c.l.b16 %v1367
        %v1559 = vunpack.c.h.b16 %v1367
        %v1560 = vpack.c.b16 %v1436, %v1432
        %v1561 = vpack.c.b16 %v1437, %v1433
        %v1562 = vpack.c.b16 %v1438, %v1434
        %v1563 = vpack.c.b16 %v1439, %v1435
        %v1564 = vpack.c.b16 %v1444, %v1440
        %v1565 = vpack.c.b16 %v1445, %v1441
        %v1566 = vpack.c.b16 %v1446, %v1442
        %v1567 = vpack.c.b16 %v1447, %v1443
        %v1568 = vpack.c.b16 %v1452, %v1448
        %v1569 = vpack.c.b16 %v1453, %v1449
        %v1570 = vpack.c.b16 %v1454, %v1450
        %v1571 = vpack.c.b16 %v1455, %v1451
        %v1572 = vpack.c.b16 %v1460, %v1456
        %v1573 = vpack.c.b16 %v1461, %v1457
        %v1574 = vpack.c.b16 %v1462, %v1458
        %v1575 = vpack.c.b16 %v1463, %v1459
        %v1576 = vpack.c.b16 %v1468, %v1464
        %v1577 = vpack.c.b16 %v1469, %v1465
        %v1578 = vpack.c.b16 %v1470, %v1466
        %v1579 = vpack.c.b16 %v1471, %v1467
        %v1580 = vpack.c.b16 %v1476, %v1472
        %v1581 = vpack.c.b16 %v1477, %v1473
        %v1582 = vpack.c.b16 %v1478, %v1474
        %v1583 = vpack.c.b16 %v1479, %v1475
        %v1584 = vpack.c.b16 %v1484, %v1480
        %v1585 = vpack.c.b16 %v1485, %v1481
        %v1586 = vpack.c.b16 %v1486, %v1482
        %v1587 = vpack.c.b16 %v1487, %v1483
        %v1588 = vpack.c.b16 %v1492, %v1488
        %v1589 = vpack.c.b16 %v1493, %v1489
        %v1590 = vpack.c.b16 %v1494, %v1490
        %v1591 = vpack.c.b16 %v1495, %v1491
        %v1592 = vpack.c.b16 %v1500, %v1496
        %v1593 = vpack.c.b16 %v1501, %v1497
        %v1594 = vpack.c.b16 %v1502, %v1498
        %v1595 = vpack.c.b16 %v1503, %v1499
        %v1596 = vpack.c.b16 %v1508, %v1504
        %v1597 = vpack.c.b16 %v1509, %v1505
        %v1598 = vpack.c.b16 %v1510, %v1506
        %v1599 = vpack.c.b16 %v1511, %v1507
        %v1600 = vpack.c.b16 %v1516, %v1512
        %v1601 = vpack.c.b16 %v1517, %v1513
        %v1602 = vpack.c.b16 %v1518, %v1514
        %v1603 = vpack.c.b16 %v1519, %v1515
        %v1604 = vpack.c.b16 %v1524, %v1520
        %v1605 = vpack.c.b16 %v1525, %v1521
        %v1606 = vpack.c.b16 %v1526, %v1522
        %v1607 = vpack.c.b16 %v1527, %v1523
        %v1608 = vpack.c.b16 %v1532, %v1528
        %v1609 = vpack.c.b16 %v1533, %v1529
        %v1610 = vpack.c.b16 %v1534, %v1530
        %v1611 = vpack.c.b16 %v1535, %v1531
        %v1612 = vpack.c.b16 %v1540, %v1536
        %v1613 = vpack.c.b16 %v1541, %v1537
        %v1614 = vpack.c.b16 %v1542, %v1538
        %v1615 = vpack.c.b16 %v1543, %v1539
        %v1616 = vpack.c.b16 %v1548, %v1544
        %v1617 = vpack.c.b16 %v1549, %v1545
        %v1618 = vpack.c.b16 %v1550, %v1546
        %v1619 = vpack.c.b16 %v1551, %v1547
        %v1620 = vpack.c.b16 %v1556, %v1552
        %v1621 = vpack.c.b16 %v1557, %v1553
        %v1622 = vpack.c.b16 %v1558, %v1554
        %v1623 = vpack.c.b16 %v1559, %v1555
        %1688 = vmatprep.subr.bf16.mxu0 0
        %1689 = vmatpush1.bf16.msra.mxu0 %v787
        %1690 = vmatprep.subr.bf16.mxu0 0
        %1691 = vmatpush1.bf16.msra.mxu0 %v788
        %1692 = vmatprep.subr.bf16.mxu0 0
        %1693 = vmatpush1.bf16.msra.mxu0 %v789
        %1694 = vmatprep.subr.bf16.mxu0 0
        %1695 = vmatpush1.bf16.msra.mxu0 %v790
        %1696 = vmatprep.subr.bf16.mxu0 0
        %1697 = vmatpush1.bf16.msra.mxu0 %v791
        %1698 = vmatprep.subr.bf16.mxu0 0
        %1699 = vmatpush1.bf16.msra.mxu0 %v792
        %1700 = vmatprep.subr.bf16.mxu0 0
        %1701 = vmatpush1.bf16.msra.mxu0 %v793
        %1702 = vmatprep.subr.bf16.mxu0 0
        %1703 = vmatpush1.bf16.msra.mxu0 %v794
        %1704 = vmatprep.subr.bf16.mxu0 0
        %1705 = vmatpush1.bf16.msra.mxu0 %v795
        %1706 = vmatprep.subr.bf16.mxu0 0
        %1707 = vmatpush1.bf16.msra.mxu0 %v796
        %1708 = vmatprep.subr.bf16.mxu0 0
        %1709 = vmatpush1.bf16.msra.mxu0 %v797
        %1710 = vmatprep.subr.bf16.mxu0 0
        %1711 = vmatpush1.bf16.msra.mxu0 %v798
        %1712 = vmatprep.subr.bf16.mxu0 0
        %1713 = vmatpush1.bf16.msra.mxu0 %v799
        %1714 = vmatprep.subr.bf16.mxu0 0
        %1715 = vmatpush1.bf16.msra.mxu0 %v800
        %1716 = vmatprep.subr.bf16.mxu0 0
        %1717 = vmatpush1.bf16.msra.mxu0 %v801
        %1718 = vmatprep.subr.bf16.mxu0 0
        %1719 = vmatpush1.bf16.msra.mxu0 %v802
        %1720 = vmatprep.mubr.bf16.mxu0 %v1561
        %1721 = vmatmul.mubr.bf16.gmra.mrb[0].mxu0 %v1560
        %v1722 = vpop.f32.mrb[0].mxu0
        %v1723 = vadd.f32 0.0, %v1722
        %v1724 = vpop.f32.mrb[0].mxu0
        %v1725 = vpop.f32.mrb[0].mxu0
        %v1726 = vadd.f32 0.0, %v1725
        %v1727 = vpop.f32.mrb[0].mxu0
        %1728 = vmatprep.mubr.bf16.mxu0 %v1565
        %1729 = vmatmul.mubr.bf16.gmra.mrb[0].mxu0 %v1564
        %v1730 = vpop.f32.mrb[0].mxu0
        %v1731 = vadd.f32 0.0, %v1730
        %v1732 = vpop.f32.mrb[0].mxu0
        %v1733 = vpop.f32.mrb[0].mxu0
        %v1734 = vadd.f32 0.0, %v1733
        %v1735 = vpop.f32.mrb[0].mxu0
        %1736 = vmatprep.mubr.bf16.mxu0 %v1569
        %1737 = vmatmul.mubr.bf16.gmra.mrb[0].mxu0 %v1568
        %v1738 = vpop.f32.mrb[0].mxu0
        %v1739 = vadd.f32 0.0, %v1738
        %v1740 = vpop.f32.mrb[0].mxu0
        %v1741 = vpop.f32.mrb[0].mxu0
        %v1742 = vadd.f32 0.0, %v1741
        %v1743 = vpop.f32.mrb[0].mxu0
        %1744 = vmatprep.mubr.bf16.mxu0 %v1573
        %1745 = vmatmul.mubr.bf16.gmra.mrb[0].mxu0 %v1572
        %v1746 = vpop.f32.mrb[0].mxu0
        %v1747 = vadd.f32 0.0, %v1746
        %v1748 = vpop.f32.mrb[0].mxu0
        %v1749 = vpop.f32.mrb[0].mxu0
        %v1750 = vadd.f32 0.0, %v1749
        %v1751 = vpop.f32.mrb[0].mxu0
        %1752 = vmatprep.mubr.bf16.mxu0 %v1577
        %1753 = vmatmul.mubr.bf16.gmra.mrb[0].mxu0 %v1576
        %v1754 = vpop.f32.mrb[0].mxu0
        %v1755 = vadd.f32 0.0, %v1754
        %v1756 = vpop.f32.mrb[0].mxu0
        %v1757 = vpop.f32.mrb[0].mxu0
        %v1758 = vadd.f32 0.0, %v1757
        %v1759 = vpop.f32.mrb[0].mxu0
        %1760 = vmatprep.mubr.bf16.mxu0 %v1581
        %1761 = vmatmul.mubr.bf16.gmra.mrb[0].mxu0 %v1580
        %v1762 = vpop.f32.mrb[0].mxu0
        %v1763 = vadd.f32 0.0, %v1762
        %v1764 = vpop.f32.mrb[0].mxu0
        %v1765 = vpop.f32.mrb[0].mxu0
        %v1766 = vadd.f32 0.0, %v1765
        %v1767 = vpop.f32.mrb[0].mxu0
        %1768 = vmatprep.mubr.bf16.mxu0 %v1585
        %1769 = vmatmul.mubr.bf16.gmra.mrb[0].mxu0 %v1584
        %v1770 = vpop.f32.mrb[0].mxu0
        %v1771 = vadd.f32 0.0, %v1770
        %v1772 = vpop.f32.mrb[0].mxu0
        %v1773 = vpop.f32.mrb[0].mxu0
        %v1774 = vadd.f32 0.0, %v1773
        %v1775 = vpop.f32.mrb[0].mxu0
        %1776 = vmatprep.mubr.bf16.mxu0 %v1589
        %1777 = vmatmul.mubr.bf16.gmra.mrb[0].mxu0 %v1588
        %v1778 = vpop.f32.mrb[0].mxu0
        %v1779 = vadd.f32 0.0, %v1778
        %v1780 = vpop.f32.mrb[0].mxu0
        %v1781 = vpop.f32.mrb[0].mxu0
        %v1782 = vadd.f32 0.0, %v1781
        %v1783 = vpop.f32.mrb[0].mxu0
        %1784 = vmatprep.mubr.bf16.mxu0 %v1593
        %1785 = vmatmul.mubr.bf16.gmra.mrb[0].mxu0 %v1592
        %v1786 = vpop.f32.mrb[0].mxu0
        %v1787 = vadd.f32 0.0, %v1786
        %v1788 = vpop.f32.mrb[0].mxu0
        %v1789 = vpop.f32.mrb[0].mxu0
        %v1790 = vadd.f32 0.0, %v1789
        %v1791 = vpop.f32.mrb[0].mxu0
        %1792 = vmatprep.mubr.bf16.mxu0 %v1597
        %1793 = vmatmul.mubr.bf16.gmra.mrb[0].mxu0 %v1596
        %v1794 = vpop.f32.mrb[0].mxu0
        %v1795 = vadd.f32 0.0, %v1794
        %v1796 = vpop.f32.mrb[0].mxu0
        %v1797 = vpop.f32.mrb[0].mxu0
        %v1798 = vadd.f32 0.0, %v1797
        %v1799 = vpop.f32.mrb[0].mxu0
        %1800 = vmatprep.mubr.bf16.mxu0 %v1601
        %1801 = vmatmul.mubr.bf16.gmra.mrb[0].mxu0 %v1600
        %v1802 = vpop.f32.mrb[0].mxu0
        %v1803 = vadd.f32 0.0, %v1802
        %v1804 = vpop.f32.mrb[0].mxu0
        %v1805 = vpop.f32.mrb[0].mxu0
        %v1806 = vadd.f32 0.0, %v1805
        %v1807 = vpop.f32.mrb[0].mxu0
        %1808 = vmatprep.mubr.bf16.mxu0 %v1605
        %1809 = vmatmul.mubr.bf16.gmra.mrb[0].mxu0 %v1604
        %v1810 = vpop.f32.mrb[0].mxu0
        %v1811 = vadd.f32 0.0, %v1810
        %v1812 = vpop.f32.mrb[0].mxu0
        %v1813 = vpop.f32.mrb[0].mxu0
        %v1814 = vadd.f32 0.0, %v1813
        %v1815 = vpop.f32.mrb[0].mxu0
        %1816 = vmatprep.mubr.bf16.mxu0 %v1609
        %1817 = vmatmul.mubr.bf16.gmra.mrb[0].mxu0 %v1608
        %v1818 = vpop.f32.mrb[0].mxu0
        %v1819 = vadd.f32 0.0, %v1818
        %v1820 = vpop.f32.mrb[0].mxu0
        %v1821 = vpop.f32.mrb[0].mxu0
        %v1822 = vadd.f32 0.0, %v1821
        %v1823 = vpop.f32.mrb[0].mxu0
        %1824 = vmatprep.mubr.bf16.mxu0 %v1613
        %1825 = vmatmul.mubr.bf16.gmra.mrb[0].mxu0 %v1612
        %v1826 = vpop.f32.mrb[0].mxu0
        %v1827 = vadd.f32 0.0, %v1826
        %v1828 = vpop.f32.mrb[0].mxu0
        %v1829 = vpop.f32.mrb[0].mxu0
        %v1830 = vadd.f32 0.0, %v1829
        %v1831 = vpop.f32.mrb[0].mxu0
        %1832 = vmatprep.mubr.bf16.mxu0 %v1617
        %1833 = vmatmul.mubr.bf16.gmra.mrb[0].mxu0 %v1616
        %v1834 = vpop.f32.mrb[0].mxu0
        %v1835 = vadd.f32 0.0, %v1834
        %v1836 = vpop.f32.mrb[0].mxu0
        %v1837 = vpop.f32.mrb[0].mxu0
        %v1838 = vadd.f32 0.0, %v1837
        %v1839 = vpop.f32.mrb[0].mxu0
        %1840 = vmatprep.mubr.bf16.mxu0 %v1621
        %1841 = vmatmul.mubr.bf16.gmra.mrb[0].mxu0 %v1620
        %v1842 = vpop.f32.mrb[0].mxu0
        %v1843 = vadd.f32 0.0, %v1842
        %v1844 = vpop.f32.mrb[0].mxu0
        %v1845 = vpop.f32.mrb[0].mxu0
        %v1846 = vadd.f32 0.0, %v1845
        %v1847 = vpop.f32.mrb[0].mxu0
        %1848 = vdwg.mxu0
        %1849 = vmatprep.subr.bf16.mxu0 0
        %1850 = vmatpush1.bf16.msra.mxu0 %v803
        %1851 = vmatprep.subr.bf16.mxu0 0
        %1852 = vmatpush1.bf16.msra.mxu0 %v804
        %1853 = vmatprep.subr.bf16.mxu0 0
        %1854 = vmatpush1.bf16.msra.mxu0 %v805
        %1855 = vmatprep.subr.bf16.mxu0 0
        %1856 = vmatpush1.bf16.msra.mxu0 %v806
        %1857 = vmatprep.subr.bf16.mxu0 0
        %1858 = vmatpush1.bf16.msra.mxu0 %v807
        %1859 = vmatprep.subr.bf16.mxu0 0
        %1860 = vmatpush1.bf16.msra.mxu0 %v808
        %1861 = vmatprep.subr.bf16.mxu0 0
        %1862 = vmatpush1.bf16.msra.mxu0 %v809
        %1863 = vmatprep.subr.bf16.mxu0 0
        %1864 = vmatpush1.bf16.msra.mxu0 %v810
        %1865 = vmatprep.subr.bf16.mxu0 0
        %1866 = vmatpush1.bf16.msra.mxu0 %v811
        %1867 = vmatprep.subr.bf16.mxu0 0
        %1868 = vmatpush1.bf16.msra.mxu0 %v812
        %1869 = vmatprep.subr.bf16.mxu0 0
        %1870 = vmatpush1.bf16.msra.mxu0 %v813
        %1871 = vmatprep.subr.bf16.mxu0 0
        %1872 = vmatpush1.bf16.msra.mxu0 %v814
        %1873 = vmatprep.subr.bf16.mxu0 0
        %1874 = vmatpush1.bf16.msra.mxu0 %v815
        %1875 = vmatprep.subr.bf16.mxu0 0
        %1876 = vmatpush1.bf16.msra.mxu0 %v816
        %1877 = vmatprep.subr.bf16.mxu0 0
        %1878 = vmatpush1.bf16.msra.mxu0 %v817
        %1879 = vmatprep.subr.bf16.mxu0 0
        %1880 = vmatpush1.bf16.msra.mxu0 %v818
        %1881 = vmatprep.mubr.bf16.mxu0 %v1563
        %1882 = vmatmul.mubr.bf16.gmra.mrb[0].mxu0 %v1562
        %v1883 = vpop.f32.mrb[0].mxu0
        %v1884 = vadd.f32 %v1723, %v1883
        %v1885 = vpop.f32.mrb[0].mxu0
        %v1886 = vpop.f32.mrb[0].mxu0
        %v1887 = vadd.f32 %v1726, %v1886
        %v1888 = vpop.f32.mrb[0].mxu0
        %1889 = vmatprep.mubr.bf16.mxu0 %v1567
        %1890 = vmatmul.mubr.bf16.gmra.mrb[0].mxu0 %v1566
        %v1891 = vpop.f32.mrb[0].mxu0
        %v1892 = vadd.f32 %v1731, %v1891
        %v1893 = vpop.f32.mrb[0].mxu0
        %v1894 = vpop.f32.mrb[0].mxu0
        %v1895 = vadd.f32 %v1734, %v1894
        %v1896 = vpop.f32.mrb[0].mxu0
        %1897 = vmatprep.mubr.bf16.mxu0 %v1571
        %1898 = vmatmul.mubr.bf16.gmra.mrb[0].mxu0 %v1570
        %v1899 = vpop.f32.mrb[0].mxu0
        %v1900 = vadd.f32 %v1739, %v1899
        %v1901 = vpop.f32.mrb[0].mxu0
        %v1902 = vpop.f32.mrb[0].mxu0
        %v1903 = vadd.f32 %v1742, %v1902
        %v1904 = vpop.f32.mrb[0].mxu0
        %1905 = vmatprep.mubr.bf16.mxu0 %v1575
        %1906 = vmatmul.mubr.bf16.gmra.mrb[0].mxu0 %v1574
        %v1907 = vpop.f32.mrb[0].mxu0
        %v1908 = vadd.f32 %v1747, %v1907
        %v1909 = vpop.f32.mrb[0].mxu0
        %v1910 = vpop.f32.mrb[0].mxu0
        %v1911 = vadd.f32 %v1750, %v1910
        %v1912 = vpop.f32.mrb[0].mxu0
        %1913 = vmatprep.mubr.bf16.mxu0 %v1579
        %1914 = vmatmul.mubr.bf16.gmra.mrb[0].mxu0 %v1578
        %v1915 = vpop.f32.mrb[0].mxu0
        %v1916 = vadd.f32 %v1755, %v1915
        %v1917 = vpop.f32.mrb[0].mxu0
        %v1918 = vpop.f32.mrb[0].mxu0
        %v1919 = vadd.f32 %v1758, %v1918
        %v1920 = vpop.f32.mrb[0].mxu0
        %1921 = vmatprep.mubr.bf16.mxu0 %v1583
        %1922 = vmatmul.mubr.bf16.gmra.mrb[0].mxu0 %v1582
        %v1923 = vpop.f32.mrb[0].mxu0
        %v1924 = vadd.f32 %v1763, %v1923
        %v1925 = vpop.f32.mrb[0].mxu0
        %v1926 = vpop.f32.mrb[0].mxu0
        %v1927 = vadd.f32 %v1766, %v1926
        %v1928 = vpop.f32.mrb[0].mxu0
        %1929 = vmatprep.mubr.bf16.mxu0 %v1587
        %1930 = vmatmul.mubr.bf16.gmra.mrb[0].mxu0 %v1586
        %v1931 = vpop.f32.mrb[0].mxu0
        %v1932 = vadd.f32 %v1771, %v1931
        %v1933 = vpop.f32.mrb[0].mxu0
        %v1934 = vpop.f32.mrb[0].mxu0
        %v1935 = vadd.f32 %v1774, %v1934
        %v1936 = vpop.f32.mrb[0].mxu0
        %1937 = vmatprep.mubr.bf16.mxu0 %v1591
        %1938 = vmatmul.mubr.bf16.gmra.mrb[0].mxu0 %v1590
        %v1939 = vpop.f32.mrb[0].mxu0
        %v1940 = vadd.f32 %v1779, %v1939
        %v1941 = vpop.f32.mrb[0].mxu0
        %v1942 = vpop.f32.mrb[0].mxu0
        %v1943 = vadd.f32 %v1782, %v1942
        %v1944 = vpop.f32.mrb[0].mxu0
        %1945 = vmatprep.mubr.bf16.mxu0 %v1595
        %1946 = vmatmul.mubr.bf16.gmra.mrb[0].mxu0 %v1594
        %v1947 = vpop.f32.mrb[0].mxu0
        %v1948 = vadd.f32 %v1787, %v1947
        %v1949 = vpop.f32.mrb[0].mxu0
        %v1950 = vpop.f32.mrb[0].mxu0
        %v1951 = vadd.f32 %v1790, %v1950
        %v1952 = vpop.f32.mrb[0].mxu0
        %1953 = vmatprep.mubr.bf16.mxu0 %v1599
        %1954 = vmatmul.mubr.bf16.gmra.mrb[0].mxu0 %v1598
        %v1955 = vpop.f32.mrb[0].mxu0
        %v1956 = vadd.f32 %v1795, %v1955
        %v1957 = vpop.f32.mrb[0].mxu0
        %v1958 = vpop.f32.mrb[0].mxu0
        %v1959 = vadd.f32 %v1798, %v1958
        %v1960 = vpop.f32.mrb[0].mxu0
        %1961 = vmatprep.mubr.bf16.mxu0 %v1603
        %1962 = vmatmul.mubr.bf16.gmra.mrb[0].mxu0 %v1602
        %v1963 = vpop.f32.mrb[0].mxu0
        %v1964 = vadd.f32 %v1803, %v1963
        %v1965 = vpop.f32.mrb[0].mxu0
        %v1966 = vpop.f32.mrb[0].mxu0
        %v1967 = vadd.f32 %v1806, %v1966
        %v1968 = vpop.f32.mrb[0].mxu0
        %1969 = vmatprep.mubr.bf16.mxu0 %v1607
        %1970 = vmatmul.mubr.bf16.gmra.mrb[0].mxu0 %v1606
        %v1971 = vpop.f32.mrb[0].mxu0
        %v1972 = vadd.f32 %v1811, %v1971
        %v1973 = vpop.f32.mrb[0].mxu0
        %v1974 = vpop.f32.mrb[0].mxu0
        %v1975 = vadd.f32 %v1814, %v1974
        %v1976 = vpop.f32.mrb[0].mxu0
        %1977 = vmatprep.mubr.bf16.mxu0 %v1611
        %1978 = vmatmul.mubr.bf16.gmra.mrb[0].mxu0 %v1610
        %v1979 = vpop.f32.mrb[0].mxu0
        %v1980 = vadd.f32 %v1819, %v1979
        %v1981 = vpop.f32.mrb[0].mxu0
        %v1982 = vpop.f32.mrb[0].mxu0
        %v1983 = vadd.f32 %v1822, %v1982
        %v1984 = vpop.f32.mrb[0].mxu0
        %1985 = vmatprep.mubr.bf16.mxu0 %v1615
        %1986 = vmatmul.mubr.bf16.gmra.mrb[0].mxu0 %v1614
        %v1987 = vpop.f32.mrb[0].mxu0
        %v1988 = vadd.f32 %v1827, %v1987
        %v1989 = vpop.f32.mrb[0].mxu0
        %v1990 = vpop.f32.mrb[0].mxu0
        %v1991 = vadd.f32 %v1830, %v1990
        %v1992 = vpop.f32.mrb[0].mxu0
        %1993 = vmatprep.mubr.bf16.mxu0 %v1619
        %1994 = vmatmul.mubr.bf16.gmra.mrb[0].mxu0 %v1618
        %v1995 = vpop.f32.mrb[0].mxu0
        %v1996 = vadd.f32 %v1835, %v1995
        %v1997 = vpop.f32.mrb[0].mxu0
        %v1998 = vpop.f32.mrb[0].mxu0
        %v1999 = vadd.f32 %v1838, %v1998
        %v2000 = vpop.f32.mrb[0].mxu0
        %2001 = vmatprep.mubr.bf16.mxu0 %v1623
        %2002 = vmatmul.mubr.bf16.gmra.mrb[0].mxu0 %v1622
        %v2003 = vpop.f32.mrb[0].mxu0
        %v2004 = vadd.f32 %v1843, %v2003
        %v2005 = vpop.f32.mrb[0].mxu0
        %v2006 = vpop.f32.mrb[0].mxu0
        %v2007 = vadd.f32 %v1846, %v2006
        %v2008 = vpop.f32.mrb[0].mxu0
        %2009 = vdwg.mxu0
        %2010 = vrot.lane.b32.xlu0 %v1884, 1
        %v2011 = vpop.permute.xlu0 %2010
        %2012 = vrot.lane.b32.xlu0 %v1887, 1
        %v2013 = vpop.permute.xlu0 %2012
        %2014 = vrot.lane.b32.xlu0 %v1892, 1
        %v2015 = vpop.permute.xlu0 %2014
        %2016 = vrot.lane.b32.xlu0 %v1895, 1
        %v2017 = vpop.permute.xlu0 %2016
        %2018 = vrot.lane.b32.xlu0 %v1900, 1
        %v2019 = vpop.permute.xlu0 %2018
        %2020 = vrot.lane.b32.xlu0 %v1903, 1
        %v2021 = vpop.permute.xlu0 %2020
        %2022 = vrot.lane.b32.xlu0 %v1908, 1
        %v2023 = vpop.permute.xlu0 %2022
        %2024 = vrot.lane.b32.xlu0 %v1911, 1
        %v2025 = vpop.permute.xlu0 %2024
        %2026 = vrot.lane.b32.xlu0 %v1916, 1
        %v2027 = vpop.permute.xlu0 %2026
        %2028 = vrot.lane.b32.xlu0 %v1919, 1
        %v2029 = vpop.permute.xlu0 %2028
        %2030 = vrot.lane.b32.xlu0 %v1924, 1
        %v2031 = vpop.permute.xlu0 %2030
        %2032 = vrot.lane.b32.xlu0 %v1927, 1
        %v2033 = vpop.permute.xlu0 %2032
        %2034 = vrot.lane.b32.xlu0 %v1932, 1
        %v2035 = vpop.permute.xlu0 %2034
        %2036 = vrot.lane.b32.xlu0 %v1935, 1
        %v2037 = vpop.permute.xlu0 %2036
        %2038 = vrot.lane.b32.xlu0 %v1940, 1
        %v2039 = vpop.permute.xlu0 %2038
        %2040 = vrot.lane.b32.xlu0 %v1943, 1
        %v2041 = vpop.permute.xlu0 %2040
        %2042 = vrot.lane.b32.xlu0 %v1948, 1
        %v2043 = vpop.permute.xlu0 %2042
        %2044 = vrot.lane.b32.xlu0 %v1951, 1
        %v2045 = vpop.permute.xlu0 %2044
        %2046 = vrot.lane.b32.xlu0 %v1956, 1
        %v2047 = vpop.permute.xlu0 %2046
        %2048 = vrot.lane.b32.xlu0 %v1959, 1
        %v2049 = vpop.permute.xlu0 %2048
        %2050 = vrot.lane.b32.xlu0 %v1964, 1
        %v2051 = vpop.permute.xlu0 %2050
        %2052 = vrot.lane.b32.xlu0 %v1967, 1
        %v2053 = vpop.permute.xlu0 %2052
        %2054 = vrot.lane.b32.xlu0 %v1972, 1
        %v2055 = vpop.permute.xlu0 %2054
        %2056 = vrot.lane.b32.xlu0 %v1975, 1
        %v2057 = vpop.permute.xlu0 %2056
        %2058 = vrot.lane.b32.xlu0 %v1980, 1
        %v2059 = vpop.permute.xlu0 %2058
        %2060 = vrot.lane.b32.xlu0 %v1983, 1
        %v2061 = vpop.permute.xlu0 %2060
        %2062 = vrot.lane.b32.xlu0 %v1988, 1
        %v2063 = vpop.permute.xlu0 %2062
        %2064 = vrot.lane.b32.xlu0 %v1991, 1
        %v2065 = vpop.permute.xlu0 %2064
        %2066 = vrot.lane.b32.xlu0 %v1996, 1
        %v2067 = vpop.permute.xlu0 %2066
        %2068 = vrot.lane.b32.xlu0 %v1999, 1
        %v2069 = vpop.permute.xlu0 %2068
        %2070 = vrot.lane.b32.xlu0 %v2004, 1
        %v2071 = vpop.permute.xlu0 %2070
        %2072 = vrot.lane.b32.xlu0 %v2007, 1
        %v2073 = vpop.permute.xlu0 %2072
        %v2074 = vsel %vm272, 1, 0
        %vm2075 = vcmp.eq.s32.totalorder %v2074, 1
        %v2076 = vsel %vm2075, %v2011, 0.0
        %v2077 = vsel %vm2075, %v2013, 0.0
        %v2078 = vsel %vm2075, %v2015, 0.0
        %v2079 = vsel %vm2075, %v2017, 0.0
        %v2080 = vsel %vm2075, %v2019, 0.0
        %v2081 = vsel %vm2075, %v2021, 0.0
        %v2082 = vsel %vm2075, %v2023, 0.0
        %v2083 = vsel %vm2075, %v2025, 0.0
        %v2084 = vsel %vm2075, %v2027, 0.0
        %v2085 = vsel %vm2075, %v2029, 0.0
        %v2086 = vsel %vm2075, %v2031, 0.0
        %v2087 = vsel %vm2075, %v2033, 0.0
        %v2088 = vsel %vm2075, %v2035, 0.0
        %v2089 = vsel %vm2075, %v2037, 0.0
        %v2090 = vsel %vm2075, %v2039, 0.0
        %v2091 = vsel %vm2075, %v2041, 0.0
        %v2092 = vsel %vm2075, %v2043, 0.0
        %v2093 = vsel %vm2075, %v2045, 0.0
        %v2094 = vsel %vm2075, %v2047, 0.0
        %v2095 = vsel %vm2075, %v2049, 0.0
        %v2096 = vsel %vm2075, %v2051, 0.0
        %v2097 = vsel %vm2075, %v2053, 0.0
        %v2098 = vsel %vm2075, %v2055, 0.0
        %v2099 = vsel %vm2075, %v2057, 0.0
        %v2100 = vsel %vm2075, %v2059, 0.0
        %v2101 = vsel %vm2075, %v2061, 0.0
        %v2102 = vsel %vm2075, %v2063, 0.0
        %v2103 = vsel %vm2075, %v2065, 0.0
        %v2104 = vsel %vm2075, %v2067, 0.0
        %v2105 = vsel %vm2075, %v2069, 0.0
        %v2106 = vsel %vm2075, %v2071, 0.0
        %v2107 = vsel %vm2075, %v2073, 0.0
        %v2108 = vadd.f32 %v1271, %v2076
        %v2109 = vadd.f32 %v1272, %v2077
        %v2110 = vadd.f32 %v1273, %v2078
        %v2111 = vadd.f32 %v1274, %v2079
        %v2112 = vadd.f32 %v1275, %v2080
        %v2113 = vadd.f32 %v1276, %v2081
        %v2114 = vadd.f32 %v1277, %v2082
        %v2115 = vadd.f32 %v1278, %v2083
        %v2116 = vadd.f32 %v1279, %v2084
        %v2117 = vadd.f32 %v1280, %v2085
        %v2118 = vadd.f32 %v1281, %v2086
        %v2119 = vadd.f32 %v1282, %v2087
        %v2120 = vadd.f32 %v1283, %v2088
        %v2121 = vadd.f32 %v1284, %v2089
        %v2122 = vadd.f32 %v1285, %v2090
        %v2123 = vadd.f32 %v1286, %v2091
        %v2124 = vadd.f32 %v1287, %v2092
        %v2125 = vadd.f32 %v1288, %v2093
        %v2126 = vadd.f32 %v1289, %v2094
        %v2127 = vadd.f32 %v1290, %v2095
        %v2128 = vadd.f32 %v1291, %v2096
        %v2129 = vadd.f32 %v1292, %v2097
        %v2130 = vadd.f32 %v1293, %v2098
        %v2131 = vadd.f32 %v1294, %v2099
        %v2132 = vadd.f32 %v1295, %v2100
        %v2133 = vadd.f32 %v1296, %v2101
        %v2134 = vadd.f32 %v1297, %v2102
        %v2135 = vadd.f32 %v1298, %v2103
        %v2136 = vadd.f32 %v1299, %v2104
        %v2137 = vadd.f32 %v1300, %v2105
        %v2138 = vadd.f32 %v1301, %v2106
        %v2139 = vadd.f32 %v1302, %v2107
        %s2140 = scalar_lea.vmem [#allocation5], 1024
        %v2141 = vld [vmem:[%s2140] sm:$0xff]
        %v2142 = vld [vmem:[%s2140 + $0x8] sm:$0xff]
        %v2143 = vld [vmem:[%s2140 + $0x10] sm:$0xff]
        %v2144 = vld [vmem:[%s2140 + $0x18] sm:$0xff]
        %v2145 = vld [vmem:[%s2140 + $0x20] sm:$0xff]
        %v2146 = vld [vmem:[%s2140 + $0x28] sm:$0xff]
        %v2147 = vld [vmem:[%s2140 + $0x30] sm:$0xff]
        %v2148 = vld [vmem:[%s2140 + $0x38] sm:$0xff]
        %v2149 = vld [vmem:[%s2140 + $0x40] sm:$0xff]
        %v2150 = vld [vmem:[%s2140 + $0x48] sm:$0xff]
        %v2151 = vld [vmem:[%s2140 + $0x50] sm:$0xff]
        %v2152 = vld [vmem:[%s2140 + $0x58] sm:$0xff]
        %v2153 = vld [vmem:[%s2140 + $0x60] sm:$0xff]
        %v2154 = vld [vmem:[%s2140 + $0x68] sm:$0xff]
        %v2155 = vld [vmem:[%s2140 + $0x70] sm:$0xff]
        %v2156 = vld [vmem:[%s2140 + $0x78] sm:$0xff]
        %v2157 = vld [vmem:[%s2140 + $0x80] sm:$0xff]
        %v2158 = vld [vmem:[%s2140 + $0x88] sm:$0xff]
        %v2159 = vld [vmem:[%s2140 + $0x90] sm:$0xff]
        %v2160 = vld [vmem:[%s2140 + $0x98] sm:$0xff]
        %v2161 = vld [vmem:[%s2140 + $0xa0] sm:$0xff]
        %v2162 = vld [vmem:[%s2140 + $0xa8] sm:$0xff]
        %v2163 = vld [vmem:[%s2140 + $0xb0] sm:$0xff]
        %v2164 = vld [vmem:[%s2140 + $0xb8] sm:$0xff]
        %v2165 = vld [vmem:[%s2140 + $0xc0] sm:$0xff]
        %v2166 = vld [vmem:[%s2140 + $0xc8] sm:$0xff]
        %v2167 = vld [vmem:[%s2140 + $0xd0] sm:$0xff]
        %v2168 = vld [vmem:[%s2140 + $0xd8] sm:$0xff]
        %v2169 = vld [vmem:[%s2140 + $0xe0] sm:$0xff]
        %v2170 = vld [vmem:[%s2140 + $0xe8] sm:$0xff]
        %v2171 = vld [vmem:[%s2140 + $0xf0] sm:$0xff]
        %v2172 = vld [vmem:[%s2140 + $0xf8] sm:$0xff]
        %v2173 = vld [vmem:[%s2140 + $0x100] sm:$0xff]
        %v2174 = vld [vmem:[%s2140 + $0x108] sm:$0xff]
        %v2175 = vld [vmem:[%s2140 + $0x110] sm:$0xff]
        %v2176 = vld [vmem:[%s2140 + $0x118] sm:$0xff]
        %v2177 = vld [vmem:[%s2140 + $0x120] sm:$0xff]
        %v2178 = vld [vmem:[%s2140 + $0x128] sm:$0xff]
        %v2179 = vld [vmem:[%s2140 + $0x130] sm:$0xff]
        %v2180 = vld [vmem:[%s2140 + $0x138] sm:$0xff]
        %v2181 = vld [vmem:[%s2140 + $0x140] sm:$0xff]
        %v2182 = vld [vmem:[%s2140 + $0x148] sm:$0xff]
        %v2183 = vld [vmem:[%s2140 + $0x150] sm:$0xff]
        %v2184 = vld [vmem:[%s2140 + $0x158] sm:$0xff]
        %v2185 = vld [vmem:[%s2140 + $0x160] sm:$0xff]
        %v2186 = vld [vmem:[%s2140 + $0x168] sm:$0xff]
        %v2187 = vld [vmem:[%s2140 + $0x170] sm:$0xff]
        %v2188 = vld [vmem:[%s2140 + $0x178] sm:$0xff]
        %v2189 = vld [vmem:[%s2140 + $0x180] sm:$0xff]
        %v2190 = vld [vmem:[%s2140 + $0x188] sm:$0xff]
        %v2191 = vld [vmem:[%s2140 + $0x190] sm:$0xff]
        %v2192 = vld [vmem:[%s2140 + $0x198] sm:$0xff]
        %v2193 = vld [vmem:[%s2140 + $0x1a0] sm:$0xff]
        %v2194 = vld [vmem:[%s2140 + $0x1a8] sm:$0xff]
        %v2195 = vld [vmem:[%s2140 + $0x1b0] sm:$0xff]
        %v2196 = vld [vmem:[%s2140 + $0x1b8] sm:$0xff]
        %v2197 = vld [vmem:[%s2140 + $0x1c0] sm:$0xff]
        %v2198 = vld [vmem:[%s2140 + $0x1c8] sm:$0xff]
        %v2199 = vld [vmem:[%s2140 + $0x1d0] sm:$0xff]
        %v2200 = vld [vmem:[%s2140 + $0x1d8] sm:$0xff]
        %v2201 = vld [vmem:[%s2140 + $0x1e0] sm:$0xff]
        %v2202 = vld [vmem:[%s2140 + $0x1e8] sm:$0xff]
        %v2203 = vld [vmem:[%s2140 + $0x1f0] sm:$0xff]
        %v2204 = vld [vmem:[%s2140 + $0x1f8] sm:$0xff]
        %v2269 = vunpack.c.l.b16 %v2141
        %v2270 = vunpack.c.h.b16 %v2141
        %v2271 = vunpack.c.l.b16 %v2142
        %v2272 = vunpack.c.h.b16 %v2142
        %v2273 = vunpack.c.l.b16 %v2143
        %v2274 = vunpack.c.h.b16 %v2143
        %v2275 = vunpack.c.l.b16 %v2144
        %v2276 = vunpack.c.h.b16 %v2144
        %v2277 = vunpack.c.l.b16 %v2145
        %v2278 = vunpack.c.h.b16 %v2145
        %v2279 = vunpack.c.l.b16 %v2146
        %v2280 = vunpack.c.h.b16 %v2146
        %v2281 = vunpack.c.l.b16 %v2147
        %v2282 = vunpack.c.h.b16 %v2147
        %v2283 = vunpack.c.l.b16 %v2148
        %v2284 = vunpack.c.h.b16 %v2148
        %v2285 = vunpack.c.l.b16 %v2149
        %v2286 = vunpack.c.h.b16 %v2149
        %v2287 = vunpack.c.l.b16 %v2150
        %v2288 = vunpack.c.h.b16 %v2150
        %v2289 = vunpack.c.l.b16 %v2151
        %v2290 = vunpack.c.h.b16 %v2151
        %v2291 = vunpack.c.l.b16 %v2152
        %v2292 = vunpack.c.h.b16 %v2152
        %v2293 = vunpack.c.l.b16 %v2153
        %v2294 = vunpack.c.h.b16 %v2153
        %v2295 = vunpack.c.l.b16 %v2154
        %v2296 = vunpack.c.h.b16 %v2154
        %v2297 = vunpack.c.l.b16 %v2155
        %v2298 = vunpack.c.h.b16 %v2155
        %v2299 = vunpack.c.l.b16 %v2156
        %v2300 = vunpack.c.h.b16 %v2156
        %v2301 = vunpack.c.l.b16 %v2157
        %v2302 = vunpack.c.h.b16 %v2157
        %v2303 = vunpack.c.l.b16 %v2158
        %v2304 = vunpack.c.h.b16 %v2158
        %v2305 = vunpack.c.l.b16 %v2159
        %v2306 = vunpack.c.h.b16 %v2159
        %v2307 = vunpack.c.l.b16 %v2160
        %v2308 = vunpack.c.h.b16 %v2160
        %v2309 = vunpack.c.l.b16 %v2161
        %v2310 = vunpack.c.h.b16 %v2161
        %v2311 = vunpack.c.l.b16 %v2162
        %v2312 = vunpack.c.h.b16 %v2162
        %v2313 = vunpack.c.l.b16 %v2163
        %v2314 = vunpack.c.h.b16 %v2163
        %v2315 = vunpack.c.l.b16 %v2164
        %v2316 = vunpack.c.h.b16 %v2164
        %v2317 = vunpack.c.l.b16 %v2165
        %v2318 = vunpack.c.h.b16 %v2165
        %v2319 = vunpack.c.l.b16 %v2166
        %v2320 = vunpack.c.h.b16 %v2166
        %v2321 = vunpack.c.l.b16 %v2167
        %v2322 = vunpack.c.h.b16 %v2167
        %v2323 = vunpack.c.l.b16 %v2168
        %v2324 = vunpack.c.h.b16 %v2168
        %v2325 = vunpack.c.l.b16 %v2169
        %v2326 = vunpack.c.h.b16 %v2169
        %v2327 = vunpack.c.l.b16 %v2170
        %v2328 = vunpack.c.h.b16 %v2170
        %v2329 = vunpack.c.l.b16 %v2171
        %v2330 = vunpack.c.h.b16 %v2171
        %v2331 = vunpack.c.l.b16 %v2172
        %v2332 = vunpack.c.h.b16 %v2172
        %v2333 = vunpack.c.l.b16 %v2173
        %v2334 = vunpack.c.h.b16 %v2173
        %v2335 = vunpack.c.l.b16 %v2174
        %v2336 = vunpack.c.h.b16 %v2174
        %v2337 = vunpack.c.l.b16 %v2175
        %v2338 = vunpack.c.h.b16 %v2175
        %v2339 = vunpack.c.l.b16 %v2176
        %v2340 = vunpack.c.h.b16 %v2176
        %v2341 = vunpack.c.l.b16 %v2177
        %v2342 = vunpack.c.h.b16 %v2177
        %v2343 = vunpack.c.l.b16 %v2178
        %v2344 = vunpack.c.h.b16 %v2178
        %v2345 = vunpack.c.l.b16 %v2179
        %v2346 = vunpack.c.h.b16 %v2179
        %v2347 = vunpack.c.l.b16 %v2180
        %v2348 = vunpack.c.h.b16 %v2180
        %v2349 = vunpack.c.l.b16 %v2181
        %v2350 = vunpack.c.h.b16 %v2181
        %v2351 = vunpack.c.l.b16 %v2182
        %v2352 = vunpack.c.h.b16 %v2182
        %v2353 = vunpack.c.l.b16 %v2183
        %v2354 = vunpack.c.h.b16 %v2183
        %v2355 = vunpack.c.l.b16 %v2184
        %v2356 = vunpack.c.h.b16 %v2184
        %v2357 = vunpack.c.l.b16 %v2185
        %v2358 = vunpack.c.h.b16 %v2185
        %v2359 = vunpack.c.l.b16 %v2186
        %v2360 = vunpack.c.h.b16 %v2186
        %v2361 = vunpack.c.l.b16 %v2187
        %v2362 = vunpack.c.h.b16 %v2187
        %v2363 = vunpack.c.l.b16 %v2188
        %v2364 = vunpack.c.h.b16 %v2188
        %v2365 = vunpack.c.l.b16 %v2189
        %v2366 = vunpack.c.h.b16 %v2189
        %v2367 = vunpack.c.l.b16 %v2190
        %v2368 = vunpack.c.h.b16 %v2190
        %v2369 = vunpack.c.l.b16 %v2191
        %v2370 = vunpack.c.h.b16 %v2191
        %v2371 = vunpack.c.l.b16 %v2192
        %v2372 = vunpack.c.h.b16 %v2192
        %v2373 = vunpack.c.l.b16 %v2193
        %v2374 = vunpack.c.h.b16 %v2193
        %v2375 = vunpack.c.l.b16 %v2194
        %v2376 = vunpack.c.h.b16 %v2194
        %v2377 = vunpack.c.l.b16 %v2195
        %v2378 = vunpack.c.h.b16 %v2195
        %v2379 = vunpack.c.l.b16 %v2196
        %v2380 = vunpack.c.h.b16 %v2196
        %v2381 = vunpack.c.l.b16 %v2197
        %v2382 = vunpack.c.h.b16 %v2197
        %v2383 = vunpack.c.l.b16 %v2198
        %v2384 = vunpack.c.h.b16 %v2198
        %v2385 = vunpack.c.l.b16 %v2199
        %v2386 = vunpack.c.h.b16 %v2199
        %v2387 = vunpack.c.l.b16 %v2200
        %v2388 = vunpack.c.h.b16 %v2200
        %v2389 = vunpack.c.l.b16 %v2201
        %v2390 = vunpack.c.h.b16 %v2201
        %v2391 = vunpack.c.l.b16 %v2202
        %v2392 = vunpack.c.h.b16 %v2202
        %v2393 = vunpack.c.l.b16 %v2203
        %v2394 = vunpack.c.h.b16 %v2203
        %v2395 = vunpack.c.l.b16 %v2204
        %v2396 = vunpack.c.h.b16 %v2204
        %v2397 = vpack.c.b16 %v2273, %v2269
        %v2398 = vpack.c.b16 %v2274, %v2270
        %v2399 = vpack.c.b16 %v2275, %v2271
        %v2400 = vpack.c.b16 %v2276, %v2272
        %v2401 = vpack.c.b16 %v2281, %v2277
        %v2402 = vpack.c.b16 %v2282, %v2278
        %v2403 = vpack.c.b16 %v2283, %v2279
        %v2404 = vpack.c.b16 %v2284, %v2280
        %v2405 = vpack.c.b16 %v2289, %v2285
        %v2406 = vpack.c.b16 %v2290, %v2286
        %v2407 = vpack.c.b16 %v2291, %v2287
        %v2408 = vpack.c.b16 %v2292, %v2288
        %v2409 = vpack.c.b16 %v2297, %v2293
        %v2410 = vpack.c.b16 %v2298, %v2294
        %v2411 = vpack.c.b16 %v2299, %v2295
        %v2412 = vpack.c.b16 %v2300, %v2296
        %v2413 = vpack.c.b16 %v2305, %v2301
        %v2414 = vpack.c.b16 %v2306, %v2302
        %v2415 = vpack.c.b16 %v2307, %v2303
        %v2416 = vpack.c.b16 %v2308, %v2304
        %v2417 = vpack.c.b16 %v2313, %v2309
        %v2418 = vpack.c.b16 %v2314, %v2310
        %v2419 = vpack.c.b16 %v2315, %v2311
        %v2420 = vpack.c.b16 %v2316, %v2312
        %v2421 = vpack.c.b16 %v2321, %v2317
        %v2422 = vpack.c.b16 %v2322, %v2318
        %v2423 = vpack.c.b16 %v2323, %v2319
        %v2424 = vpack.c.b16 %v2324, %v2320
        %v2425 = vpack.c.b16 %v2329, %v2325
        %v2426 = vpack.c.b16 %v2330, %v2326
        %v2427 = vpack.c.b16 %v2331, %v2327
        %v2428 = vpack.c.b16 %v2332, %v2328
        %v2429 = vpack.c.b16 %v2337, %v2333
        %v2430 = vpack.c.b16 %v2338, %v2334
        %v2431 = vpack.c.b16 %v2339, %v2335
        %v2432 = vpack.c.b16 %v2340, %v2336
        %v2433 = vpack.c.b16 %v2345, %v2341
        %v2434 = vpack.c.b16 %v2346, %v2342
        %v2435 = vpack.c.b16 %v2347, %v2343
        %v2436 = vpack.c.b16 %v2348, %v2344
        %v2437 = vpack.c.b16 %v2353, %v2349
        %v2438 = vpack.c.b16 %v2354, %v2350
        %v2439 = vpack.c.b16 %v2355, %v2351
        %v2440 = vpack.c.b16 %v2356, %v2352
        %v2441 = vpack.c.b16 %v2361, %v2357
        %v2442 = vpack.c.b16 %v2362, %v2358
        %v2443 = vpack.c.b16 %v2363, %v2359
        %v2444 = vpack.c.b16 %v2364, %v2360
        %v2445 = vpack.c.b16 %v2369, %v2365
        %v2446 = vpack.c.b16 %v2370, %v2366
        %v2447 = vpack.c.b16 %v2371, %v2367
        %v2448 = vpack.c.b16 %v2372, %v2368
        %v2449 = vpack.c.b16 %v2377, %v2373
        %v2450 = vpack.c.b16 %v2378, %v2374
        %v2451 = vpack.c.b16 %v2379, %v2375
        %v2452 = vpack.c.b16 %v2380, %v2376
        %v2453 = vpack.c.b16 %v2385, %v2381
        %v2454 = vpack.c.b16 %v2386, %v2382
        %v2455 = vpack.c.b16 %v2387, %v2383
        %v2456 = vpack.c.b16 %v2388, %v2384
        %v2457 = vpack.c.b16 %v2393, %v2389
        %v2458 = vpack.c.b16 %v2394, %v2390
        %v2459 = vpack.c.b16 %v2395, %v2391
        %v2460 = vpack.c.b16 %v2396, %v2392
        %2525 = vmatprep.subr.bf16.mxu0 0
        %2526 = vmatpush1.bf16.msra.mxu0 %v787
        %2527 = vmatprep.subr.bf16.mxu0 0
        %2528 = vmatpush1.bf16.msra.mxu0 %v788
        %2529 = vmatprep.subr.bf16.mxu0 0
        %2530 = vmatpush1.bf16.msra.mxu0 %v789
        %2531 = vmatprep.subr.bf16.mxu0 0
        %2532 = vmatpush1.bf16.msra.mxu0 %v790
        %2533 = vmatprep.subr.bf16.mxu0 0
        %2534 = vmatpush1.bf16.msra.mxu0 %v791
        %2535 = vmatprep.subr.bf16.mxu0 0
        %2536 = vmatpush1.bf16.msra.mxu0 %v792
        %2537 = vmatprep.subr.bf16.mxu0 0
        %2538 = vmatpush1.bf16.msra.mxu0 %v793
        %2539 = vmatprep.subr.bf16.mxu0 0
        %2540 = vmatpush1.bf16.msra.mxu0 %v794
        %2541 = vmatprep.subr.bf16.mxu0 0
        %2542 = vmatpush1.bf16.msra.mxu0 %v795
        %2543 = vmatprep.subr.bf16.mxu0 0
        %2544 = vmatpush1.bf16.msra.mxu0 %v796
        %2545 = vmatprep.subr.bf16.mxu0 0
        %2546 = vmatpush1.bf16.msra.mxu0 %v797
        %2547 = vmatprep.subr.bf16.mxu0 0
        %2548 = vmatpush1.bf16.msra.mxu0 %v798
        %2549 = vmatprep.subr.bf16.mxu0 0
        %2550 = vmatpush1.bf16.msra.mxu0 %v799
        %2551 = vmatprep.subr.bf16.mxu0 0
        %2552 = vmatpush1.bf16.msra.mxu0 %v800
        %2553 = vmatprep.subr.bf16.mxu0 0
        %2554 = vmatpush1.bf16.msra.mxu0 %v801
        %2555 = vmatprep.subr.bf16.mxu0 0
        %2556 = vmatpush1.bf16.msra.mxu0 %v802
        %2557 = vmatprep.mubr.bf16.mxu0 %v2398
        %2558 = vmatmul.mubr.bf16.gmra.mrb[0].mxu0 %v2397
        %v2559 = vpop.f32.mrb[0].mxu0
        %v2560 = vadd.f32 0.0, %v2559
        %v2561 = vpop.f32.mrb[0].mxu0
        %v2562 = vpop.f32.mrb[0].mxu0
        %v2563 = vadd.f32 0.0, %v2562
        %v2564 = vpop.f32.mrb[0].mxu0
        %2565 = vmatprep.mubr.bf16.mxu0 %v2402
        %2566 = vmatmul.mubr.bf16.gmra.mrb[0].mxu0 %v2401
        %v2567 = vpop.f32.mrb[0].mxu0
        %v2568 = vadd.f32 0.0, %v2567
        %v2569 = vpop.f32.mrb[0].mxu0
        %v2570 = vpop.f32.mrb[0].mxu0
        %v2571 = vadd.f32 0.0, %v2570
        %v2572 = vpop.f32.mrb[0].mxu0
        %2573 = vmatprep.mubr.bf16.mxu0 %v2406
        %2574 = vmatmul.mubr.bf16.gmra.mrb[0].mxu0 %v2405
        %v2575 = vpop.f32.mrb[0].mxu0
        %v2576 = vadd.f32 0.0, %v2575
        %v2577 = vpop.f32.mrb[0].mxu0
        %v2578 = vpop.f32.mrb[0].mxu0
        %v2579 = vadd.f32 0.0, %v2578
        %v2580 = vpop.f32.mrb[0].mxu0
        %2581 = vmatprep.mubr.bf16.mxu0 %v2410
        %2582 = vmatmul.mubr.bf16.gmra.mrb[0].mxu0 %v2409
        %v2583 = vpop.f32.mrb[0].mxu0
        %v2584 = vadd.f32 0.0, %v2583
        %v2585 = vpop.f32.mrb[0].mxu0
        %v2586 = vpop.f32.mrb[0].mxu0
        %v2587 = vadd.f32 0.0, %v2586
        %v2588 = vpop.f32.mrb[0].mxu0
        %2589 = vmatprep.mubr.bf16.mxu0 %v2414
        %2590 = vmatmul.mubr.bf16.gmra.mrb[0].mxu0 %v2413
        %v2591 = vpop.f32.mrb[0].mxu0
        %v2592 = vadd.f32 0.0, %v2591
        %v2593 = vpop.f32.mrb[0].mxu0
        %v2594 = vpop.f32.mrb[0].mxu0
        %v2595 = vadd.f32 0.0, %v2594
        %v2596 = vpop.f32.mrb[0].mxu0
        %2597 = vmatprep.mubr.bf16.mxu0 %v2418
        %2598 = vmatmul.mubr.bf16.gmra.mrb[0].mxu0 %v2417
        %v2599 = vpop.f32.mrb[0].mxu0
        %v2600 = vadd.f32 0.0, %v2599
        %v2601 = vpop.f32.mrb[0].mxu0
        %v2602 = vpop.f32.mrb[0].mxu0
        %v2603 = vadd.f32 0.0, %v2602
        %v2604 = vpop.f32.mrb[0].mxu0
        %2605 = vmatprep.mubr.bf16.mxu0 %v2422
        %2606 = vmatmul.mubr.bf16.gmra.mrb[0].mxu0 %v2421
        %v2607 = vpop.f32.mrb[0].mxu0
        %v2608 = vadd.f32 0.0, %v2607
        %v2609 = vpop.f32.mrb[0].mxu0
        %v2610 = vpop.f32.mrb[0].mxu0
        %v2611 = vadd.f32 0.0, %v2610
        %v2612 = vpop.f32.mrb[0].mxu0
        %2613 = vmatprep.mubr.bf16.mxu0 %v2426
        %2614 = vmatmul.mubr.bf16.gmra.mrb[0].mxu0 %v2425
        %v2615 = vpop.f32.mrb[0].mxu0
        %v2616 = vadd.f32 0.0, %v2615
        %v2617 = vpop.f32.mrb[0].mxu0
        %v2618 = vpop.f32.mrb[0].mxu0
        %v2619 = vadd.f32 0.0, %v2618
        %v2620 = vpop.f32.mrb[0].mxu0
        %2621 = vmatprep.mubr.bf16.mxu0 %v2430
        %2622 = vmatmul.mubr.bf16.gmra.mrb[0].mxu0 %v2429
        %v2623 = vpop.f32.mrb[0].mxu0
        %v2624 = vadd.f32 0.0, %v2623
        %v2625 = vpop.f32.mrb[0].mxu0
        %v2626 = vpop.f32.mrb[0].mxu0
        %v2627 = vadd.f32 0.0, %v2626
        %v2628 = vpop.f32.mrb[0].mxu0
        %2629 = vmatprep.mubr.bf16.mxu0 %v2434
        %2630 = vmatmul.mubr.bf16.gmra.mrb[0].mxu0 %v2433
        %v2631 = vpop.f32.mrb[0].mxu0
        %v2632 = vadd.f32 0.0, %v2631
        %v2633 = vpop.f32.mrb[0].mxu0
        %v2634 = vpop.f32.mrb[0].mxu0
        %v2635 = vadd.f32 0.0, %v2634
        %v2636 = vpop.f32.mrb[0].mxu0
        %2637 = vmatprep.mubr.bf16.mxu0 %v2438
        %2638 = vmatmul.mubr.bf16.gmra.mrb[0].mxu0 %v2437
        %v2639 = vpop.f32.mrb[0].mxu0
        %v2640 = vadd.f32 0.0, %v2639
        %v2641 = vpop.f32.mrb[0].mxu0
        %v2642 = vpop.f32.mrb[0].mxu0
        %v2643 = vadd.f32 0.0, %v2642
        %v2644 = vpop.f32.mrb[0].mxu0
        %2645 = vmatprep.mubr.bf16.mxu0 %v2442
        %2646 = vmatmul.mubr.bf16.gmra.mrb[0].mxu0 %v2441
        %v2647 = vpop.f32.mrb[0].mxu0
        %v2648 = vadd.f32 0.0, %v2647
        %v2649 = vpop.f32.mrb[0].mxu0
        %v2650 = vpop.f32.mrb[0].mxu0
        %v2651 = vadd.f32 0.0, %v2650
        %v2652 = vpop.f32.mrb[0].mxu0
        %2653 = vmatprep.mubr.bf16.mxu0 %v2446
        %2654 = vmatmul.mubr.bf16.gmra.mrb[0].mxu0 %v2445
        %v2655 = vpop.f32.mrb[0].mxu0
        %v2656 = vadd.f32 0.0, %v2655
        %v2657 = vpop.f32.mrb[0].mxu0
        %v2658 = vpop.f32.mrb[0].mxu0
        %v2659 = vadd.f32 0.0, %v2658
        %v2660 = vpop.f32.mrb[0].mxu0
        %2661 = vmatprep.mubr.bf16.mxu0 %v2450
        %2662 = vmatmul.mubr.bf16.gmra.mrb[0].mxu0 %v2449
        %v2663 = vpop.f32.mrb[0].mxu0
        %v2664 = vadd.f32 0.0, %v2663
        %v2665 = vpop.f32.mrb[0].mxu0
        %v2666 = vpop.f32.mrb[0].mxu0
        %v2667 = vadd.f32 0.0, %v2666
        %v2668 = vpop.f32.mrb[0].mxu0
        %2669 = vmatprep.mubr.bf16.mxu0 %v2454
        %2670 = vmatmul.mubr.bf16.gmra.mrb[0].mxu0 %v2453
        %v2671 = vpop.f32.mrb[0].mxu0
        %v2672 = vadd.f32 0.0, %v2671
        %v2673 = vpop.f32.mrb[0].mxu0
        %v2674 = vpop.f32.mrb[0].mxu0
        %v2675 = vadd.f32 0.0, %v2674
        %v2676 = vpop.f32.mrb[0].mxu0
        %2677 = vmatprep.mubr.bf16.mxu0 %v2458
        %2678 = vmatmul.mubr.bf16.gmra.mrb[0].mxu0 %v2457
        %v2679 = vpop.f32.mrb[0].mxu0
        %v2680 = vadd.f32 0.0, %v2679
        %v2681 = vpop.f32.mrb[0].mxu0
        %v2682 = vpop.f32.mrb[0].mxu0
        %v2683 = vadd.f32 0.0, %v2682
        %v2684 = vpop.f32.mrb[0].mxu0
        %2685 = vdwg.mxu0
        %2686 = vmatprep.subr.bf16.mxu0 0
        %2687 = vmatpush1.bf16.msra.mxu0 %v803
        %2688 = vmatprep.subr.bf16.mxu0 0
        %2689 = vmatpush1.bf16.msra.mxu0 %v804
        %2690 = vmatprep.subr.bf16.mxu0 0
        %2691 = vmatpush1.bf16.msra.mxu0 %v805
        %2692 = vmatprep.subr.bf16.mxu0 0
        %2693 = vmatpush1.bf16.msra.mxu0 %v806
        %2694 = vmatprep.subr.bf16.mxu0 0
        %2695 = vmatpush1.bf16.msra.mxu0 %v807
        %2696 = vmatprep.subr.bf16.mxu0 0
        %2697 = vmatpush1.bf16.msra.mxu0 %v808
        %2698 = vmatprep.subr.bf16.mxu0 0
        %2699 = vmatpush1.bf16.msra.mxu0 %v809
        %2700 = vmatprep.subr.bf16.mxu0 0
        %2701 = vmatpush1.bf16.msra.mxu0 %v810
        %2702 = vmatprep.subr.bf16.mxu0 0
        %2703 = vmatpush1.bf16.msra.mxu0 %v811
        %2704 = vmatprep.subr.bf16.mxu0 0
        %2705 = vmatpush1.bf16.msra.mxu0 %v812
        %2706 = vmatprep.subr.bf16.mxu0 0
        %2707 = vmatpush1.bf16.msra.mxu0 %v813
        %2708 = vmatprep.subr.bf16.mxu0 0
        %2709 = vmatpush1.bf16.msra.mxu0 %v814
        %2710 = vmatprep.subr.bf16.mxu0 0
        %2711 = vmatpush1.bf16.msra.mxu0 %v815
        %2712 = vmatprep.subr.bf16.mxu0 0
        %2713 = vmatpush1.bf16.msra.mxu0 %v816
        %2714 = vmatprep.subr.bf16.mxu0 0
        %2715 = vmatpush1.bf16.msra.mxu0 %v817
        %2716 = vmatprep.subr.bf16.mxu0 0
        %2717 = vmatpush1.bf16.msra.mxu0 %v818
        %2718 = vmatprep.mubr.bf16.mxu0 %v2400
        %2719 = vmatmul.mubr.bf16.gmra.mrb[0].mxu0 %v2399
        %v2720 = vpop.f32.mrb[0].mxu0
        %v2721 = vadd.f32 %v2560, %v2720
        %v2722 = vpop.f32.mrb[0].mxu0
        %v2723 = vpop.f32.mrb[0].mxu0
        %v2724 = vadd.f32 %v2563, %v2723
        %v2725 = vpop.f32.mrb[0].mxu0
        %2726 = vmatprep.mubr.bf16.mxu0 %v2404
        %2727 = vmatmul.mubr.bf16.gmra.mrb[0].mxu0 %v2403
        %v2728 = vpop.f32.mrb[0].mxu0
        %v2729 = vadd.f32 %v2568, %v2728
        %v2730 = vpop.f32.mrb[0].mxu0
        %v2731 = vpop.f32.mrb[0].mxu0
        %v2732 = vadd.f32 %v2571, %v2731
        %v2733 = vpop.f32.mrb[0].mxu0
        %2734 = vmatprep.mubr.bf16.mxu0 %v2408
        %2735 = vmatmul.mubr.bf16.gmra.mrb[0].mxu0 %v2407
        %v2736 = vpop.f32.mrb[0].mxu0
        %v2737 = vadd.f32 %v2576, %v2736
        %v2738 = vpop.f32.mrb[0].mxu0
        %v2739 = vpop.f32.mrb[0].mxu0
        %v2740 = vadd.f32 %v2579, %v2739
        %v2741 = vpop.f32.mrb[0].mxu0
        %2742 = vmatprep.mubr.bf16.mxu0 %v2412
        %2743 = vmatmul.mubr.bf16.gmra.mrb[0].mxu0 %v2411
        %v2744 = vpop.f32.mrb[0].mxu0
        %v2745 = vadd.f32 %v2584, %v2744
        %v2746 = vpop.f32.mrb[0].mxu0
        %v2747 = vpop.f32.mrb[0].mxu0
        %v2748 = vadd.f32 %v2587, %v2747
        %v2749 = vpop.f32.mrb[0].mxu0
        %2750 = vmatprep.mubr.bf16.mxu0 %v2416
        %2751 = vmatmul.mubr.bf16.gmra.mrb[0].mxu0 %v2415
        %v2752 = vpop.f32.mrb[0].mxu0
        %v2753 = vadd.f32 %v2592, %v2752
        %v2754 = vpop.f32.mrb[0].mxu0
        %v2755 = vpop.f32.mrb[0].mxu0
        %v2756 = vadd.f32 %v2595, %v2755
        %v2757 = vpop.f32.mrb[0].mxu0
        %2758 = vmatprep.mubr.bf16.mxu0 %v2420
        %2759 = vmatmul.mubr.bf16.gmra.mrb[0].mxu0 %v2419
        %v2760 = vpop.f32.mrb[0].mxu0
        %v2761 = vadd.f32 %v2600, %v2760
        %v2762 = vpop.f32.mrb[0].mxu0
        %v2763 = vpop.f32.mrb[0].mxu0
        %v2764 = vadd.f32 %v2603, %v2763
        %v2765 = vpop.f32.mrb[0].mxu0
        %2766 = vmatprep.mubr.bf16.mxu0 %v2424
        %2767 = vmatmul.mubr.bf16.gmra.mrb[0].mxu0 %v2423
        %v2768 = vpop.f32.mrb[0].mxu0
        %v2769 = vadd.f32 %v2608, %v2768
        %v2770 = vpop.f32.mrb[0].mxu0
        %v2771 = vpop.f32.mrb[0].mxu0
        %v2772 = vadd.f32 %v2611, %v2771
        %v2773 = vpop.f32.mrb[0].mxu0
        %2774 = vmatprep.mubr.bf16.mxu0 %v2428
        %2775 = vmatmul.mubr.bf16.gmra.mrb[0].mxu0 %v2427
        %v2776 = vpop.f32.mrb[0].mxu0
        %v2777 = vadd.f32 %v2616, %v2776
        %v2778 = vpop.f32.mrb[0].mxu0
        %v2779 = vpop.f32.mrb[0].mxu0
        %v2780 = vadd.f32 %v2619, %v2779
        %v2781 = vpop.f32.mrb[0].mxu0
        %2782 = vmatprep.mubr.bf16.mxu0 %v2432
        %2783 = vmatmul.mubr.bf16.gmra.mrb[0].mxu0 %v2431
        %v2784 = vpop.f32.mrb[0].mxu0
        %v2785 = vadd.f32 %v2624, %v2784
        %v2786 = vpop.f32.mrb[0].mxu0
        %v2787 = vpop.f32.mrb[0].mxu0
        %v2788 = vadd.f32 %v2627, %v2787
        %v2789 = vpop.f32.mrb[0].mxu0
        %2790 = vmatprep.mubr.bf16.mxu0 %v2436
        %2791 = vmatmul.mubr.bf16.gmra.mrb[0].mxu0 %v2435
        %v2792 = vpop.f32.mrb[0].mxu0
        %v2793 = vadd.f32 %v2632, %v2792
        %v2794 = vpop.f32.mrb[0].mxu0
        %v2795 = vpop.f32.mrb[0].mxu0
        %v2796 = vadd.f32 %v2635, %v2795
        %v2797 = vpop.f32.mrb[0].mxu0
        %2798 = vmatprep.mubr.bf16.mxu0 %v2440
        %2799 = vmatmul.mubr.bf16.gmra.mrb[0].mxu0 %v2439
        %v2800 = vpop.f32.mrb[0].mxu0
        %v2801 = vadd.f32 %v2640, %v2800
        %v2802 = vpop.f32.mrb[0].mxu0
        %v2803 = vpop.f32.mrb[0].mxu0
        %v2804 = vadd.f32 %v2643, %v2803
        %v2805 = vpop.f32.mrb[0].mxu0
        %2806 = vmatprep.mubr.bf16.mxu0 %v2444
        %2807 = vmatmul.mubr.bf16.gmra.mrb[0].mxu0 %v2443
        %v2808 = vpop.f32.mrb[0].mxu0
        %v2809 = vadd.f32 %v2648, %v2808
        %v2810 = vpop.f32.mrb[0].mxu0
        %v2811 = vpop.f32.mrb[0].mxu0
        %v2812 = vadd.f32 %v2651, %v2811
        %v2813 = vpop.f32.mrb[0].mxu0
        %2814 = vmatprep.mubr.bf16.mxu0 %v2448
        %2815 = vmatmul.mubr.bf16.gmra.mrb[0].mxu0 %v2447
        %v2816 = vpop.f32.mrb[0].mxu0
        %v2817 = vadd.f32 %v2656, %v2816
        %v2818 = vpop.f32.mrb[0].mxu0
        %v2819 = vpop.f32.mrb[0].mxu0
        %v2820 = vadd.f32 %v2659, %v2819
        %v2821 = vpop.f32.mrb[0].mxu0
        %2822 = vmatprep.mubr.bf16.mxu0 %v2452
        %2823 = vmatmul.mubr.bf16.gmra.mrb[0].mxu0 %v2451
        %v2824 = vpop.f32.mrb[0].mxu0
        %v2825 = vadd.f32 %v2664, %v2824
        %v2826 = vpop.f32.mrb[0].mxu0
        %v2827 = vpop.f32.mrb[0].mxu0
        %v2828 = vadd.f32 %v2667, %v2827
        %v2829 = vpop.f32.mrb[0].mxu0
        %2830 = vmatprep.mubr.bf16.mxu0 %v2456
        %2831 = vmatmul.mubr.bf16.gmra.mrb[0].mxu0 %v2455
        %v2832 = vpop.f32.mrb[0].mxu0
        %v2833 = vadd.f32 %v2672, %v2832
        %v2834 = vpop.f32.mrb[0].mxu0
        %v2835 = vpop.f32.mrb[0].mxu0
        %v2836 = vadd.f32 %v2675, %v2835
        %v2837 = vpop.f32.mrb[0].mxu0
        %2838 = vmatprep.mubr.bf16.mxu0 %v2460
        %2839 = vmatmul.mubr.bf16.gmra.mrb[0].mxu0 %v2459
        %v2840 = vpop.f32.mrb[0].mxu0
        %v2841 = vadd.f32 %v2680, %v2840
        %v2842 = vpop.f32.mrb[0].mxu0
        %v2843 = vpop.f32.mrb[0].mxu0
        %v2844 = vadd.f32 %v2683, %v2843
        %v2845 = vpop.f32.mrb[0].mxu0
        %2846 = vdwg.mxu0
        %v2847 = vadd.f32 %v2108, %v2721
        %v2848 = vadd.f32 %v2109, %v2724
        %v2849 = vadd.f32 %v2110, %v2729
        %v2850 = vadd.f32 %v2111, %v2732
        %v2851 = vadd.f32 %v2112, %v2737
        %v2852 = vadd.f32 %v2113, %v2740
        %v2853 = vadd.f32 %v2114, %v2745
        %v2854 = vadd.f32 %v2115, %v2748
        %v2855 = vadd.f32 %v2116, %v2753
        %v2856 = vadd.f32 %v2117, %v2756
        %v2857 = vadd.f32 %v2118, %v2761
        %v2858 = vadd.f32 %v2119, %v2764
        %v2859 = vadd.f32 %v2120, %v2769
        %v2860 = vadd.f32 %v2121, %v2772
        %v2861 = vadd.f32 %v2122, %v2777
        %v2862 = vadd.f32 %v2123, %v2780
        %v2863 = vadd.f32 %v2124, %v2785
        %v2864 = vadd.f32 %v2125, %v2788
        %v2865 = vadd.f32 %v2126, %v2793
        %v2866 = vadd.f32 %v2127, %v2796
        %v2867 = vadd.f32 %v2128, %v2801
        %v2868 = vadd.f32 %v2129, %v2804
        %v2869 = vadd.f32 %v2130, %v2809
        %v2870 = vadd.f32 %v2131, %v2812
        %v2871 = vadd.f32 %v2132, %v2817
        %v2872 = vadd.f32 %v2133, %v2820
        %v2873 = vadd.f32 %v2134, %v2825
        %v2874 = vadd.f32 %v2135, %v2828
        %v2875 = vadd.f32 %v2136, %v2833
        %v2876 = vadd.f32 %v2137, %v2836
        %v2877 = vadd.f32 %v2138, %v2841
        %v2878 = vadd.f32 %v2139, %v2844
        %s2879 = scalar_lea.vmem [#allocation5], 1536
        %v2880 = vld [vmem:[%s2879] sm:$0xff]
        %v2881 = vld [vmem:[%s2879 + $0x8] sm:$0xff]
        %v2882 = vld [vmem:[%s2879 + $0x10] sm:$0xff]
        %v2883 = vld [vmem:[%s2879 + $0x18] sm:$0xff]
        %v2884 = vld [vmem:[%s2879 + $0x20] sm:$0xff]
        %v2885 = vld [vmem:[%s2879 + $0x28] sm:$0xff]
        %v2886 = vld [vmem:[%s2879 + $0x30] sm:$0xff]
        %v2887 = vld [vmem:[%s2879 + $0x38] sm:$0xff]
        %v2888 = vld [vmem:[%s2879 + $0x40] sm:$0xff]
        %v2889 = vld [vmem:[%s2879 + $0x48] sm:$0xff]
        %v2890 = vld [vmem:[%s2879 + $0x50] sm:$0xff]
        %v2891 = vld [vmem:[%s2879 + $0x58] sm:$0xff]
        %v2892 = vld [vmem:[%s2879 + $0x60] sm:$0xff]
        %v2893 = vld [vmem:[%s2879 + $0x68] sm:$0xff]
        %v2894 = vld [vmem:[%s2879 + $0x70] sm:$0xff]
        %v2895 = vld [vmem:[%s2879 + $0x78] sm:$0xff]
        %v2896 = vld [vmem:[%s2879 + $0x80] sm:$0xff]
        %v2897 = vld [vmem:[%s2879 + $0x88] sm:$0xff]
        %v2898 = vld [vmem:[%s2879 + $0x90] sm:$0xff]
        %v2899 = vld [vmem:[%s2879 + $0x98] sm:$0xff]
        %v2900 = vld [vmem:[%s2879 + $0xa0] sm:$0xff]
        %v2901 = vld [vmem:[%s2879 + $0xa8] sm:$0xff]
        %v2902 = vld [vmem:[%s2879 + $0xb0] sm:$0xff]
        %v2903 = vld [vmem:[%s2879 + $0xb8] sm:$0xff]
        %v2904 = vld [vmem:[%s2879 + $0xc0] sm:$0xff]
        %v2905 = vld [vmem:[%s2879 + $0xc8] sm:$0xff]
        %v2906 = vld [vmem:[%s2879 + $0xd0] sm:$0xff]
        %v2907 = vld [vmem:[%s2879 + $0xd8] sm:$0xff]
        %v2908 = vld [vmem:[%s2879 + $0xe0] sm:$0xff]
        %v2909 = vld [vmem:[%s2879 + $0xe8] sm:$0xff]
        %v2910 = vld [vmem:[%s2879 + $0xf0] sm:$0xff]
        %v2911 = vld [vmem:[%s2879 + $0xf8] sm:$0xff]
        %v2912 = vld [vmem:[%s2879 + $0x100] sm:$0xff]
        %v2913 = vld [vmem:[%s2879 + $0x108] sm:$0xff]
        %v2914 = vld [vmem:[%s2879 + $0x110] sm:$0xff]
        %v2915 = vld [vmem:[%s2879 + $0x118] sm:$0xff]
        %v2916 = vld [vmem:[%s2879 + $0x120] sm:$0xff]
        %v2917 = vld [vmem:[%s2879 + $0x128] sm:$0xff]
        %v2918 = vld [vmem:[%s2879 + $0x130] sm:$0xff]
        %v2919 = vld [vmem:[%s2879 + $0x138] sm:$0xff]
        %v2920 = vld [vmem:[%s2879 + $0x140] sm:$0xff]
        %v2921 = vld [vmem:[%s2879 + $0x148] sm:$0xff]
        %v2922 = vld [vmem:[%s2879 + $0x150] sm:$0xff]
        %v2923 = vld [vmem:[%s2879 + $0x158] sm:$0xff]
        %v2924 = vld [vmem:[%s2879 + $0x160] sm:$0xff]
        %v2925 = vld [vmem:[%s2879 + $0x168] sm:$0xff]
        %v2926 = vld [vmem:[%s2879 + $0x170] sm:$0xff]
        %v2927 = vld [vmem:[%s2879 + $0x178] sm:$0xff]
        %v2928 = vld [vmem:[%s2879 + $0x180] sm:$0xff]
        %v2929 = vld [vmem:[%s2879 + $0x188] sm:$0xff]
        %v2930 = vld [vmem:[%s2879 + $0x190] sm:$0xff]
        %v2931 = vld [vmem:[%s2879 + $0x198] sm:$0xff]
        %v2932 = vld [vmem:[%s2879 + $0x1a0] sm:$0xff]
        %v2933 = vld [vmem:[%s2879 + $0x1a8] sm:$0xff]
        %v2934 = vld [vmem:[%s2879 + $0x1b0] sm:$0xff]
        %v2935 = vld [vmem:[%s2879 + $0x1b8] sm:$0xff]
        %v2936 = vld [vmem:[%s2879 + $0x1c0] sm:$0xff]
        %v2937 = vld [vmem:[%s2879 + $0x1c8] sm:$0xff]
        %v2938 = vld [vmem:[%s2879 + $0x1d0] sm:$0xff]
        %v2939 = vld [vmem:[%s2879 + $0x1d8] sm:$0xff]
        %v2940 = vld [vmem:[%s2879 + $0x1e0] sm:$0xff]
        %v2941 = vld [vmem:[%s2879 + $0x1e8] sm:$0xff]
        %v2942 = vld [vmem:[%s2879 + $0x1f0] sm:$0xff]
        %v2943 = vld [vmem:[%s2879 + $0x1f8] sm:$0xff]
        %v3008 = vunpack.c.l.b16 %v2880
        %v3009 = vunpack.c.h.b16 %v2880
        %v3010 = vunpack.c.l.b16 %v2881
        %v3011 = vunpack.c.h.b16 %v2881
        %v3012 = vunpack.c.l.b16 %v2882
        %v3013 = vunpack.c.h.b16 %v2882
        %v3014 = vunpack.c.l.b16 %v2883
        %v3015 = vunpack.c.h.b16 %v2883
        %v3016 = vunpack.c.l.b16 %v2884
        %v3017 = vunpack.c.h.b16 %v2884
        %v3018 = vunpack.c.l.b16 %v2885
        %v3019 = vunpack.c.h.b16 %v2885
        %v3020 = vunpack.c.l.b16 %v2886
        %v3021 = vunpack.c.h.b16 %v2886
        %v3022 = vunpack.c.l.b16 %v2887
        %v3023 = vunpack.c.h.b16 %v2887
        %v3024 = vunpack.c.l.b16 %v2888
        %v3025 = vunpack.c.h.b16 %v2888
        %v3026 = vunpack.c.l.b16 %v2889
        %v3027 = vunpack.c.h.b16 %v2889
        %v3028 = vunpack.c.l.b16 %v2890
        %v3029 = vunpack.c.h.b16 %v2890
        %v3030 = vunpack.c.l.b16 %v2891
        %v3031 = vunpack.c.h.b16 %v2891
        %v3032 = vunpack.c.l.b16 %v2892
        %v3033 = vunpack.c.h.b16 %v2892
        %v3034 = vunpack.c.l.b16 %v2893
        %v3035 = vunpack.c.h.b16 %v2893
        %v3036 = vunpack.c.l.b16 %v2894
        %v3037 = vunpack.c.h.b16 %v2894
        %v3038 = vunpack.c.l.b16 %v2895
        %v3039 = vunpack.c.h.b16 %v2895
        %v3040 = vunpack.c.l.b16 %v2896
        %v3041 = vunpack.c.h.b16 %v2896
        %v3042 = vunpack.c.l.b16 %v2897
        %v3043 = vunpack.c.h.b16 %v2897
        %v3044 = vunpack.c.l.b16 %v2898
        %v3045 = vunpack.c.h.b16 %v2898
        %v3046 = vunpack.c.l.b16 %v2899
        %v3047 = vunpack.c.h.b16 %v2899
        %v3048 = vunpack.c.l.b16 %v2900
        %v3049 = vunpack.c.h.b16 %v2900
        %v3050 = vunpack.c.l.b16 %v2901
        %v3051 = vunpack.c.h.b16 %v2901
        %v3052 = vunpack.c.l.b16 %v2902
        %v3053 = vunpack.c.h.b16 %v2902
        %v3054 = vunpack.c.l.b16 %v2903
        %v3055 = vunpack.c.h.b16 %v2903
        %v3056 = vunpack.c.l.b16 %v2904
        %v3057 = vunpack.c.h.b16 %v2904
        %v3058 = vunpack.c.l.b16 %v2905
        %v3059 = vunpack.c.h.b16 %v2905
        %v3060 = vunpack.c.l.b16 %v2906
        %v3061 = vunpack.c.h.b16 %v2906
        %v3062 = vunpack.c.l.b16 %v2907
        %v3063 = vunpack.c.h.b16 %v2907
        %v3064 = vunpack.c.l.b16 %v2908
        %v3065 = vunpack.c.h.b16 %v2908
        %v3066 = vunpack.c.l.b16 %v2909
        %v3067 = vunpack.c.h.b16 %v2909
        %v3068 = vunpack.c.l.b16 %v2910
        %v3069 = vunpack.c.h.b16 %v2910
        %v3070 = vunpack.c.l.b16 %v2911
        %v3071 = vunpack.c.h.b16 %v2911
        %v3072 = vunpack.c.l.b16 %v2912
        %v3073 = vunpack.c.h.b16 %v2912
        %v3074 = vunpack.c.l.b16 %v2913
        %v3075 = vunpack.c.h.b16 %v2913
        %v3076 = vunpack.c.l.b16 %v2914
        %v3077 = vunpack.c.h.b16 %v2914
        %v3078 = vunpack.c.l.b16 %v2915
        %v3079 = vunpack.c.h.b16 %v2915
        %v3080 = vunpack.c.l.b16 %v2916
        %v3081 = vunpack.c.h.b16 %v2916
        %v3082 = vunpack.c.l.b16 %v2917
        %v3083 = vunpack.c.h.b16 %v2917
        %v3084 = vunpack.c.l.b16 %v2918
        %v3085 = vunpack.c.h.b16 %v2918
        %v3086 = vunpack.c.l.b16 %v2919
        %v3087 = vunpack.c.h.b16 %v2919
        %v3088 = vunpack.c.l.b16 %v2920
        %v3089 = vunpack.c.h.b16 %v2920
        %v3090 = vunpack.c.l.b16 %v2921
        %v3091 = vunpack.c.h.b16 %v2921
        %v3092 = vunpack.c.l.b16 %v2922
        %v3093 = vunpack.c.h.b16 %v2922
        %v3094 = vunpack.c.l.b16 %v2923
        %v3095 = vunpack.c.h.b16 %v2923
        %v3096 = vunpack.c.l.b16 %v2924
        %v3097 = vunpack.c.h.b16 %v2924
        %v3098 = vunpack.c.l.b16 %v2925
        %v3099 = vunpack.c.h.b16 %v2925
        %v3100 = vunpack.c.l.b16 %v2926
        %v3101 = vunpack.c.h.b16 %v2926
        %v3102 = vunpack.c.l.b16 %v2927
        %v3103 = vunpack.c.h.b16 %v2927
        %v3104 = vunpack.c.l.b16 %v2928
        %v3105 = vunpack.c.h.b16 %v2928
        %v3106 = vunpack.c.l.b16 %v2929
        %v3107 = vunpack.c.h.b16 %v2929
        %v3108 = vunpack.c.l.b16 %v2930
        %v3109 = vunpack.c.h.b16 %v2930
        %v3110 = vunpack.c.l.b16 %v2931
        %v3111 = vunpack.c.h.b16 %v2931
        %v3112 = vunpack.c.l.b16 %v2932
        %v3113 = vunpack.c.h.b16 %v2932
        %v3114 = vunpack.c.l.b16 %v2933
        %v3115 = vunpack.c.h.b16 %v2933
        %v3116 = vunpack.c.l.b16 %v2934
        %v3117 = vunpack.c.h.b16 %v2934
        %v3118 = vunpack.c.l.b16 %v2935
        %v3119 = vunpack.c.h.b16 %v2935
        %v3120 = vunpack.c.l.b16 %v2936
        %v3121 = vunpack.c.h.b16 %v2936
        %v3122 = vunpack.c.l.b16 %v2937
        %v3123 = vunpack.c.h.b16 %v2937
        %v3124 = vunpack.c.l.b16 %v2938
        %v3125 = vunpack.c.h.b16 %v2938
        %v3126 = vunpack.c.l.b16 %v2939
        %v3127 = vunpack.c.h.b16 %v2939
        %v3128 = vunpack.c.l.b16 %v2940
        %v3129 = vunpack.c.h.b16 %v2940
        %v3130 = vunpack.c.l.b16 %v2941
        %v3131 = vunpack.c.h.b16 %v2941
        %v3132 = vunpack.c.l.b16 %v2942
        %v3133 = vunpack.c.h.b16 %v2942
        %v3134 = vunpack.c.l.b16 %v2943
        %v3135 = vunpack.c.h.b16 %v2943
        %v3136 = vpack.c.b16 %v3012, %v3008
        %v3137 = vpack.c.b16 %v3013, %v3009
        %v3138 = vpack.c.b16 %v3014, %v3010
        %v3139 = vpack.c.b16 %v3015, %v3011
        %v3140 = vpack.c.b16 %v3020, %v3016
        %v3141 = vpack.c.b16 %v3021, %v3017
        %v3142 = vpack.c.b16 %v3022, %v3018
        %v3143 = vpack.c.b16 %v3023, %v3019
        %v3144 = vpack.c.b16 %v3028, %v3024
        %v3145 = vpack.c.b16 %v3029, %v3025
        %v3146 = vpack.c.b16 %v3030, %v3026
        %v3147 = vpack.c.b16 %v3031, %v3027
        %v3148 = vpack.c.b16 %v3036, %v3032
        %v3149 = vpack.c.b16 %v3037, %v3033
        %v3150 = vpack.c.b16 %v3038, %v3034
        %v3151 = vpack.c.b16 %v3039, %v3035
        %v3152 = vpack.c.b16 %v3044, %v3040
        %v3153 = vpack.c.b16 %v3045, %v3041
        %v3154 = vpack.c.b16 %v3046, %v3042
        %v3155 = vpack.c.b16 %v3047, %v3043
        %v3156 = vpack.c.b16 %v3052, %v3048
        %v3157 = vpack.c.b16 %v3053, %v3049
        %v3158 = vpack.c.b16 %v3054, %v3050
        %v3159 = vpack.c.b16 %v3055, %v3051
        %v3160 = vpack.c.b16 %v3060, %v3056
        %v3161 = vpack.c.b16 %v3061, %v3057
        %v3162 = vpack.c.b16 %v3062, %v3058
        %v3163 = vpack.c.b16 %v3063, %v3059
        %v3164 = vpack.c.b16 %v3068, %v3064
        %v3165 = vpack.c.b16 %v3069, %v3065
        %v3166 = vpack.c.b16 %v3070, %v3066
        %v3167 = vpack.c.b16 %v3071, %v3067
        %v3168 = vpack.c.b16 %v3076, %v3072
        %v3169 = vpack.c.b16 %v3077, %v3073
        %v3170 = vpack.c.b16 %v3078, %v3074
        %v3171 = vpack.c.b16 %v3079, %v3075
        %v3172 = vpack.c.b16 %v3084, %v3080
        %v3173 = vpack.c.b16 %v3085, %v3081
        %v3174 = vpack.c.b16 %v3086, %v3082
        %v3175 = vpack.c.b16 %v3087, %v3083
        %v3176 = vpack.c.b16 %v3092, %v3088
        %v3177 = vpack.c.b16 %v3093, %v3089
        %v3178 = vpack.c.b16 %v3094, %v3090
        %v3179 = vpack.c.b16 %v3095, %v3091
        %v3180 = vpack.c.b16 %v3100, %v3096
        %v3181 = vpack.c.b16 %v3101, %v3097
        %v3182 = vpack.c.b16 %v3102, %v3098
        %v3183 = vpack.c.b16 %v3103, %v3099
        %v3184 = vpack.c.b16 %v3108, %v3104
        %v3185 = vpack.c.b16 %v3109, %v3105
        %v3186 = vpack.c.b16 %v3110, %v3106
        %v3187 = vpack.c.b16 %v3111, %v3107
        %v3188 = vpack.c.b16 %v3116, %v3112
        %v3189 = vpack.c.b16 %v3117, %v3113
        %v3190 = vpack.c.b16 %v3118, %v3114
        %v3191 = vpack.c.b16 %v3119, %v3115
        %v3192 = vpack.c.b16 %v3124, %v3120
        %v3193 = vpack.c.b16 %v3125, %v3121
        %v3194 = vpack.c.b16 %v3126, %v3122
        %v3195 = vpack.c.b16 %v3127, %v3123
        %v3196 = vpack.c.b16 %v3132, %v3128
        %v3197 = vpack.c.b16 %v3133, %v3129
        %v3198 = vpack.c.b16 %v3134, %v3130
        %v3199 = vpack.c.b16 %v3135, %v3131
        %3264 = vmatprep.subr.bf16.mxu0 0
        %3265 = vmatpush1.bf16.msra.mxu0 %v787
        %3266 = vmatprep.subr.bf16.mxu0 0
        %3267 = vmatpush1.bf16.msra.mxu0 %v788
        %3268 = vmatprep.subr.bf16.mxu0 0
        %3269 = vmatpush1.bf16.msra.mxu0 %v789
        %3270 = vmatprep.subr.bf16.mxu0 0
        %3271 = vmatpush1.bf16.msra.mxu0 %v790
        %3272 = vmatprep.subr.bf16.mxu0 0
        %3273 = vmatpush1.bf16.msra.mxu0 %v791
        %3274 = vmatprep.subr.bf16.mxu0 0
        %3275 = vmatpush1.bf16.msra.mxu0 %v792
        %3276 = vmatprep.subr.bf16.mxu0 0
        %3277 = vmatpush1.bf16.msra.mxu0 %v793
        %3278 = vmatprep.subr.bf16.mxu0 0
        %3279 = vmatpush1.bf16.msra.mxu0 %v794
        %3280 = vmatprep.subr.bf16.mxu0 0
        %3281 = vmatpush1.bf16.msra.mxu0 %v795
        %3282 = vmatprep.subr.bf16.mxu0 0
        %3283 = vmatpush1.bf16.msra.mxu0 %v796
        %3284 = vmatprep.subr.bf16.mxu0 0
        %3285 = vmatpush1.bf16.msra.mxu0 %v797
        %3286 = vmatprep.subr.bf16.mxu0 0
        %3287 = vmatpush1.bf16.msra.mxu0 %v798
        %3288 = vmatprep.subr.bf16.mxu0 0
        %3289 = vmatpush1.bf16.msra.mxu0 %v799
        %3290 = vmatprep.subr.bf16.mxu0 0
        %3291 = vmatpush1.bf16.msra.mxu0 %v800
        %3292 = vmatprep.subr.bf16.mxu0 0
        %3293 = vmatpush1.bf16.msra.mxu0 %v801
        %3294 = vmatprep.subr.bf16.mxu0 0
        %3295 = vmatpush1.bf16.msra.mxu0 %v802
        %3296 = vmatprep.mubr.bf16.mxu0 %v3137
        %3297 = vmatmul.mubr.bf16.gmra.mrb[0].mxu0 %v3136
        %v3298 = vpop.f32.mrb[0].mxu0
        %v3299 = vadd.f32 0.0, %v3298
        %v3300 = vpop.f32.mrb[0].mxu0
        %v3301 = vpop.f32.mrb[0].mxu0
        %v3302 = vadd.f32 0.0, %v3301
        %v3303 = vpop.f32.mrb[0].mxu0
        %3304 = vmatprep.mubr.bf16.mxu0 %v3141
        %3305 = vmatmul.mubr.bf16.gmra.mrb[0].mxu0 %v3140
        %v3306 = vpop.f32.mrb[0].mxu0
        %v3307 = vadd.f32 0.0, %v3306
        %v3308 = vpop.f32.mrb[0].mxu0
        %v3309 = vpop.f32.mrb[0].mxu0
        %v3310 = vadd.f32 0.0, %v3309
        %v3311 = vpop.f32.mrb[0].mxu0
        %3312 = vmatprep.mubr.bf16.mxu0 %v3145
        %3313 = vmatmul.mubr.bf16.gmra.mrb[0].mxu0 %v3144
        %v3314 = vpop.f32.mrb[0].mxu0
        %v3315 = vadd.f32 0.0, %v3314
        %v3316 = vpop.f32.mrb[0].mxu0
        %v3317 = vpop.f32.mrb[0].mxu0
        %v3318 = vadd.f32 0.0, %v3317
        %v3319 = vpop.f32.mrb[0].mxu0
        %3320 = vmatprep.mubr.bf16.mxu0 %v3149
        %3321 = vmatmul.mubr.bf16.gmra.mrb[0].mxu0 %v3148
        %v3322 = vpop.f32.mrb[0].mxu0
        %v3323 = vadd.f32 0.0, %v3322
        %v3324 = vpop.f32.mrb[0].mxu0
        %v3325 = vpop.f32.mrb[0].mxu0
        %v3326 = vadd.f32 0.0, %v3325
        %v3327 = vpop.f32.mrb[0].mxu0
        %3328 = vmatprep.mubr.bf16.mxu0 %v3153
        %3329 = vmatmul.mubr.bf16.gmra.mrb[0].mxu0 %v3152
        %v3330 = vpop.f32.mrb[0].mxu0
        %v3331 = vadd.f32 0.0, %v3330
        %v3332 = vpop.f32.mrb[0].mxu0
        %v3333 = vpop.f32.mrb[0].mxu0
        %v3334 = vadd.f32 0.0, %v3333
        %v3335 = vpop.f32.mrb[0].mxu0
        %3336 = vmatprep.mubr.bf16.mxu0 %v3157
        %3337 = vmatmul.mubr.bf16.gmra.mrb[0].mxu0 %v3156
        %v3338 = vpop.f32.mrb[0].mxu0
        %v3339 = vadd.f32 0.0, %v3338
        %v3340 = vpop.f32.mrb[0].mxu0
        %v3341 = vpop.f32.mrb[0].mxu0
        %v3342 = vadd.f32 0.0, %v3341
        %v3343 = vpop.f32.mrb[0].mxu0
        %3344 = vmatprep.mubr.bf16.mxu0 %v3161
        %3345 = vmatmul.mubr.bf16.gmra.mrb[0].mxu0 %v3160
        %v3346 = vpop.f32.mrb[0].mxu0
        %v3347 = vadd.f32 0.0, %v3346
        %v3348 = vpop.f32.mrb[0].mxu0
        %v3349 = vpop.f32.mrb[0].mxu0
        %v3350 = vadd.f32 0.0, %v3349
        %v3351 = vpop.f32.mrb[0].mxu0
        %3352 = vmatprep.mubr.bf16.mxu0 %v3165
        %3353 = vmatmul.mubr.bf16.gmra.mrb[0].mxu0 %v3164
        %v3354 = vpop.f32.mrb[0].mxu0
        %v3355 = vadd.f32 0.0, %v3354
        %v3356 = vpop.f32.mrb[0].mxu0
        %v3357 = vpop.f32.mrb[0].mxu0
        %v3358 = vadd.f32 0.0, %v3357
        %v3359 = vpop.f32.mrb[0].mxu0
        %3360 = vmatprep.mubr.bf16.mxu0 %v3169
        %3361 = vmatmul.mubr.bf16.gmra.mrb[0].mxu0 %v3168
        %v3362 = vpop.f32.mrb[0].mxu0
        %v3363 = vadd.f32 0.0, %v3362
        %v3364 = vpop.f32.mrb[0].mxu0
        %v3365 = vpop.f32.mrb[0].mxu0
        %v3366 = vadd.f32 0.0, %v3365
        %v3367 = vpop.f32.mrb[0].mxu0
        %3368 = vmatprep.mubr.bf16.mxu0 %v3173
        %3369 = vmatmul.mubr.bf16.gmra.mrb[0].mxu0 %v3172
        %v3370 = vpop.f32.mrb[0].mxu0
        %v3371 = vadd.f32 0.0, %v3370
        %v3372 = vpop.f32.mrb[0].mxu0
        %v3373 = vpop.f32.mrb[0].mxu0
        %v3374 = vadd.f32 0.0, %v3373
        %v3375 = vpop.f32.mrb[0].mxu0
        %3376 = vmatprep.mubr.bf16.mxu0 %v3177
        %3377 = vmatmul.mubr.bf16.gmra.mrb[0].mxu0 %v3176
        %v3378 = vpop.f32.mrb[0].mxu0
        %v3379 = vadd.f32 0.0, %v3378
        %v3380 = vpop.f32.mrb[0].mxu0
        %v3381 = vpop.f32.mrb[0].mxu0
        %v3382 = vadd.f32 0.0, %v3381
        %v3383 = vpop.f32.mrb[0].mxu0
        %3384 = vmatprep.mubr.bf16.mxu0 %v3181
        %3385 = vmatmul.mubr.bf16.gmra.mrb[0].mxu0 %v3180
        %v3386 = vpop.f32.mrb[0].mxu0
        %v3387 = vadd.f32 0.0, %v3386
        %v3388 = vpop.f32.mrb[0].mxu0
        %v3389 = vpop.f32.mrb[0].mxu0
        %v3390 = vadd.f32 0.0, %v3389
        %v3391 = vpop.f32.mrb[0].mxu0
        %3392 = vmatprep.mubr.bf16.mxu0 %v3185
        %3393 = vmatmul.mubr.bf16.gmra.mrb[0].mxu0 %v3184
        %v3394 = vpop.f32.mrb[0].mxu0
        %v3395 = vadd.f32 0.0, %v3394
        %v3396 = vpop.f32.mrb[0].mxu0
        %v3397 = vpop.f32.mrb[0].mxu0
        %v3398 = vadd.f32 0.0, %v3397
        %v3399 = vpop.f32.mrb[0].mxu0
        %3400 = vmatprep.mubr.bf16.mxu0 %v3189
        %3401 = vmatmul.mubr.bf16.gmra.mrb[0].mxu0 %v3188
        %v3402 = vpop.f32.mrb[0].mxu0
        %v3403 = vadd.f32 0.0, %v3402
        %v3404 = vpop.f32.mrb[0].mxu0
        %v3405 = vpop.f32.mrb[0].mxu0
        %v3406 = vadd.f32 0.0, %v3405
        %v3407 = vpop.f32.mrb[0].mxu0
        %3408 = vmatprep.mubr.bf16.mxu0 %v3193
        %3409 = vmatmul.mubr.bf16.gmra.mrb[0].mxu0 %v3192
        %v3410 = vpop.f32.mrb[0].mxu0
        %v3411 = vadd.f32 0.0, %v3410
        %v3412 = vpop.f32.mrb[0].mxu0
        %v3413 = vpop.f32.mrb[0].mxu0
        %v3414 = vadd.f32 0.0, %v3413
        %v3415 = vpop.f32.mrb[0].mxu0
        %3416 = vmatprep.mubr.bf16.mxu0 %v3197
        %3417 = vmatmul.mubr.bf16.gmra.mrb[0].mxu0 %v3196
        %v3418 = vpop.f32.mrb[0].mxu0
        %v3419 = vadd.f32 0.0, %v3418
        %v3420 = vpop.f32.mrb[0].mxu0
        %v3421 = vpop.f32.mrb[0].mxu0
        %v3422 = vadd.f32 0.0, %v3421
        %v3423 = vpop.f32.mrb[0].mxu0
        %3424 = vdwg.mxu0
        %3425 = vmatprep.subr.bf16.mxu0 0
        %3426 = vmatpush1.bf16.msra.mxu0 %v803
        %3427 = vmatprep.subr.bf16.mxu0 0
        %3428 = vmatpush1.bf16.msra.mxu0 %v804
        %3429 = vmatprep.subr.bf16.mxu0 0
        %3430 = vmatpush1.bf16.msra.mxu0 %v805
        %3431 = vmatprep.subr.bf16.mxu0 0
        %3432 = vmatpush1.bf16.msra.mxu0 %v806
        %3433 = vmatprep.subr.bf16.mxu0 0
        %3434 = vmatpush1.bf16.msra.mxu0 %v807
        %3435 = vmatprep.subr.bf16.mxu0 0
        %3436 = vmatpush1.bf16.msra.mxu0 %v808
        %3437 = vmatprep.subr.bf16.mxu0 0
        %3438 = vmatpush1.bf16.msra.mxu0 %v809
        %3439 = vmatprep.subr.bf16.mxu0 0
        %3440 = vmatpush1.bf16.msra.mxu0 %v810
        %3441 = vmatprep.subr.bf16.mxu0 0
        %3442 = vmatpush1.bf16.msra.mxu0 %v811
        %3443 = vmatprep.subr.bf16.mxu0 0
        %3444 = vmatpush1.bf16.msra.mxu0 %v812
        %3445 = vmatprep.subr.bf16.mxu0 0
        %3446 = vmatpush1.bf16.msra.mxu0 %v813
        %3447 = vmatprep.subr.bf16.mxu0 0
        %3448 = vmatpush1.bf16.msra.mxu0 %v814
        %3449 = vmatprep.subr.bf16.mxu0 0
        %3450 = vmatpush1.bf16.msra.mxu0 %v815
        %3451 = vmatprep.subr.bf16.mxu0 0
        %3452 = vmatpush1.bf16.msra.mxu0 %v816
        %3453 = vmatprep.subr.bf16.mxu0 0
        %3454 = vmatpush1.bf16.msra.mxu0 %v817
        %3455 = vmatprep.subr.bf16.mxu0 0
        %3456 = vmatpush1.bf16.msra.mxu0 %v818
        %3457 = vmatprep.mubr.bf16.mxu0 %v3139
        %3458 = vmatmul.mubr.bf16.gmra.mrb[0].mxu0 %v3138
        %v3459 = vpop.f32.mrb[0].mxu0
        %v3460 = vadd.f32 %v3299, %v3459
        %v3461 = vpop.f32.mrb[0].mxu0
        %v3462 = vpop.f32.mrb[0].mxu0
        %v3463 = vadd.f32 %v3302, %v3462
        %v3464 = vpop.f32.mrb[0].mxu0
        %3465 = vmatprep.mubr.bf16.mxu0 %v3143
        %3466 = vmatmul.mubr.bf16.gmra.mrb[0].mxu0 %v3142
        %v3467 = vpop.f32.mrb[0].mxu0
        %v3468 = vadd.f32 %v3307, %v3467
        %v3469 = vpop.f32.mrb[0].mxu0
        %v3470 = vpop.f32.mrb[0].mxu0
        %v3471 = vadd.f32 %v3310, %v3470
        %v3472 = vpop.f32.mrb[0].mxu0
        %3473 = vmatprep.mubr.bf16.mxu0 %v3147
        %3474 = vmatmul.mubr.bf16.gmra.mrb[0].mxu0 %v3146
        %v3475 = vpop.f32.mrb[0].mxu0
        %v3476 = vadd.f32 %v3315, %v3475
        %v3477 = vpop.f32.mrb[0].mxu0
        %v3478 = vpop.f32.mrb[0].mxu0
        %v3479 = vadd.f32 %v3318, %v3478
        %v3480 = vpop.f32.mrb[0].mxu0
        %3481 = vmatprep.mubr.bf16.mxu0 %v3151
        %3482 = vmatmul.mubr.bf16.gmra.mrb[0].mxu0 %v3150
        %v3483 = vpop.f32.mrb[0].mxu0
        %v3484 = vadd.f32 %v3323, %v3483
        %v3485 = vpop.f32.mrb[0].mxu0
        %v3486 = vpop.f32.mrb[0].mxu0
        %v3487 = vadd.f32 %v3326, %v3486
        %v3488 = vpop.f32.mrb[0].mxu0
        %3489 = vmatprep.mubr.bf16.mxu0 %v3155
        %3490 = vmatmul.mubr.bf16.gmra.mrb[0].mxu0 %v3154
        %v3491 = vpop.f32.mrb[0].mxu0
        %v3492 = vadd.f32 %v3331, %v3491
        %v3493 = vpop.f32.mrb[0].mxu0
        %v3494 = vpop.f32.mrb[0].mxu0
        %v3495 = vadd.f32 %v3334, %v3494
        %v3496 = vpop.f32.mrb[0].mxu0
        %3497 = vmatprep.mubr.bf16.mxu0 %v3159
        %3498 = vmatmul.mubr.bf16.gmra.mrb[0].mxu0 %v3158
        %v3499 = vpop.f32.mrb[0].mxu0
        %v3500 = vadd.f32 %v3339, %v3499
        %v3501 = vpop.f32.mrb[0].mxu0
        %v3502 = vpop.f32.mrb[0].mxu0
        %v3503 = vadd.f32 %v3342, %v3502
        %v3504 = vpop.f32.mrb[0].mxu0
        %3505 = vmatprep.mubr.bf16.mxu0 %v3163
        %3506 = vmatmul.mubr.bf16.gmra.mrb[0].mxu0 %v3162
        %v3507 = vpop.f32.mrb[0].mxu0
        %v3508 = vadd.f32 %v3347, %v3507
        %v3509 = vpop.f32.mrb[0].mxu0
        %v3510 = vpop.f32.mrb[0].mxu0
        %v3511 = vadd.f32 %v3350, %v3510
        %v3512 = vpop.f32.mrb[0].mxu0
        %3513 = vmatprep.mubr.bf16.mxu0 %v3167
        %3514 = vmatmul.mubr.bf16.gmra.mrb[0].mxu0 %v3166
        %v3515 = vpop.f32.mrb[0].mxu0
        %v3516 = vadd.f32 %v3355, %v3515
        %v3517 = vpop.f32.mrb[0].mxu0
        %v3518 = vpop.f32.mrb[0].mxu0
        %v3519 = vadd.f32 %v3358, %v3518
        %v3520 = vpop.f32.mrb[0].mxu0
        %3521 = vmatprep.mubr.bf16.mxu0 %v3171
        %3522 = vmatmul.mubr.bf16.gmra.mrb[0].mxu0 %v3170
        %v3523 = vpop.f32.mrb[0].mxu0
        %v3524 = vadd.f32 %v3363, %v3523
        %v3525 = vpop.f32.mrb[0].mxu0
        %v3526 = vpop.f32.mrb[0].mxu0
        %v3527 = vadd.f32 %v3366, %v3526
        %v3528 = vpop.f32.mrb[0].mxu0
        %3529 = vmatprep.mubr.bf16.mxu0 %v3175
        %3530 = vmatmul.mubr.bf16.gmra.mrb[0].mxu0 %v3174
        %v3531 = vpop.f32.mrb[0].mxu0
        %v3532 = vadd.f32 %v3371, %v3531
        %v3533 = vpop.f32.mrb[0].mxu0
        %v3534 = vpop.f32.mrb[0].mxu0
        %v3535 = vadd.f32 %v3374, %v3534
        %v3536 = vpop.f32.mrb[0].mxu0
        %3537 = vmatprep.mubr.bf16.mxu0 %v3179
        %3538 = vmatmul.mubr.bf16.gmra.mrb[0].mxu0 %v3178
        %v3539 = vpop.f32.mrb[0].mxu0
        %v3540 = vadd.f32 %v3379, %v3539
        %v3541 = vpop.f32.mrb[0].mxu0
        %v3542 = vpop.f32.mrb[0].mxu0
        %v3543 = vadd.f32 %v3382, %v3542
        %v3544 = vpop.f32.mrb[0].mxu0
        %3545 = vmatprep.mubr.bf16.mxu0 %v3183
        %3546 = vmatmul.mubr.bf16.gmra.mrb[0].mxu0 %v3182
        %v3547 = vpop.f32.mrb[0].mxu0
        %v3548 = vadd.f32 %v3387, %v3547
        %v3549 = vpop.f32.mrb[0].mxu0
        %v3550 = vpop.f32.mrb[0].mxu0
        %v3551 = vadd.f32 %v3390, %v3550
        %v3552 = vpop.f32.mrb[0].mxu0
        %3553 = vmatprep.mubr.bf16.mxu0 %v3187
        %3554 = vmatmul.mubr.bf16.gmra.mrb[0].mxu0 %v3186
        %v3555 = vpop.f32.mrb[0].mxu0
        %v3556 = vadd.f32 %v3395, %v3555
        %v3557 = vpop.f32.mrb[0].mxu0
        %v3558 = vpop.f32.mrb[0].mxu0
        %v3559 = vadd.f32 %v3398, %v3558
        %v3560 = vpop.f32.mrb[0].mxu0
        %3561 = vmatprep.mubr.bf16.mxu0 %v3191
        %3562 = vmatmul.mubr.bf16.gmra.mrb[0].mxu0 %v3190
        %v3563 = vpop.f32.mrb[0].mxu0
        %v3564 = vadd.f32 %v3403, %v3563
        %v3565 = vpop.f32.mrb[0].mxu0
        %v3566 = vpop.f32.mrb[0].mxu0
        %v3567 = vadd.f32 %v3406, %v3566
        %v3568 = vpop.f32.mrb[0].mxu0
        %3569 = vmatprep.mubr.bf16.mxu0 %v3195
        %3570 = vmatmul.mubr.bf16.gmra.mrb[0].mxu0 %v3194
        %v3571 = vpop.f32.mrb[0].mxu0
        %v3572 = vadd.f32 %v3411, %v3571
        %v3573 = vpop.f32.mrb[0].mxu0
        %v3574 = vpop.f32.mrb[0].mxu0
        %v3575 = vadd.f32 %v3414, %v3574
        %v3576 = vpop.f32.mrb[0].mxu0
        %3577 = vmatprep.mubr.bf16.mxu0 %v3199
        %3578 = vmatmul.mubr.bf16.gmra.mrb[0].mxu0 %v3198
        %v3579 = vpop.f32.mrb[0].mxu0
        %v3580 = vadd.f32 %v3419, %v3579
        %v3581 = vpop.f32.mrb[0].mxu0
        %v3582 = vpop.f32.mrb[0].mxu0
        %v3583 = vadd.f32 %v3422, %v3582
        %v3584 = vpop.f32.mrb[0].mxu0
        %3585 = vdwg.mxu0
        %3586 = vrot.lane.b32.xlu0 %v3460, 127
        %v3587 = vpop.permute.xlu0 %3586
        %3588 = vrot.lane.b32.xlu0 %v3463, 127
        %v3589 = vpop.permute.xlu0 %3588
        %3590 = vrot.lane.b32.xlu0 %v3468, 127
        %v3591 = vpop.permute.xlu0 %3590
        %3592 = vrot.lane.b32.xlu0 %v3471, 127
        %v3593 = vpop.permute.xlu0 %3592
        %3594 = vrot.lane.b32.xlu0 %v3476, 127
        %v3595 = vpop.permute.xlu0 %3594
        %3596 = vrot.lane.b32.xlu0 %v3479, 127
        %v3597 = vpop.permute.xlu0 %3596
        %3598 = vrot.lane.b32.xlu0 %v3484, 127
        %v3599 = vpop.permute.xlu0 %3598
        %3600 = vrot.lane.b32.xlu0 %v3487, 127
        %v3601 = vpop.permute.xlu0 %3600
        %3602 = vrot.lane.b32.xlu0 %v3492, 127
        %v3603 = vpop.permute.xlu0 %3602
        %3604 = vrot.lane.b32.xlu0 %v3495, 127
        %v3605 = vpop.permute.xlu0 %3604
        %3606 = vrot.lane.b32.xlu0 %v3500, 127
        %v3607 = vpop.permute.xlu0 %3606
        %3608 = vrot.lane.b32.xlu0 %v3503, 127
        %v3609 = vpop.permute.xlu0 %3608
        %3610 = vrot.lane.b32.xlu0 %v3508, 127
        %v3611 = vpop.permute.xlu0 %3610
        %3612 = vrot.lane.b32.xlu0 %v3511, 127
        %v3613 = vpop.permute.xlu0 %3612
        %3614 = vrot.lane.b32.xlu0 %v3516, 127
        %v3615 = vpop.permute.xlu0 %3614
        %3616 = vrot.lane.b32.xlu0 %v3519, 127
        %v3617 = vpop.permute.xlu0 %3616
        %3618 = vrot.lane.b32.xlu0 %v3524, 127
        %v3619 = vpop.permute.xlu0 %3618
        %3620 = vrot.lane.b32.xlu0 %v3527, 127
        %v3621 = vpop.permute.xlu0 %3620
        %3622 = vrot.lane.b32.xlu0 %v3532, 127
        %v3623 = vpop.permute.xlu0 %3622
        %3624 = vrot.lane.b32.xlu0 %v3535, 127
        %v3625 = vpop.permute.xlu0 %3624
        %3626 = vrot.lane.b32.xlu0 %v3540, 127
        %v3627 = vpop.permute.xlu0 %3626
        %3628 = vrot.lane.b32.xlu0 %v3543, 127
        %v3629 = vpop.permute.xlu0 %3628
        %3630 = vrot.lane.b32.xlu0 %v3548, 127
        %v3631 = vpop.permute.xlu0 %3630
        %3632 = vrot.lane.b32.xlu0 %v3551, 127
        %v3633 = vpop.permute.xlu0 %3632
        %3634 = vrot.lane.b32.xlu0 %v3556, 127
        %v3635 = vpop.permute.xlu0 %3634
        %3636 = vrot.lane.b32.xlu0 %v3559, 127
        %v3637 = vpop.permute.xlu0 %3636
        %3638 = vrot.lane.b32.xlu0 %v3564, 127
        %v3639 = vpop.permute.xlu0 %3638
        %3640 = vrot.lane.b32.xlu0 %v3567, 127
        %v3641 = vpop.permute.xlu0 %3640
        %3642 = vrot.lane.b32.xlu0 %v3572, 127
        %v3643 = vpop.permute.xlu0 %3642
        %3644 = vrot.lane.b32.xlu0 %v3575, 127
        %v3645 = vpop.permute.xlu0 %3644
        %3646 = vrot.lane.b32.xlu0 %v3580, 127
        %v3647 = vpop.permute.xlu0 %3646
        %3648 = vrot.lane.b32.xlu0 %v3583, 127
        %v3649 = vpop.permute.xlu0 %3648
        %v3650 = vsel %vm273, 1, 0
        %vm3651 = vcmp.eq.s32.totalorder %v3650, 1
        %v3652 = vsel %vm3651, %v3587, 0.0
        %v3653 = vsel %vm3651, %v3589, 0.0
        %v3654 = vsel %vm3651, %v3591, 0.0
        %v3655 = vsel %vm3651, %v3593, 0.0
        %v3656 = vsel %vm3651, %v3595, 0.0
        %v3657 = vsel %vm3651, %v3597, 0.0
        %v3658 = vsel %vm3651, %v3599, 0.0
        %v3659 = vsel %vm3651, %v3601, 0.0
        %v3660 = vsel %vm3651, %v3603, 0.0
        %v3661 = vsel %vm3651, %v3605, 0.0
        %v3662 = vsel %vm3651, %v3607, 0.0
        %v3663 = vsel %vm3651, %v3609, 0.0
        %v3664 = vsel %vm3651, %v3611, 0.0
        %v3665 = vsel %vm3651, %v3613, 0.0
        %v3666 = vsel %vm3651, %v3615, 0.0
        %v3667 = vsel %vm3651, %v3617, 0.0
        %v3668 = vsel %vm3651, %v3619, 0.0
        %v3669 = vsel %vm3651, %v3621, 0.0
        %v3670 = vsel %vm3651, %v3623, 0.0
        %v3671 = vsel %vm3651, %v3625, 0.0
        %v3672 = vsel %vm3651, %v3627, 0.0
        %v3673 = vsel %vm3651, %v3629, 0.0
        %v3674 = vsel %vm3651, %v3631, 0.0
        %v3675 = vsel %vm3651, %v3633, 0.0
        %v3676 = vsel %vm3651, %v3635, 0.0
        %v3677 = vsel %vm3651, %v3637, 0.0
        %v3678 = vsel %vm3651, %v3639, 0.0
        %v3679 = vsel %vm3651, %v3641, 0.0
        %v3680 = vsel %vm3651, %v3643, 0.0
        %v3681 = vsel %vm3651, %v3645, 0.0
        %v3682 = vsel %vm3651, %v3647, 0.0
        %v3683 = vsel %vm3651, %v3649, 0.0
        %v3684 = vadd.f32 %v2847, %v3652
        %v3685 = vadd.f32 %v2848, %v3653
        %v3686 = vadd.f32 %v2849, %v3654
        %v3687 = vadd.f32 %v2850, %v3655
        %v3688 = vadd.f32 %v2851, %v3656
        %v3689 = vadd.f32 %v2852, %v3657
        %v3690 = vadd.f32 %v2853, %v3658
        %v3691 = vadd.f32 %v2854, %v3659
        %v3692 = vadd.f32 %v2855, %v3660
        %v3693 = vadd.f32 %v2856, %v3661
        %v3694 = vadd.f32 %v2857, %v3662
        %v3695 = vadd.f32 %v2858, %v3663
        %v3696 = vadd.f32 %v2859, %v3664
        %v3697 = vadd.f32 %v2860, %v3665
        %v3698 = vadd.f32 %v2861, %v3666
        %v3699 = vadd.f32 %v2862, %v3667
        %v3700 = vadd.f32 %v2863, %v3668
        %v3701 = vadd.f32 %v2864, %v3669
        %v3702 = vadd.f32 %v2865, %v3670
        %v3703 = vadd.f32 %v2866, %v3671
        %v3704 = vadd.f32 %v2867, %v3672
        %v3705 = vadd.f32 %v2868, %v3673
        %v3706 = vadd.f32 %v2869, %v3674
        %v3707 = vadd.f32 %v2870, %v3675
        %v3708 = vadd.f32 %v2871, %v3676
        %v3709 = vadd.f32 %v2872, %v3677
        %v3710 = vadd.f32 %v2873, %v3678
        %v3711 = vadd.f32 %v2874, %v3679
        %v3712 = vadd.f32 %v2875, %v3680
        %v3713 = vadd.f32 %v2876, %v3681
        %v3714 = vadd.f32 %v2877, %v3682
        %v3715 = vadd.f32 %v2878, %v3683
        %s3716 = scalar_lea.vmem [#allocation5], 2048
        %v3717 = vld [vmem:[%s3716] sm:$0xff]
        %v3718 = vld [vmem:[%s3716 + $0x8] sm:$0xff]
        %v3719 = vld [vmem:[%s3716 + $0x10] sm:$0xff]
        %v3720 = vld [vmem:[%s3716 + $0x18] sm:$0xff]
        %v3721 = vld [vmem:[%s3716 + $0x20] sm:$0xff]
        %v3722 = vld [vmem:[%s3716 + $0x28] sm:$0xff]
        %v3723 = vld [vmem:[%s3716 + $0x30] sm:$0xff]
        %v3724 = vld [vmem:[%s3716 + $0x38] sm:$0xff]
        %v3725 = vld [vmem:[%s3716 + $0x40] sm:$0xff]
        %v3726 = vld [vmem:[%s3716 + $0x48] sm:$0xff]
        %v3727 = vld [vmem:[%s3716 + $0x50] sm:$0xff]
        %v3728 = vld [vmem:[%s3716 + $0x58] sm:$0xff]
        %v3729 = vld [vmem:[%s3716 + $0x60] sm:$0xff]
        %v3730 = vld [vmem:[%s3716 + $0x68] sm:$0xff]
        %v3731 = vld [vmem:[%s3716 + $0x70] sm:$0xff]
        %v3732 = vld [vmem:[%s3716 + $0x78] sm:$0xff]
        %v3733 = vld [vmem:[%s3716 + $0x80] sm:$0xff]
        %v3734 = vld [vmem:[%s3716 + $0x88] sm:$0xff]
        %v3735 = vld [vmem:[%s3716 + $0x90] sm:$0xff]
        %v3736 = vld [vmem:[%s3716 + $0x98] sm:$0xff]
        %v3737 = vld [vmem:[%s3716 + $0xa0] sm:$0xff]
        %v3738 = vld [vmem:[%s3716 + $0xa8] sm:$0xff]
        %v3739 = vld [vmem:[%s3716 + $0xb0] sm:$0xff]
        %v3740 = vld [vmem:[%s3716 + $0xb8] sm:$0xff]
        %v3741 = vld [vmem:[%s3716 + $0xc0] sm:$0xff]
        %v3742 = vld [vmem:[%s3716 + $0xc8] sm:$0xff]
        %v3743 = vld [vmem:[%s3716 + $0xd0] sm:$0xff]
        %v3744 = vld [vmem:[%s3716 + $0xd8] sm:$0xff]
        %v3745 = vld [vmem:[%s3716 + $0xe0] sm:$0xff]
        %v3746 = vld [vmem:[%s3716 + $0xe8] sm:$0xff]
        %v3747 = vld [vmem:[%s3716 + $0xf0] sm:$0xff]
        %v3748 = vld [vmem:[%s3716 + $0xf8] sm:$0xff]
        %v3749 = vld [vmem:[%s3716 + $0x100] sm:$0xff]
        %v3750 = vld [vmem:[%s3716 + $0x108] sm:$0xff]
        %v3751 = vld [vmem:[%s3716 + $0x110] sm:$0xff]
        %v3752 = vld [vmem:[%s3716 + $0x118] sm:$0xff]
        %v3753 = vld [vmem:[%s3716 + $0x120] sm:$0xff]
        %v3754 = vld [vmem:[%s3716 + $0x128] sm:$0xff]
        %v3755 = vld [vmem:[%s3716 + $0x130] sm:$0xff]
        %v3756 = vld [vmem:[%s3716 + $0x138] sm:$0xff]
        %v3757 = vld [vmem:[%s3716 + $0x140] sm:$0xff]
        %v3758 = vld [vmem:[%s3716 + $0x148] sm:$0xff]
        %v3759 = vld [vmem:[%s3716 + $0x150] sm:$0xff]
        %v3760 = vld [vmem:[%s3716 + $0x158] sm:$0xff]
        %v3761 = vld [vmem:[%s3716 + $0x160] sm:$0xff]
        %v3762 = vld [vmem:[%s3716 + $0x168] sm:$0xff]
        %v3763 = vld [vmem:[%s3716 + $0x170] sm:$0xff]
        %v3764 = vld [vmem:[%s3716 + $0x178] sm:$0xff]
        %v3765 = vld [vmem:[%s3716 + $0x180] sm:$0xff]
        %v3766 = vld [vmem:[%s3716 + $0x188] sm:$0xff]
        %v3767 = vld [vmem:[%s3716 + $0x190] sm:$0xff]
        %v3768 = vld [vmem:[%s3716 + $0x198] sm:$0xff]
        %v3769 = vld [vmem:[%s3716 + $0x1a0] sm:$0xff]
        %v3770 = vld [vmem:[%s3716 + $0x1a8] sm:$0xff]
        %v3771 = vld [vmem:[%s3716 + $0x1b0] sm:$0xff]
        %v3772 = vld [vmem:[%s3716 + $0x1b8] sm:$0xff]
        %v3773 = vld [vmem:[%s3716 + $0x1c0] sm:$0xff]
        %v3774 = vld [vmem:[%s3716 + $0x1c8] sm:$0xff]
        %v3775 = vld [vmem:[%s3716 + $0x1d0] sm:$0xff]
        %v3776 = vld [vmem:[%s3716 + $0x1d8] sm:$0xff]
        %v3777 = vld [vmem:[%s3716 + $0x1e0] sm:$0xff]
        %v3778 = vld [vmem:[%s3716 + $0x1e8] sm:$0xff]
        %v3779 = vld [vmem:[%s3716 + $0x1f0] sm:$0xff]
        %v3780 = vld [vmem:[%s3716 + $0x1f8] sm:$0xff]
        %v3845 = vunpack.c.l.b16 %v3717
        %v3846 = vunpack.c.h.b16 %v3717
        %v3847 = vunpack.c.l.b16 %v3718
        %v3848 = vunpack.c.h.b16 %v3718
        %v3849 = vunpack.c.l.b16 %v3719
        %v3850 = vunpack.c.h.b16 %v3719
        %v3851 = vunpack.c.l.b16 %v3720
        %v3852 = vunpack.c.h.b16 %v3720
        %v3853 = vunpack.c.l.b16 %v3721
        %v3854 = vunpack.c.h.b16 %v3721
        %v3855 = vunpack.c.l.b16 %v3722
        %v3856 = vunpack.c.h.b16 %v3722
        %v3857 = vunpack.c.l.b16 %v3723
        %v3858 = vunpack.c.h.b16 %v3723
        %v3859 = vunpack.c.l.b16 %v3724
        %v3860 = vunpack.c.h.b16 %v3724
        %v3861 = vunpack.c.l.b16 %v3725
        %v3862 = vunpack.c.h.b16 %v3725
        %v3863 = vunpack.c.l.b16 %v3726
        %v3864 = vunpack.c.h.b16 %v3726
        %v3865 = vunpack.c.l.b16 %v3727
        %v3866 = vunpack.c.h.b16 %v3727
        %v3867 = vunpack.c.l.b16 %v3728
        %v3868 = vunpack.c.h.b16 %v3728
        %v3869 = vunpack.c.l.b16 %v3729
        %v3870 = vunpack.c.h.b16 %v3729
        %v3871 = vunpack.c.l.b16 %v3730
        %v3872 = vunpack.c.h.b16 %v3730
        %v3873 = vunpack.c.l.b16 %v3731
        %v3874 = vunpack.c.h.b16 %v3731
        %v3875 = vunpack.c.l.b16 %v3732
        %v3876 = vunpack.c.h.b16 %v3732
        %v3877 = vunpack.c.l.b16 %v3733
        %v3878 = vunpack.c.h.b16 %v3733
        %v3879 = vunpack.c.l.b16 %v3734
        %v3880 = vunpack.c.h.b16 %v3734
        %v3881 = vunpack.c.l.b16 %v3735
        %v3882 = vunpack.c.h.b16 %v3735
        %v3883 = vunpack.c.l.b16 %v3736
        %v3884 = vunpack.c.h.b16 %v3736
        %v3885 = vunpack.c.l.b16 %v3737
        %v3886 = vunpack.c.h.b16 %v3737
        %v3887 = vunpack.c.l.b16 %v3738
        %v3888 = vunpack.c.h.b16 %v3738
        %v3889 = vunpack.c.l.b16 %v3739
        %v3890 = vunpack.c.h.b16 %v3739
        %v3891 = vunpack.c.l.b16 %v3740
        %v3892 = vunpack.c.h.b16 %v3740
        %v3893 = vunpack.c.l.b16 %v3741
        %v3894 = vunpack.c.h.b16 %v3741
        %v3895 = vunpack.c.l.b16 %v3742
        %v3896 = vunpack.c.h.b16 %v3742
        %v3897 = vunpack.c.l.b16 %v3743
        %v3898 = vunpack.c.h.b16 %v3743
        %v3899 = vunpack.c.l.b16 %v3744
        %v3900 = vunpack.c.h.b16 %v3744
        %v3901 = vunpack.c.l.b16 %v3745
        %v3902 = vunpack.c.h.b16 %v3745
        %v3903 = vunpack.c.l.b16 %v3746
        %v3904 = vunpack.c.h.b16 %v3746
        %v3905 = vunpack.c.l.b16 %v3747
        %v3906 = vunpack.c.h.b16 %v3747
        %v3907 = vunpack.c.l.b16 %v3748
        %v3908 = vunpack.c.h.b16 %v3748
        %v3909 = vunpack.c.l.b16 %v3749
        %v3910 = vunpack.c.h.b16 %v3749
        %v3911 = vunpack.c.l.b16 %v3750
        %v3912 = vunpack.c.h.b16 %v3750
        %v3913 = vunpack.c.l.b16 %v3751
        %v3914 = vunpack.c.h.b16 %v3751
        %v3915 = vunpack.c.l.b16 %v3752
        %v3916 = vunpack.c.h.b16 %v3752
        %v3917 = vunpack.c.l.b16 %v3753
        %v3918 = vunpack.c.h.b16 %v3753
        %v3919 = vunpack.c.l.b16 %v3754
        %v3920 = vunpack.c.h.b16 %v3754
        %v3921 = vunpack.c.l.b16 %v3755
        %v3922 = vunpack.c.h.b16 %v3755
        %v3923 = vunpack.c.l.b16 %v3756
        %v3924 = vunpack.c.h.b16 %v3756
        %v3925 = vunpack.c.l.b16 %v3757
        %v3926 = vunpack.c.h.b16 %v3757
        %v3927 = vunpack.c.l.b16 %v3758
        %v3928 = vunpack.c.h.b16 %v3758
        %v3929 = vunpack.c.l.b16 %v3759
        %v3930 = vunpack.c.h.b16 %v3759
        %v3931 = vunpack.c.l.b16 %v3760
        %v3932 = vunpack.c.h.b16 %v3760
        %v3933 = vunpack.c.l.b16 %v3761
        %v3934 = vunpack.c.h.b16 %v3761
        %v3935 = vunpack.c.l.b16 %v3762
        %v3936 = vunpack.c.h.b16 %v3762
        %v3937 = vunpack.c.l.b16 %v3763
        %v3938 = vunpack.c.h.b16 %v3763
        %v3939 = vunpack.c.l.b16 %v3764
        %v3940 = vunpack.c.h.b16 %v3764
        %v3941 = vunpack.c.l.b16 %v3765
        %v3942 = vunpack.c.h.b16 %v3765
        %v3943 = vunpack.c.l.b16 %v3766
        %v3944 = vunpack.c.h.b16 %v3766
        %v3945 = vunpack.c.l.b16 %v3767
        %v3946 = vunpack.c.h.b16 %v3767
        %v3947 = vunpack.c.l.b16 %v3768
        %v3948 = vunpack.c.h.b16 %v3768
        %v3949 = vunpack.c.l.b16 %v3769
        %v3950 = vunpack.c.h.b16 %v3769
        %v3951 = vunpack.c.l.b16 %v3770
        %v3952 = vunpack.c.h.b16 %v3770
        %v3953 = vunpack.c.l.b16 %v3771
        %v3954 = vunpack.c.h.b16 %v3771
        %v3955 = vunpack.c.l.b16 %v3772
        %v3956 = vunpack.c.h.b16 %v3772
        %v3957 = vunpack.c.l.b16 %v3773
        %v3958 = vunpack.c.h.b16 %v3773
        %v3959 = vunpack.c.l.b16 %v3774
        %v3960 = vunpack.c.h.b16 %v3774
        %v3961 = vunpack.c.l.b16 %v3775
        %v3962 = vunpack.c.h.b16 %v3775
        %v3963 = vunpack.c.l.b16 %v3776
        %v3964 = vunpack.c.h.b16 %v3776
        %v3965 = vunpack.c.l.b16 %v3777
        %v3966 = vunpack.c.h.b16 %v3777
        %v3967 = vunpack.c.l.b16 %v3778
        %v3968 = vunpack.c.h.b16 %v3778
        %v3969 = vunpack.c.l.b16 %v3779
        %v3970 = vunpack.c.h.b16 %v3779
        %v3971 = vunpack.c.l.b16 %v3780
        %v3972 = vunpack.c.h.b16 %v3780
        %v3973 = vpack.c.b16 %v3849, %v3845
        %v3974 = vpack.c.b16 %v3850, %v3846
        %v3975 = vpack.c.b16 %v3851, %v3847
        %v3976 = vpack.c.b16 %v3852, %v3848
        %v3977 = vpack.c.b16 %v3857, %v3853
        %v3978 = vpack.c.b16 %v3858, %v3854
        %v3979 = vpack.c.b16 %v3859, %v3855
        %v3980 = vpack.c.b16 %v3860, %v3856
        %v3981 = vpack.c.b16 %v3865, %v3861
        %v3982 = vpack.c.b16 %v3866, %v3862
        %v3983 = vpack.c.b16 %v3867, %v3863
        %v3984 = vpack.c.b16 %v3868, %v3864
        %v3985 = vpack.c.b16 %v3873, %v3869
        %v3986 = vpack.c.b16 %v3874, %v3870
        %v3987 = vpack.c.b16 %v3875, %v3871
        %v3988 = vpack.c.b16 %v3876, %v3872
        %v3989 = vpack.c.b16 %v3881, %v3877
        %v3990 = vpack.c.b16 %v3882, %v3878
        %v3991 = vpack.c.b16 %v3883, %v3879
        %v3992 = vpack.c.b16 %v3884, %v3880
        %v3993 = vpack.c.b16 %v3889, %v3885
        %v3994 = vpack.c.b16 %v3890, %v3886
        %v3995 = vpack.c.b16 %v3891, %v3887
        %v3996 = vpack.c.b16 %v3892, %v3888
        %v3997 = vpack.c.b16 %v3897, %v3893
        %v3998 = vpack.c.b16 %v3898, %v3894
        %v3999 = vpack.c.b16 %v3899, %v3895
        %v4000 = vpack.c.b16 %v3900, %v3896
        %v4001 = vpack.c.b16 %v3905, %v3901
        %v4002 = vpack.c.b16 %v3906, %v3902
        %v4003 = vpack.c.b16 %v3907, %v3903
        %v4004 = vpack.c.b16 %v3908, %v3904
        %v4005 = vpack.c.b16 %v3913, %v3909
        %v4006 = vpack.c.b16 %v3914, %v3910
        %v4007 = vpack.c.b16 %v3915, %v3911
        %v4008 = vpack.c.b16 %v3916, %v3912
        %v4009 = vpack.c.b16 %v3921, %v3917
        %v4010 = vpack.c.b16 %v3922, %v3918
        %v4011 = vpack.c.b16 %v3923, %v3919
        %v4012 = vpack.c.b16 %v3924, %v3920
        %v4013 = vpack.c.b16 %v3929, %v3925
        %v4014 = vpack.c.b16 %v3930, %v3926
        %v4015 = vpack.c.b16 %v3931, %v3927
        %v4016 = vpack.c.b16 %v3932, %v3928
        %v4017 = vpack.c.b16 %v3937, %v3933
        %v4018 = vpack.c.b16 %v3938, %v3934
        %v4019 = vpack.c.b16 %v3939, %v3935
        %v4020 = vpack.c.b16 %v3940, %v3936
        %v4021 = vpack.c.b16 %v3945, %v3941
        %v4022 = vpack.c.b16 %v3946, %v3942
        %v4023 = vpack.c.b16 %v3947, %v3943
        %v4024 = vpack.c.b16 %v3948, %v3944
        %v4025 = vpack.c.b16 %v3953, %v3949
        %v4026 = vpack.c.b16 %v3954, %v3950
        %v4027 = vpack.c.b16 %v3955, %v3951
        %v4028 = vpack.c.b16 %v3956, %v3952
        %v4029 = vpack.c.b16 %v3961, %v3957
        %v4030 = vpack.c.b16 %v3962, %v3958
        %v4031 = vpack.c.b16 %v3963, %v3959
        %v4032 = vpack.c.b16 %v3964, %v3960
        %v4033 = vpack.c.b16 %v3969, %v3965
        %v4034 = vpack.c.b16 %v3970, %v3966
        %v4035 = vpack.c.b16 %v3971, %v3967
        %v4036 = vpack.c.b16 %v3972, %v3968
        %4101 = vmatprep.subr.bf16.mxu0 0
        %4102 = vmatpush1.bf16.msra.mxu0 %v787
        %4103 = vmatprep.subr.bf16.mxu0 0
        %4104 = vmatpush1.bf16.msra.mxu0 %v788
        %4105 = vmatprep.subr.bf16.mxu0 0
        %4106 = vmatpush1.bf16.msra.mxu0 %v789
        %4107 = vmatprep.subr.bf16.mxu0 0
        %4108 = vmatpush1.bf16.msra.mxu0 %v790
        %4109 = vmatprep.subr.bf16.mxu0 0
        %4110 = vmatpush1.bf16.msra.mxu0 %v791
        %4111 = vmatprep.subr.bf16.mxu0 0
        %4112 = vmatpush1.bf16.msra.mxu0 %v792
        %4113 = vmatprep.subr.bf16.mxu0 0
        %4114 = vmatpush1.bf16.msra.mxu0 %v793
        %4115 = vmatprep.subr.bf16.mxu0 0
        %4116 = vmatpush1.bf16.msra.mxu0 %v794
        %4117 = vmatprep.subr.bf16.mxu0 0
        %4118 = vmatpush1.bf16.msra.mxu0 %v795
        %4119 = vmatprep.subr.bf16.mxu0 0
        %4120 = vmatpush1.bf16.msra.mxu0 %v796
        %4121 = vmatprep.subr.bf16.mxu0 0
        %4122 = vmatpush1.bf16.msra.mxu0 %v797
        %4123 = vmatprep.subr.bf16.mxu0 0
        %4124 = vmatpush1.bf16.msra.mxu0 %v798
        %4125 = vmatprep.subr.bf16.mxu0 0
        %4126 = vmatpush1.bf16.msra.mxu0 %v799
        %4127 = vmatprep.subr.bf16.mxu0 0
        %4128 = vmatpush1.bf16.msra.mxu0 %v800
        %4129 = vmatprep.subr.bf16.mxu0 0
        %4130 = vmatpush1.bf16.msra.mxu0 %v801
        %4131 = vmatprep.subr.bf16.mxu0 0
        %4132 = vmatpush1.bf16.msra.mxu0 %v802
        %4133 = vmatprep.mubr.bf16.mxu0 %v3974
        %4134 = vmatmul.mubr.bf16.gmra.mrb[0].mxu0 %v3973
        %v4135 = vpop.f32.mrb[0].mxu0
        %v4136 = vadd.f32 0.0, %v4135
        %v4137 = vpop.f32.mrb[0].mxu0
        %v4138 = vpop.f32.mrb[0].mxu0
        %v4139 = vadd.f32 0.0, %v4138
        %v4140 = vpop.f32.mrb[0].mxu0
        %4141 = vmatprep.mubr.bf16.mxu0 %v3978
        %4142 = vmatmul.mubr.bf16.gmra.mrb[0].mxu0 %v3977
        %v4143 = vpop.f32.mrb[0].mxu0
        %v4144 = vadd.f32 0.0, %v4143
        %v4145 = vpop.f32.mrb[0].mxu0
        %v4146 = vpop.f32.mrb[0].mxu0
        %v4147 = vadd.f32 0.0, %v4146
        %v4148 = vpop.f32.mrb[0].mxu0
        %4149 = vmatprep.mubr.bf16.mxu0 %v3982
        %4150 = vmatmul.mubr.bf16.gmra.mrb[0].mxu0 %v3981
        %v4151 = vpop.f32.mrb[0].mxu0
        %v4152 = vadd.f32 0.0, %v4151
        %v4153 = vpop.f32.mrb[0].mxu0
        %v4154 = vpop.f32.mrb[0].mxu0
        %v4155 = vadd.f32 0.0, %v4154
        %v4156 = vpop.f32.mrb[0].mxu0
        %4157 = vmatprep.mubr.bf16.mxu0 %v3986
        %4158 = vmatmul.mubr.bf16.gmra.mrb[0].mxu0 %v3985
        %v4159 = vpop.f32.mrb[0].mxu0
        %v4160 = vadd.f32 0.0, %v4159
        %v4161 = vpop.f32.mrb[0].mxu0
        %v4162 = vpop.f32.mrb[0].mxu0
        %v4163 = vadd.f32 0.0, %v4162
        %v4164 = vpop.f32.mrb[0].mxu0
        %4165 = vmatprep.mubr.bf16.mxu0 %v3990
        %4166 = vmatmul.mubr.bf16.gmra.mrb[0].mxu0 %v3989
        %v4167 = vpop.f32.mrb[0].mxu0
        %v4168 = vadd.f32 0.0, %v4167
        %v4169 = vpop.f32.mrb[0].mxu0
        %v4170 = vpop.f32.mrb[0].mxu0
        %v4171 = vadd.f32 0.0, %v4170
        %v4172 = vpop.f32.mrb[0].mxu0
        %4173 = vmatprep.mubr.bf16.mxu0 %v3994
        %4174 = vmatmul.mubr.bf16.gmra.mrb[0].mxu0 %v3993
        %v4175 = vpop.f32.mrb[0].mxu0
        %v4176 = vadd.f32 0.0, %v4175
        %v4177 = vpop.f32.mrb[0].mxu0
        %v4178 = vpop.f32.mrb[0].mxu0
        %v4179 = vadd.f32 0.0, %v4178
        %v4180 = vpop.f32.mrb[0].mxu0
        %4181 = vmatprep.mubr.bf16.mxu0 %v3998
        %4182 = vmatmul.mubr.bf16.gmra.mrb[0].mxu0 %v3997
        %v4183 = vpop.f32.mrb[0].mxu0
        %v4184 = vadd.f32 0.0, %v4183
        %v4185 = vpop.f32.mrb[0].mxu0
        %v4186 = vpop.f32.mrb[0].mxu0
        %v4187 = vadd.f32 0.0, %v4186
        %v4188 = vpop.f32.mrb[0].mxu0
        %4189 = vmatprep.mubr.bf16.mxu0 %v4002
        %4190 = vmatmul.mubr.bf16.gmra.mrb[0].mxu0 %v4001
        %v4191 = vpop.f32.mrb[0].mxu0
        %v4192 = vadd.f32 0.0, %v4191
        %v4193 = vpop.f32.mrb[0].mxu0
        %v4194 = vpop.f32.mrb[0].mxu0
        %v4195 = vadd.f32 0.0, %v4194
        %v4196 = vpop.f32.mrb[0].mxu0
        %4197 = vmatprep.mubr.bf16.mxu0 %v4006
        %4198 = vmatmul.mubr.bf16.gmra.mrb[0].mxu0 %v4005
        %v4199 = vpop.f32.mrb[0].mxu0
        %v4200 = vadd.f32 0.0, %v4199
        %v4201 = vpop.f32.mrb[0].mxu0
        %v4202 = vpop.f32.mrb[0].mxu0
        %v4203 = vadd.f32 0.0, %v4202
        %v4204 = vpop.f32.mrb[0].mxu0
        %4205 = vmatprep.mubr.bf16.mxu0 %v4010
        %4206 = vmatmul.mubr.bf16.gmra.mrb[0].mxu0 %v4009
        %v4207 = vpop.f32.mrb[0].mxu0
        %v4208 = vadd.f32 0.0, %v4207
        %v4209 = vpop.f32.mrb[0].mxu0
        %v4210 = vpop.f32.mrb[0].mxu0
        %v4211 = vadd.f32 0.0, %v4210
        %v4212 = vpop.f32.mrb[0].mxu0
        %4213 = vmatprep.mubr.bf16.mxu0 %v4014
        %4214 = vmatmul.mubr.bf16.gmra.mrb[0].mxu0 %v4013
        %v4215 = vpop.f32.mrb[0].mxu0
        %v4216 = vadd.f32 0.0, %v4215
        %v4217 = vpop.f32.mrb[0].mxu0
        %v4218 = vpop.f32.mrb[0].mxu0
        %v4219 = vadd.f32 0.0, %v4218
        %v4220 = vpop.f32.mrb[0].mxu0
        %4221 = vmatprep.mubr.bf16.mxu0 %v4018
        %4222 = vmatmul.mubr.bf16.gmra.mrb[0].mxu0 %v4017
        %v4223 = vpop.f32.mrb[0].mxu0
        %v4224 = vadd.f32 0.0, %v4223
        %v4225 = vpop.f32.mrb[0].mxu0
        %v4226 = vpop.f32.mrb[0].mxu0
        %v4227 = vadd.f32 0.0, %v4226
        %v4228 = vpop.f32.mrb[0].mxu0
        %4229 = vmatprep.mubr.bf16.mxu0 %v4022
        %4230 = vmatmul.mubr.bf16.gmra.mrb[0].mxu0 %v4021
        %v4231 = vpop.f32.mrb[0].mxu0
        %v4232 = vadd.f32 0.0, %v4231
        %v4233 = vpop.f32.mrb[0].mxu0
        %v4234 = vpop.f32.mrb[0].mxu0
        %v4235 = vadd.f32 0.0, %v4234
        %v4236 = vpop.f32.mrb[0].mxu0
        %4237 = vmatprep.mubr.bf16.mxu0 %v4026
        %4238 = vmatmul.mubr.bf16.gmra.mrb[0].mxu0 %v4025
        %v4239 = vpop.f32.mrb[0].mxu0
        %v4240 = vadd.f32 0.0, %v4239
        %v4241 = vpop.f32.mrb[0].mxu0
        %v4242 = vpop.f32.mrb[0].mxu0
        %v4243 = vadd.f32 0.0, %v4242
        %v4244 = vpop.f32.mrb[0].mxu0
        %4245 = vmatprep.mubr.bf16.mxu0 %v4030
        %4246 = vmatmul.mubr.bf16.gmra.mrb[0].mxu0 %v4029
        %v4247 = vpop.f32.mrb[0].mxu0
        %v4248 = vadd.f32 0.0, %v4247
        %v4249 = vpop.f32.mrb[0].mxu0
        %v4250 = vpop.f32.mrb[0].mxu0
        %v4251 = vadd.f32 0.0, %v4250
        %v4252 = vpop.f32.mrb[0].mxu0
        %4253 = vmatprep.mubr.bf16.mxu0 %v4034
        %4254 = vmatmul.mubr.bf16.gmra.mrb[0].mxu0 %v4033
        %v4255 = vpop.f32.mrb[0].mxu0
        %v4256 = vadd.f32 0.0, %v4255
        %v4257 = vpop.f32.mrb[0].mxu0
        %v4258 = vpop.f32.mrb[0].mxu0
        %v4259 = vadd.f32 0.0, %v4258
        %v4260 = vpop.f32.mrb[0].mxu0
        %4261 = vdwg.mxu0
        %4262 = vmatprep.subr.bf16.mxu0 0
        %4263 = vmatpush1.bf16.msra.mxu0 %v803
        %4264 = vmatprep.subr.bf16.mxu0 0
        %4265 = vmatpush1.bf16.msra.mxu0 %v804
        %4266 = vmatprep.subr.bf16.mxu0 0
        %4267 = vmatpush1.bf16.msra.mxu0 %v805
        %4268 = vmatprep.subr.bf16.mxu0 0
        %4269 = vmatpush1.bf16.msra.mxu0 %v806
        %4270 = vmatprep.subr.bf16.mxu0 0
        %4271 = vmatpush1.bf16.msra.mxu0 %v807
        %4272 = vmatprep.subr.bf16.mxu0 0
        %4273 = vmatpush1.bf16.msra.mxu0 %v808
        %4274 = vmatprep.subr.bf16.mxu0 0
        %4275 = vmatpush1.bf16.msra.mxu0 %v809
        %4276 = vmatprep.subr.bf16.mxu0 0
        %4277 = vmatpush1.bf16.msra.mxu0 %v810
        %4278 = vmatprep.subr.bf16.mxu0 0
        %4279 = vmatpush1.bf16.msra.mxu0 %v811
        %4280 = vmatprep.subr.bf16.mxu0 0
        %4281 = vmatpush1.bf16.msra.mxu0 %v812
        %4282 = vmatprep.subr.bf16.mxu0 0
        %4283 = vmatpush1.bf16.msra.mxu0 %v813
        %4284 = vmatprep.subr.bf16.mxu0 0
        %4285 = vmatpush1.bf16.msra.mxu0 %v814
        %4286 = vmatprep.subr.bf16.mxu0 0
        %4287 = vmatpush1.bf16.msra.mxu0 %v815
        %4288 = vmatprep.subr.bf16.mxu0 0
        %4289 = vmatpush1.bf16.msra.mxu0 %v816
        %4290 = vmatprep.subr.bf16.mxu0 0
        %4291 = vmatpush1.bf16.msra.mxu0 %v817
        %4292 = vmatprep.subr.bf16.mxu0 0
        %4293 = vmatpush1.bf16.msra.mxu0 %v818
        %4294 = vmatprep.mubr.bf16.mxu0 %v3976
        %4295 = vmatmul.mubr.bf16.gmra.mrb[0].mxu0 %v3975
        %v4296 = vpop.f32.mrb[0].mxu0
        %v4297 = vadd.f32 %v4136, %v4296
        %v4298 = vpop.f32.mrb[0].mxu0
        %v4299 = vpop.f32.mrb[0].mxu0
        %v4300 = vadd.f32 %v4139, %v4299
        %v4301 = vpop.f32.mrb[0].mxu0
        %4302 = vmatprep.mubr.bf16.mxu0 %v3980
        %4303 = vmatmul.mubr.bf16.gmra.mrb[0].mxu0 %v3979
        %v4304 = vpop.f32.mrb[0].mxu0
        %v4305 = vadd.f32 %v4144, %v4304
        %v4306 = vpop.f32.mrb[0].mxu0
        %v4307 = vpop.f32.mrb[0].mxu0
        %v4308 = vadd.f32 %v4147, %v4307
        %v4309 = vpop.f32.mrb[0].mxu0
        %4310 = vmatprep.mubr.bf16.mxu0 %v3984
        %4311 = vmatmul.mubr.bf16.gmra.mrb[0].mxu0 %v3983
        %v4312 = vpop.f32.mrb[0].mxu0
        %v4313 = vadd.f32 %v4152, %v4312
        %v4314 = vpop.f32.mrb[0].mxu0
        %v4315 = vpop.f32.mrb[0].mxu0
        %v4316 = vadd.f32 %v4155, %v4315
        %v4317 = vpop.f32.mrb[0].mxu0
        %4318 = vmatprep.mubr.bf16.mxu0 %v3988
        %4319 = vmatmul.mubr.bf16.gmra.mrb[0].mxu0 %v3987
        %v4320 = vpop.f32.mrb[0].mxu0
        %v4321 = vadd.f32 %v4160, %v4320
        %v4322 = vpop.f32.mrb[0].mxu0
        %v4323 = vpop.f32.mrb[0].mxu0
        %v4324 = vadd.f32 %v4163, %v4323
        %v4325 = vpop.f32.mrb[0].mxu0
        %4326 = vmatprep.mubr.bf16.mxu0 %v3992
        %4327 = vmatmul.mubr.bf16.gmra.mrb[0].mxu0 %v3991
        %v4328 = vpop.f32.mrb[0].mxu0
        %v4329 = vadd.f32 %v4168, %v4328
        %v4330 = vpop.f32.mrb[0].mxu0
        %v4331 = vpop.f32.mrb[0].mxu0
        %v4332 = vadd.f32 %v4171, %v4331
        %v4333 = vpop.f32.mrb[0].mxu0
        %4334 = vmatprep.mubr.bf16.mxu0 %v3996
        %4335 = vmatmul.mubr.bf16.gmra.mrb[0].mxu0 %v3995
        %v4336 = vpop.f32.mrb[0].mxu0
        %v4337 = vadd.f32 %v4176, %v4336
        %v4338 = vpop.f32.mrb[0].mxu0
        %v4339 = vpop.f32.mrb[0].mxu0
        %v4340 = vadd.f32 %v4179, %v4339
        %v4341 = vpop.f32.mrb[0].mxu0
        %4342 = vmatprep.mubr.bf16.mxu0 %v4000
        %4343 = vmatmul.mubr.bf16.gmra.mrb[0].mxu0 %v3999
        %v4344 = vpop.f32.mrb[0].mxu0
        %v4345 = vadd.f32 %v4184, %v4344
        %v4346 = vpop.f32.mrb[0].mxu0
        %v4347 = vpop.f32.mrb[0].mxu0
        %v4348 = vadd.f32 %v4187, %v4347
        %v4349 = vpop.f32.mrb[0].mxu0
        %4350 = vmatprep.mubr.bf16.mxu0 %v4004
        %4351 = vmatmul.mubr.bf16.gmra.mrb[0].mxu0 %v4003
        %v4352 = vpop.f32.mrb[0].mxu0
        %v4353 = vadd.f32 %v4192, %v4352
        %v4354 = vpop.f32.mrb[0].mxu0
        %v4355 = vpop.f32.mrb[0].mxu0
        %v4356 = vadd.f32 %v4195, %v4355
        %v4357 = vpop.f32.mrb[0].mxu0
        %4358 = vmatprep.mubr.bf16.mxu0 %v4008
        %4359 = vmatmul.mubr.bf16.gmra.mrb[0].mxu0 %v4007
        %v4360 = vpop.f32.mrb[0].mxu0
        %v4361 = vadd.f32 %v4200, %v4360
        %v4362 = vpop.f32.mrb[0].mxu0
        %v4363 = vpop.f32.mrb[0].mxu0
        %v4364 = vadd.f32 %v4203, %v4363
        %v4365 = vpop.f32.mrb[0].mxu0
        %4366 = vmatprep.mubr.bf16.mxu0 %v4012
        %4367 = vmatmul.mubr.bf16.gmra.mrb[0].mxu0 %v4011
        %v4368 = vpop.f32.mrb[0].mxu0
        %v4369 = vadd.f32 %v4208, %v4368
        %v4370 = vpop.f32.mrb[0].mxu0
        %v4371 = vpop.f32.mrb[0].mxu0
        %v4372 = vadd.f32 %v4211, %v4371
        %v4373 = vpop.f32.mrb[0].mxu0
        %4374 = vmatprep.mubr.bf16.mxu0 %v4016
        %4375 = vmatmul.mubr.bf16.gmra.mrb[0].mxu0 %v4015
        %v4376 = vpop.f32.mrb[0].mxu0
        %v4377 = vadd.f32 %v4216, %v4376
        %v4378 = vpop.f32.mrb[0].mxu0
        %v4379 = vpop.f32.mrb[0].mxu0
        %v4380 = vadd.f32 %v4219, %v4379
        %v4381 = vpop.f32.mrb[0].mxu0
        %4382 = vmatprep.mubr.bf16.mxu0 %v4020
        %4383 = vmatmul.mubr.bf16.gmra.mrb[0].mxu0 %v4019
        %v4384 = vpop.f32.mrb[0].mxu0
        %v4385 = vadd.f32 %v4224, %v4384
        %v4386 = vpop.f32.mrb[0].mxu0
        %v4387 = vpop.f32.mrb[0].mxu0
        %v4388 = vadd.f32 %v4227, %v4387
        %v4389 = vpop.f32.mrb[0].mxu0
        %4390 = vmatprep.mubr.bf16.mxu0 %v4024
        %4391 = vmatmul.mubr.bf16.gmra.mrb[0].mxu0 %v4023
        %v4392 = vpop.f32.mrb[0].mxu0
        %v4393 = vadd.f32 %v4232, %v4392
        %v4394 = vpop.f32.mrb[0].mxu0
        %v4395 = vpop.f32.mrb[0].mxu0
        %v4396 = vadd.f32 %v4235, %v4395
        %v4397 = vpop.f32.mrb[0].mxu0
        %4398 = vmatprep.mubr.bf16.mxu0 %v4028
        %4399 = vmatmul.mubr.bf16.gmra.mrb[0].mxu0 %v4027
        %v4400 = vpop.f32.mrb[0].mxu0
        %v4401 = vadd.f32 %v4240, %v4400
        %v4402 = vpop.f32.mrb[0].mxu0
        %v4403 = vpop.f32.mrb[0].mxu0
        %v4404 = vadd.f32 %v4243, %v4403
        %v4405 = vpop.f32.mrb[0].mxu0
        %4406 = vmatprep.mubr.bf16.mxu0 %v4032
        %4407 = vmatmul.mubr.bf16.gmra.mrb[0].mxu0 %v4031
        %v4408 = vpop.f32.mrb[0].mxu0
        %v4409 = vadd.f32 %v4248, %v4408
        %v4410 = vpop.f32.mrb[0].mxu0
        %v4411 = vpop.f32.mrb[0].mxu0
        %v4412 = vadd.f32 %v4251, %v4411
        %v4413 = vpop.f32.mrb[0].mxu0
        %4414 = vmatprep.mubr.bf16.mxu0 %v4036
        %4415 = vmatmul.mubr.bf16.gmra.mrb[0].mxu0 %v4035
        %v4416 = vpop.f32.mrb[0].mxu0
        %v4417 = vadd.f32 %v4256, %v4416
        %v4418 = vpop.f32.mrb[0].mxu0
        %v4419 = vpop.f32.mrb[0].mxu0
        %v4420 = vadd.f32 %v4259, %v4419
        %v4421 = vpop.f32.mrb[0].mxu0
        %4422 = vdwg.mxu0
        %4423 = vrot.lane.b32.xlu0 %v4297, 126
        %v4424 = vpop.permute.xlu0 %4423
        %4425 = vrot.lane.b32.xlu0 %v4300, 126
        %v4426 = vpop.permute.xlu0 %4425
        %4427 = vrot.lane.b32.xlu0 %v4305, 126
        %v4428 = vpop.permute.xlu0 %4427
        %4429 = vrot.lane.b32.xlu0 %v4308, 126
        %v4430 = vpop.permute.xlu0 %4429
        %4431 = vrot.lane.b32.xlu0 %v4313, 126
        %v4432 = vpop.permute.xlu0 %4431
        %4433 = vrot.lane.b32.xlu0 %v4316, 126
        %v4434 = vpop.permute.xlu0 %4433
        %4435 = vrot.lane.b32.xlu0 %v4321, 126
        %v4436 = vpop.permute.xlu0 %4435
        %4437 = vrot.lane.b32.xlu0 %v4324, 126
        %v4438 = vpop.permute.xlu0 %4437
        %4439 = vrot.lane.b32.xlu0 %v4329, 126
        %v4440 = vpop.permute.xlu0 %4439
        %4441 = vrot.lane.b32.xlu0 %v4332, 126
        %v4442 = vpop.permute.xlu0 %4441
        %4443 = vrot.lane.b32.xlu0 %v4337, 126
        %v4444 = vpop.permute.xlu0 %4443
        %4445 = vrot.lane.b32.xlu0 %v4340, 126
        %v4446 = vpop.permute.xlu0 %4445
        %4447 = vrot.lane.b32.xlu0 %v4345, 126
        %v4448 = vpop.permute.xlu0 %4447
        %4449 = vrot.lane.b32.xlu0 %v4348, 126
        %v4450 = vpop.permute.xlu0 %4449
        %4451 = vrot.lane.b32.xlu0 %v4353, 126
        %v4452 = vpop.permute.xlu0 %4451
        %4453 = vrot.lane.b32.xlu0 %v4356, 126
        %v4454 = vpop.permute.xlu0 %4453
        %4455 = vrot.lane.b32.xlu0 %v4361, 126
        %v4456 = vpop.permute.xlu0 %4455
        %4457 = vrot.lane.b32.xlu0 %v4364, 126
        %v4458 = vpop.permute.xlu0 %4457
        %4459 = vrot.lane.b32.xlu0 %v4369, 126
        %v4460 = vpop.permute.xlu0 %4459
        %4461 = vrot.lane.b32.xlu0 %v4372, 126
        %v4462 = vpop.permute.xlu0 %4461
        %4463 = vrot.lane.b32.xlu0 %v4377, 126
        %v4464 = vpop.permute.xlu0 %4463
        %4465 = vrot.lane.b32.xlu0 %v4380, 126
        %v4466 = vpop.permute.xlu0 %4465
        %4467 = vrot.lane.b32.xlu0 %v4385, 126
        %v4468 = vpop.permute.xlu0 %4467
        %4469 = vrot.lane.b32.xlu0 %v4388, 126
        %v4470 = vpop.permute.xlu0 %4469
        %4471 = vrot.lane.b32.xlu0 %v4393, 126
        %v4472 = vpop.permute.xlu0 %4471
        %4473 = vrot.lane.b32.xlu0 %v4396, 126
        %v4474 = vpop.permute.xlu0 %4473
        %4475 = vrot.lane.b32.xlu0 %v4401, 126
        %v4476 = vpop.permute.xlu0 %4475
        %4477 = vrot.lane.b32.xlu0 %v4404, 126
        %v4478 = vpop.permute.xlu0 %4477
        %4479 = vrot.lane.b32.xlu0 %v4409, 126
        %v4480 = vpop.permute.xlu0 %4479
        %4481 = vrot.lane.b32.xlu0 %v4412, 126
        %v4482 = vpop.permute.xlu0 %4481
        %4483 = vrot.lane.b32.xlu0 %v4417, 126
        %v4484 = vpop.permute.xlu0 %4483
        %4485 = vrot.lane.b32.xlu0 %v4420, 126
        %v4486 = vpop.permute.xlu0 %4485
        %v4487 = vsel %vm274, 1, 0
        %vm4488 = vcmp.eq.s32.totalorder %v4487, 1
        %v4489 = vsel %vm4488, %v4424, 0.0
        %v4490 = vsel %vm4488, %v4426, 0.0
        %v4491 = vsel %vm4488, %v4428, 0.0
        %v4492 = vsel %vm4488, %v4430, 0.0
        %v4493 = vsel %vm4488, %v4432, 0.0
        %v4494 = vsel %vm4488, %v4434, 0.0
        %v4495 = vsel %vm4488, %v4436, 0.0
        %v4496 = vsel %vm4488, %v4438, 0.0
        %v4497 = vsel %vm4488, %v4440, 0.0
        %v4498 = vsel %vm4488, %v4442, 0.0
        %v4499 = vsel %vm4488, %v4444, 0.0
        %v4500 = vsel %vm4488, %v4446, 0.0
        %v4501 = vsel %vm4488, %v4448, 0.0
        %v4502 = vsel %vm4488, %v4450, 0.0
        %v4503 = vsel %vm4488, %v4452, 0.0
        %v4504 = vsel %vm4488, %v4454, 0.0
        %v4505 = vsel %vm4488, %v4456, 0.0
        %v4506 = vsel %vm4488, %v4458, 0.0
        %v4507 = vsel %vm4488, %v4460, 0.0
        %v4508 = vsel %vm4488, %v4462, 0.0
        %v4509 = vsel %vm4488, %v4464, 0.0
        %v4510 = vsel %vm4488, %v4466, 0.0
        %v4511 = vsel %vm4488, %v4468, 0.0
        %v4512 = vsel %vm4488, %v4470, 0.0
        %v4513 = vsel %vm4488, %v4472, 0.0
        %v4514 = vsel %vm4488, %v4474, 0.0
        %v4515 = vsel %vm4488, %v4476, 0.0
        %v4516 = vsel %vm4488, %v4478, 0.0
        %v4517 = vsel %vm4488, %v4480, 0.0
        %v4518 = vsel %vm4488, %v4482, 0.0
        %v4519 = vsel %vm4488, %v4484, 0.0
        %v4520 = vsel %vm4488, %v4486, 0.0
        %v4521 = vadd.f32 %v3684, %v4489
        %v4522 = vadd.f32 %v3685, %v4490
        %v4523 = vadd.f32 %v3686, %v4491
        %v4524 = vadd.f32 %v3687, %v4492
        %v4525 = vadd.f32 %v3688, %v4493
        %v4526 = vadd.f32 %v3689, %v4494
        %v4527 = vadd.f32 %v3690, %v4495
        %v4528 = vadd.f32 %v3691, %v4496
        %v4529 = vadd.f32 %v3692, %v4497
        %v4530 = vadd.f32 %v3693, %v4498
        %v4531 = vadd.f32 %v3694, %v4499
        %v4532 = vadd.f32 %v3695, %v4500
        %v4533 = vadd.f32 %v3696, %v4501
        %v4534 = vadd.f32 %v3697, %v4502
        %v4535 = vadd.f32 %v3698, %v4503
        %v4536 = vadd.f32 %v3699, %v4504
        %v4537 = vadd.f32 %v3700, %v4505
        %v4538 = vadd.f32 %v3701, %v4506
        %v4539 = vadd.f32 %v3702, %v4507
        %v4540 = vadd.f32 %v3703, %v4508
        %v4541 = vadd.f32 %v3704, %v4509
        %v4542 = vadd.f32 %v3705, %v4510
        %v4543 = vadd.f32 %v3706, %v4511
        %v4544 = vadd.f32 %v3707, %v4512
        %v4545 = vadd.f32 %v3708, %v4513
        %v4546 = vadd.f32 %v3709, %v4514
        %v4547 = vadd.f32 %v3710, %v4515
        %v4548 = vadd.f32 %v3711, %v4516
        %v4549 = vadd.f32 %v3712, %v4517
        %v4550 = vadd.f32 %v3713, %v4518
        %v4551 = vadd.f32 %v3714, %v4519
        %v4552 = vadd.f32 %v3715, %v4520
        %v4553 = vld [vmem:[%s2] sm:$0xff]
        %v4554 = vld [vmem:[%s2 + $0x8] sm:$0xff]
        %v4555 = vld [vmem:[%s2 + $0x10] sm:$0xff]
        %v4556 = vld [vmem:[%s2 + $0x18] sm:$0xff]
        %v4557 = vld [vmem:[%s2 + $0x20] sm:$0xff]
        %v4558 = vld [vmem:[%s2 + $0x28] sm:$0xff]
        %v4559 = vld [vmem:[%s2 + $0x30] sm:$0xff]
        %v4560 = vld [vmem:[%s2 + $0x38] sm:$0xff]
        %v4561 = vld [vmem:[%s2 + $0x40] sm:$0xff]
        %v4562 = vld [vmem:[%s2 + $0x48] sm:$0xff]
        %v4563 = vld [vmem:[%s2 + $0x50] sm:$0xff]
        %v4564 = vld [vmem:[%s2 + $0x58] sm:$0xff]
        %v4565 = vld [vmem:[%s2 + $0x60] sm:$0xff]
        %v4566 = vld [vmem:[%s2 + $0x68] sm:$0xff]
        %v4567 = vld [vmem:[%s2 + $0x70] sm:$0xff]
        %v4568 = vld [vmem:[%s2 + $0x78] sm:$0xff]
        %v4569 = vld [vmem:[%s2 + $0x80] sm:$0xff]
        %v4570 = vld [vmem:[%s2 + $0x88] sm:$0xff]
        %v4571 = vld [vmem:[%s2 + $0x90] sm:$0xff]
        %v4572 = vld [vmem:[%s2 + $0x98] sm:$0xff]
        %v4573 = vld [vmem:[%s2 + $0xa0] sm:$0xff]
        %v4574 = vld [vmem:[%s2 + $0xa8] sm:$0xff]
        %v4575 = vld [vmem:[%s2 + $0xb0] sm:$0xff]
        %v4576 = vld [vmem:[%s2 + $0xb8] sm:$0xff]
        %v4577 = vld [vmem:[%s2 + $0xc0] sm:$0xff]
        %v4578 = vld [vmem:[%s2 + $0xc8] sm:$0xff]
        %v4579 = vld [vmem:[%s2 + $0xd0] sm:$0xff]
        %v4580 = vld [vmem:[%s2 + $0xd8] sm:$0xff]
        %v4581 = vld [vmem:[%s2 + $0xe0] sm:$0xff]
        %v4582 = vld [vmem:[%s2 + $0xe8] sm:$0xff]
        %v4583 = vld [vmem:[%s2 + $0xf0] sm:$0xff]
        %v4584 = vld [vmem:[%s2 + $0xf8] sm:$0xff]
        %4586 = vset.pattern.permute.xlu0 0
        %4587 = vperm.xlu0 %4586, %v4553
        %v4588 = vpop.permute.xlu0 %4587
        %4591 = vset.pattern.permute.xlu0 0
        %4592 = vperm.xlu0 %4591, %v4554
        %v4593 = vpop.permute.xlu0 %4592
        %4596 = vset.pattern.permute.xlu0 0
        %4597 = vperm.xlu0 %4596, %v4555
        %v4598 = vpop.permute.xlu0 %4597
        %4601 = vset.pattern.permute.xlu0 0
        %4602 = vperm.xlu0 %4601, %v4556
        %v4603 = vpop.permute.xlu0 %4602
        %4606 = vset.pattern.permute.xlu0 0
        %4607 = vperm.xlu0 %4606, %v4557
        %v4608 = vpop.permute.xlu0 %4607
        %4611 = vset.pattern.permute.xlu0 0
        %4612 = vperm.xlu0 %4611, %v4558
        %v4613 = vpop.permute.xlu0 %4612
        %4616 = vset.pattern.permute.xlu0 0
        %4617 = vperm.xlu0 %4616, %v4559
        %v4618 = vpop.permute.xlu0 %4617
        %4621 = vset.pattern.permute.xlu0 0
        %4622 = vperm.xlu0 %4621, %v4560
        %v4623 = vpop.permute.xlu0 %4622
        %4626 = vset.pattern.permute.xlu0 0
        %4627 = vperm.xlu0 %4626, %v4561
        %v4628 = vpop.permute.xlu0 %4627
        %4631 = vset.pattern.permute.xlu0 0
        %4632 = vperm.xlu0 %4631, %v4562
        %v4633 = vpop.permute.xlu0 %4632
        %4636 = vset.pattern.permute.xlu0 0
        %4637 = vperm.xlu0 %4636, %v4563
        %v4638 = vpop.permute.xlu0 %4637
        %4641 = vset.pattern.permute.xlu0 0
        %4642 = vperm.xlu0 %4641, %v4564
        %v4643 = vpop.permute.xlu0 %4642
        %4646 = vset.pattern.permute.xlu0 0
        %4647 = vperm.xlu0 %4646, %v4565
        %v4648 = vpop.permute.xlu0 %4647
        %4651 = vset.pattern.permute.xlu0 0
        %4652 = vperm.xlu0 %4651, %v4566
        %v4653 = vpop.permute.xlu0 %4652
        %4656 = vset.pattern.permute.xlu0 0
        %4657 = vperm.xlu0 %4656, %v4567
        %v4658 = vpop.permute.xlu0 %4657
        %4661 = vset.pattern.permute.xlu0 0
        %4662 = vperm.xlu0 %4661, %v4568
        %v4663 = vpop.permute.xlu0 %4662
        %4666 = vset.pattern.permute.xlu0 0
        %4667 = vperm.xlu0 %4666, %v4569
        %v4668 = vpop.permute.xlu0 %4667
        %4671 = vset.pattern.permute.xlu0 0
        %4672 = vperm.xlu0 %4671, %v4570
        %v4673 = vpop.permute.xlu0 %4672
        %4676 = vset.pattern.permute.xlu0 0
        %4677 = vperm.xlu0 %4676, %v4571
        %v4678 = vpop.permute.xlu0 %4677
        %4681 = vset.pattern.permute.xlu0 0
        %4682 = vperm.xlu0 %4681, %v4572
        %v4683 = vpop.permute.xlu0 %4682
        %4686 = vset.pattern.permute.xlu0 0
        %4687 = vperm.xlu0 %4686, %v4573
        %v4688 = vpop.permute.xlu0 %4687
        %4691 = vset.pattern.permute.xlu0 0
        %4692 = vperm.xlu0 %4691, %v4574
        %v4693 = vpop.permute.xlu0 %4692
        %4696 = vset.pattern.permute.xlu0 0
        %4697 = vperm.xlu0 %4696, %v4575
        %v4698 = vpop.permute.xlu0 %4697
        %4701 = vset.pattern.permute.xlu0 0
        %4702 = vperm.xlu0 %4701, %v4576
        %v4703 = vpop.permute.xlu0 %4702
        %4706 = vset.pattern.permute.xlu0 0
        %4707 = vperm.xlu0 %4706, %v4577
        %v4708 = vpop.permute.xlu0 %4707
        %4711 = vset.pattern.permute.xlu0 0
        %4712 = vperm.xlu0 %4711, %v4578
        %v4713 = vpop.permute.xlu0 %4712
        %4716 = vset.pattern.permute.xlu0 0
        %4717 = vperm.xlu0 %4716, %v4579
        %v4718 = vpop.permute.xlu0 %4717
        %4721 = vset.pattern.permute.xlu0 0
        %4722 = vperm.xlu0 %4721, %v4580
        %v4723 = vpop.permute.xlu0 %4722
        %4726 = vset.pattern.permute.xlu0 0
        %4727 = vperm.xlu0 %4726, %v4581
        %v4728 = vpop.permute.xlu0 %4727
        %4731 = vset.pattern.permute.xlu0 0
        %4732 = vperm.xlu0 %4731, %v4582
        %v4733 = vpop.permute.xlu0 %4732
        %4736 = vset.pattern.permute.xlu0 0
        %4737 = vperm.xlu0 %4736, %v4583
        %v4738 = vpop.permute.xlu0 %4737
        %4741 = vset.pattern.permute.xlu0 0
        %4742 = vperm.xlu0 %4741, %v4584
        %v4743 = vpop.permute.xlu0 %4742
        %v4745 = vadd.f32 %v4521, %v4588
        %v4746 = vadd.f32 %v4522, %v4593
        %v4747 = vadd.f32 %v4523, %v4598
        %v4748 = vadd.f32 %v4524, %v4603
        %v4749 = vadd.f32 %v4525, %v4608
        %v4750 = vadd.f32 %v4526, %v4613
        %v4751 = vadd.f32 %v4527, %v4618
        %v4752 = vadd.f32 %v4528, %v4623
        %v4753 = vadd.f32 %v4529, %v4628
        %v4754 = vadd.f32 %v4530, %v4633
        %v4755 = vadd.f32 %v4531, %v4638
        %v4756 = vadd.f32 %v4532, %v4643
        %v4757 = vadd.f32 %v4533, %v4648
        %v4758 = vadd.f32 %v4534, %v4653
        %v4759 = vadd.f32 %v4535, %v4658
        %v4760 = vadd.f32 %v4536, %v4663
        %v4761 = vadd.f32 %v4537, %v4668
        %v4762 = vadd.f32 %v4538, %v4673
        %v4763 = vadd.f32 %v4539, %v4678
        %v4764 = vadd.f32 %v4540, %v4683
        %v4765 = vadd.f32 %v4541, %v4688
        %v4766 = vadd.f32 %v4542, %v4693
        %v4767 = vadd.f32 %v4543, %v4698
        %v4768 = vadd.f32 %v4544, %v4703
        %v4769 = vadd.f32 %v4545, %v4708
        %v4770 = vadd.f32 %v4546, %v4713
        %v4771 = vadd.f32 %v4547, %v4718
        %v4772 = vadd.f32 %v4548, %v4723
        %v4773 = vadd.f32 %v4549, %v4728
        %v4774 = vadd.f32 %v4550, %v4733
        %v4775 = vadd.f32 %v4551, %v4738
        %v4776 = vadd.f32 %v4552, %v4743
        %v4777 = vtanh.pop %v4745
        %v4778 = vtanh.pop %v4746
        %v4779 = vtanh.pop %v4747
        %v4780 = vtanh.pop %v4748
        %v4781 = vtanh.pop %v4749
        %v4782 = vtanh.pop %v4750
        %v4783 = vtanh.pop %v4751
        %v4784 = vtanh.pop %v4752
        %v4785 = vtanh.pop %v4753
        %v4786 = vtanh.pop %v4754
        %v4787 = vtanh.pop %v4755
        %v4788 = vtanh.pop %v4756
        %v4789 = vtanh.pop %v4757
        %v4790 = vtanh.pop %v4758
        %v4791 = vtanh.pop %v4759
        %v4792 = vtanh.pop %v4760
        %v4793 = vtanh.pop %v4761
        %v4794 = vtanh.pop %v4762
        %v4795 = vtanh.pop %v4763
        %v4796 = vtanh.pop %v4764
        %v4797 = vtanh.pop %v4765
        %v4798 = vtanh.pop %v4766
        %v4799 = vtanh.pop %v4767
        %v4800 = vtanh.pop %v4768
        %v4801 = vtanh.pop %v4769
        %v4802 = vtanh.pop %v4770
        %v4803 = vtanh.pop %v4771
        %v4804 = vtanh.pop %v4772
        %v4805 = vtanh.pop %v4773
        %v4806 = vtanh.pop %v4774
        %v4807 = vtanh.pop %v4775
        %v4808 = vtanh.pop %v4776
        %vm4809 = vcmp.lt.s32.totalorder %v270, 64
        %v4810 = vsel %vm4809, 1, 0
        %vm4811 = vcmp.eq.s32.totalorder %v4810, 1
        %v4812 = vsel %vm4811, %v4777, 0.0
        %v4813 = vsel %vm4811, %v4778, 0.0
        %v4814 = vsel %vm4811, %v4779, 0.0
        %v4815 = vsel %vm4811, %v4780, 0.0
        %v4816 = vsel %vm4811, %v4781, 0.0
        %v4817 = vsel %vm4811, %v4782, 0.0
        %v4818 = vsel %vm4811, %v4783, 0.0
        %v4819 = vsel %vm4811, %v4784, 0.0
        %v4820 = vsel %vm4811, %v4785, 0.0
        %v4821 = vsel %vm4811, %v4786, 0.0
        %v4822 = vsel %vm4811, %v4787, 0.0
        %v4823 = vsel %vm4811, %v4788, 0.0
        %v4824 = vsel %vm4811, %v4789, 0.0
        %v4825 = vsel %vm4811, %v4790, 0.0
        %v4826 = vsel %vm4811, %v4791, 0.0
        %v4827 = vsel %vm4811, %v4792, 0.0
        %v4828 = vsel %vm4811, %v4793, 0.0
        %v4829 = vsel %vm4811, %v4794, 0.0
        %v4830 = vsel %vm4811, %v4795, 0.0
        %v4831 = vsel %vm4811, %v4796, 0.0
        %v4832 = vsel %vm4811, %v4797, 0.0
        %v4833 = vsel %vm4811, %v4798, 0.0
        %v4834 = vsel %vm4811, %v4799, 0.0
        %v4835 = vsel %vm4811, %v4800, 0.0
        %v4836 = vsel %vm4811, %v4801, 0.0
        %v4837 = vsel %vm4811, %v4802, 0.0
        %v4838 = vsel %vm4811, %v4803, 0.0
        %v4839 = vsel %vm4811, %v4804, 0.0
        %v4840 = vsel %vm4811, %v4805, 0.0
        %v4841 = vsel %vm4811, %v4806, 0.0
        %v4842 = vsel %vm4811, %v4807, 0.0
        %v4843 = vsel %vm4811, %v4808, 0.0
        %4844 = vadd.xlane.f32.xlu0 %v4812
        %v4845 = vpop.xlane.xlu0 %4844
        %4846 = vadd.xlane.f32.xlu0 %v4813
        %v4847 = vpop.xlane.xlu0 %4846
        %4848 = vadd.xlane.f32.xlu0 %v4814
        %v4849 = vpop.xlane.xlu0 %4848
        %4850 = vadd.xlane.f32.xlu0 %v4815
        %v4851 = vpop.xlane.xlu0 %4850
        %4852 = vadd.xlane.f32.xlu0 %v4816
        %v4853 = vpop.xlane.xlu0 %4852
        %4854 = vadd.xlane.f32.xlu0 %v4817
        %v4855 = vpop.xlane.xlu0 %4854
        %4856 = vadd.xlane.f32.xlu0 %v4818
        %v4857 = vpop.xlane.xlu0 %4856
        %4858 = vadd.xlane.f32.xlu0 %v4819
        %v4859 = vpop.xlane.xlu0 %4858
        %4860 = vadd.xlane.f32.xlu0 %v4820
        %v4861 = vpop.xlane.xlu0 %4860
        %4862 = vadd.xlane.f32.xlu0 %v4821
        %v4863 = vpop.xlane.xlu0 %4862
        %4864 = vadd.xlane.f32.xlu0 %v4822
        %v4865 = vpop.xlane.xlu0 %4864
        %4866 = vadd.xlane.f32.xlu0 %v4823
        %v4867 = vpop.xlane.xlu0 %4866
        %4868 = vadd.xlane.f32.xlu0 %v4824
        %v4869 = vpop.xlane.xlu0 %4868
        %4870 = vadd.xlane.f32.xlu0 %v4825
        %v4871 = vpop.xlane.xlu0 %4870
        %4872 = vadd.xlane.f32.xlu0 %v4826
        %v4873 = vpop.xlane.xlu0 %4872
        %4874 = vadd.xlane.f32.xlu0 %v4827
        %v4875 = vpop.xlane.xlu0 %4874
        %4876 = vadd.xlane.f32.xlu0 %v4828
        %v4877 = vpop.xlane.xlu0 %4876
        %4878 = vadd.xlane.f32.xlu0 %v4829
        %v4879 = vpop.xlane.xlu0 %4878
        %4880 = vadd.xlane.f32.xlu0 %v4830
        %v4881 = vpop.xlane.xlu0 %4880
        %4882 = vadd.xlane.f32.xlu0 %v4831
        %v4883 = vpop.xlane.xlu0 %4882
        %4884 = vadd.xlane.f32.xlu0 %v4832
        %v4885 = vpop.xlane.xlu0 %4884
        %4886 = vadd.xlane.f32.xlu0 %v4833
        %v4887 = vpop.xlane.xlu0 %4886
        %4888 = vadd.xlane.f32.xlu0 %v4834
        %v4889 = vpop.xlane.xlu0 %4888
        %4890 = vadd.xlane.f32.xlu0 %v4835
        %v4891 = vpop.xlane.xlu0 %4890
        %4892 = vadd.xlane.f32.xlu0 %v4836
        %v4893 = vpop.xlane.xlu0 %4892
        %4894 = vadd.xlane.f32.xlu0 %v4837
        %v4895 = vpop.xlane.xlu0 %4894
        %4896 = vadd.xlane.f32.xlu0 %v4838
        %v4897 = vpop.xlane.xlu0 %4896
        %4898 = vadd.xlane.f32.xlu0 %v4839
        %v4899 = vpop.xlane.xlu0 %4898
        %4900 = vadd.xlane.f32.xlu0 %v4840
        %v4901 = vpop.xlane.xlu0 %4900
        %4902 = vadd.xlane.f32.xlu0 %v4841
        %v4903 = vpop.xlane.xlu0 %4902
        %4904 = vadd.xlane.f32.xlu0 %v4842
        %v4905 = vpop.xlane.xlu0 %4904
        %4906 = vadd.xlane.f32.xlu0 %v4843
        %v4907 = vpop.xlane.xlu0 %4906
        %v4908 = vmul.f32 %v4845, 0.015625
        %v4909 = vmul.f32 %v4847, 0.015625
        %v4910 = vmul.f32 %v4849, 0.015625
        %v4911 = vmul.f32 %v4851, 0.015625
        %v4912 = vmul.f32 %v4853, 0.015625
        %v4913 = vmul.f32 %v4855, 0.015625
        %v4914 = vmul.f32 %v4857, 0.015625
        %v4915 = vmul.f32 %v4859, 0.015625
        %v4916 = vmul.f32 %v4861, 0.015625
        %v4917 = vmul.f32 %v4863, 0.015625
        %v4918 = vmul.f32 %v4865, 0.015625
        %v4919 = vmul.f32 %v4867, 0.015625
        %v4920 = vmul.f32 %v4869, 0.015625
        %v4921 = vmul.f32 %v4871, 0.015625
        %v4922 = vmul.f32 %v4873, 0.015625
        %v4923 = vmul.f32 %v4875, 0.015625
        %v4924 = vmul.f32 %v4877, 0.015625
        %v4925 = vmul.f32 %v4879, 0.015625
        %v4926 = vmul.f32 %v4881, 0.015625
        %v4927 = vmul.f32 %v4883, 0.015625
        %v4928 = vmul.f32 %v4885, 0.015625
        %v4929 = vmul.f32 %v4887, 0.015625
        %v4930 = vmul.f32 %v4889, 0.015625
        %v4931 = vmul.f32 %v4891, 0.015625
        %v4932 = vmul.f32 %v4893, 0.015625
        %v4933 = vmul.f32 %v4895, 0.015625
        %v4934 = vmul.f32 %v4897, 0.015625
        %v4935 = vmul.f32 %v4899, 0.015625
        %v4936 = vmul.f32 %v4901, 0.015625
        %v4937 = vmul.f32 %v4903, 0.015625
        %v4938 = vmul.f32 %v4905, 0.015625
        %v4939 = vmul.f32 %v4907, 0.015625
        %v4940 = vmul.f32 %v4812, %v4812
        %v4941 = vmul.f32 %v4813, %v4813
        %v4942 = vmul.f32 %v4814, %v4814
        %v4943 = vmul.f32 %v4815, %v4815
        %v4944 = vmul.f32 %v4816, %v4816
        %v4945 = vmul.f32 %v4817, %v4817
        %v4946 = vmul.f32 %v4818, %v4818
        %v4947 = vmul.f32 %v4819, %v4819
        %v4948 = vmul.f32 %v4820, %v4820
        %v4949 = vmul.f32 %v4821, %v4821
        %v4950 = vmul.f32 %v4822, %v4822
        %v4951 = vmul.f32 %v4823, %v4823
        %v4952 = vmul.f32 %v4824, %v4824
        %v4953 = vmul.f32 %v4825, %v4825
        %v4954 = vmul.f32 %v4826, %v4826
        %v4955 = vmul.f32 %v4827, %v4827
        %v4956 = vmul.f32 %v4828, %v4828
        %v4957 = vmul.f32 %v4829, %v4829
        %v4958 = vmul.f32 %v4830, %v4830
        %v4959 = vmul.f32 %v4831, %v4831
        %v4960 = vmul.f32 %v4832, %v4832
        %v4961 = vmul.f32 %v4833, %v4833
        %v4962 = vmul.f32 %v4834, %v4834
        %v4963 = vmul.f32 %v4835, %v4835
        %v4964 = vmul.f32 %v4836, %v4836
        %v4965 = vmul.f32 %v4837, %v4837
        %v4966 = vmul.f32 %v4838, %v4838
        %v4967 = vmul.f32 %v4839, %v4839
        %v4968 = vmul.f32 %v4840, %v4840
        %v4969 = vmul.f32 %v4841, %v4841
        %v4970 = vmul.f32 %v4842, %v4842
        %v4971 = vmul.f32 %v4843, %v4843
        %4972 = vadd.xlane.f32.xlu0 %v4940
        %v4973 = vpop.xlane.xlu0 %4972
        %4974 = vadd.xlane.f32.xlu0 %v4941
        %v4975 = vpop.xlane.xlu0 %4974
        %4976 = vadd.xlane.f32.xlu0 %v4942
        %v4977 = vpop.xlane.xlu0 %4976
        %4978 = vadd.xlane.f32.xlu0 %v4943
        %v4979 = vpop.xlane.xlu0 %4978
        %4980 = vadd.xlane.f32.xlu0 %v4944
        %v4981 = vpop.xlane.xlu0 %4980
        %4982 = vadd.xlane.f32.xlu0 %v4945
        %v4983 = vpop.xlane.xlu0 %4982
        %4984 = vadd.xlane.f32.xlu0 %v4946
        %v4985 = vpop.xlane.xlu0 %4984
        %4986 = vadd.xlane.f32.xlu0 %v4947
        %v4987 = vpop.xlane.xlu0 %4986
        %4988 = vadd.xlane.f32.xlu0 %v4948
        %v4989 = vpop.xlane.xlu0 %4988
        %4990 = vadd.xlane.f32.xlu0 %v4949
        %v4991 = vpop.xlane.xlu0 %4990
        %4992 = vadd.xlane.f32.xlu0 %v4950
        %v4993 = vpop.xlane.xlu0 %4992
        %4994 = vadd.xlane.f32.xlu0 %v4951
        %v4995 = vpop.xlane.xlu0 %4994
        %4996 = vadd.xlane.f32.xlu0 %v4952
        %v4997 = vpop.xlane.xlu0 %4996
        %4998 = vadd.xlane.f32.xlu0 %v4953
        %v4999 = vpop.xlane.xlu0 %4998
        %5000 = vadd.xlane.f32.xlu0 %v4954
        %v5001 = vpop.xlane.xlu0 %5000
        %5002 = vadd.xlane.f32.xlu0 %v4955
        %v5003 = vpop.xlane.xlu0 %5002
        %5004 = vadd.xlane.f32.xlu0 %v4956
        %v5005 = vpop.xlane.xlu0 %5004
        %5006 = vadd.xlane.f32.xlu0 %v4957
        %v5007 = vpop.xlane.xlu0 %5006
        %5008 = vadd.xlane.f32.xlu0 %v4958
        %v5009 = vpop.xlane.xlu0 %5008
        %5010 = vadd.xlane.f32.xlu0 %v4959
        %v5011 = vpop.xlane.xlu0 %5010
        %5012 = vadd.xlane.f32.xlu0 %v4960
        %v5013 = vpop.xlane.xlu0 %5012
        %5014 = vadd.xlane.f32.xlu0 %v4961
        %v5015 = vpop.xlane.xlu0 %5014
        %5016 = vadd.xlane.f32.xlu0 %v4962
        %v5017 = vpop.xlane.xlu0 %5016
        %5018 = vadd.xlane.f32.xlu0 %v4963
        %v5019 = vpop.xlane.xlu0 %5018
        %5020 = vadd.xlane.f32.xlu0 %v4964
        %v5021 = vpop.xlane.xlu0 %5020
        %5022 = vadd.xlane.f32.xlu0 %v4965
        %v5023 = vpop.xlane.xlu0 %5022
        %5024 = vadd.xlane.f32.xlu0 %v4966
        %v5025 = vpop.xlane.xlu0 %5024
        %5026 = vadd.xlane.f32.xlu0 %v4967
        %v5027 = vpop.xlane.xlu0 %5026
        %5028 = vadd.xlane.f32.xlu0 %v4968
        %v5029 = vpop.xlane.xlu0 %5028
        %5030 = vadd.xlane.f32.xlu0 %v4969
        %v5031 = vpop.xlane.xlu0 %5030
        %5032 = vadd.xlane.f32.xlu0 %v4970
        %v5033 = vpop.xlane.xlu0 %5032
        %5034 = vadd.xlane.f32.xlu0 %v4971
        %v5035 = vpop.xlane.xlu0 %5034
        %v5036 = vmul.f32 %v4973, 0.015625
        %v5037 = vmul.f32 %v4975, 0.015625
        %v5038 = vmul.f32 %v4977, 0.015625
        %v5039 = vmul.f32 %v4979, 0.015625
        %v5040 = vmul.f32 %v4981, 0.015625
        %v5041 = vmul.f32 %v4983, 0.015625
        %v5042 = vmul.f32 %v4985, 0.015625
        %v5043 = vmul.f32 %v4987, 0.015625
        %v5044 = vmul.f32 %v4989, 0.015625
        %v5045 = vmul.f32 %v4991, 0.015625
        %v5046 = vmul.f32 %v4993, 0.015625
        %v5047 = vmul.f32 %v4995, 0.015625
        %v5048 = vmul.f32 %v4997, 0.015625
        %v5049 = vmul.f32 %v4999, 0.015625
        %v5050 = vmul.f32 %v5001, 0.015625
        %v5051 = vmul.f32 %v5003, 0.015625
        %v5052 = vmul.f32 %v5005, 0.015625
        %v5053 = vmul.f32 %v5007, 0.015625
        %v5054 = vmul.f32 %v5009, 0.015625
        %v5055 = vmul.f32 %v5011, 0.015625
        %v5056 = vmul.f32 %v5013, 0.015625
        %v5057 = vmul.f32 %v5015, 0.015625
        %v5058 = vmul.f32 %v5017, 0.015625
        %v5059 = vmul.f32 %v5019, 0.015625
        %v5060 = vmul.f32 %v5021, 0.015625
        %v5061 = vmul.f32 %v5023, 0.015625
        %v5062 = vmul.f32 %v5025, 0.015625
        %v5063 = vmul.f32 %v5027, 0.015625
        %v5064 = vmul.f32 %v5029, 0.015625
        %v5065 = vmul.f32 %v5031, 0.015625
        %v5066 = vmul.f32 %v5033, 0.015625
        %v5067 = vmul.f32 %v5035, 0.015625
        %v5068 = vmul.f32 %v4908, %v4908
        %v5069 = vmul.f32 %v4909, %v4909
        %v5070 = vmul.f32 %v4910, %v4910
        %v5071 = vmul.f32 %v4911, %v4911
        %v5072 = vmul.f32 %v4912, %v4912
        %v5073 = vmul.f32 %v4913, %v4913
        %v5074 = vmul.f32 %v4914, %v4914
        %v5075 = vmul.f32 %v4915, %v4915
        %v5076 = vmul.f32 %v4916, %v4916
        %v5077 = vmul.f32 %v4917, %v4917
        %v5078 = vmul.f32 %v4918, %v4918
        %v5079 = vmul.f32 %v4919, %v4919
        %v5080 = vmul.f32 %v4920, %v4920
        %v5081 = vmul.f32 %v4921, %v4921
        %v5082 = vmul.f32 %v4922, %v4922
        %v5083 = vmul.f32 %v4923, %v4923
        %v5084 = vmul.f32 %v4924, %v4924
        %v5085 = vmul.f32 %v4925, %v4925
        %v5086 = vmul.f32 %v4926, %v4926
        %v5087 = vmul.f32 %v4927, %v4927
        %v5088 = vmul.f32 %v4928, %v4928
        %v5089 = vmul.f32 %v4929, %v4929
        %v5090 = vmul.f32 %v4930, %v4930
        %v5091 = vmul.f32 %v4931, %v4931
        %v5092 = vmul.f32 %v4932, %v4932
        %v5093 = vmul.f32 %v4933, %v4933
        %v5094 = vmul.f32 %v4934, %v4934
        %v5095 = vmul.f32 %v4935, %v4935
        %v5096 = vmul.f32 %v4936, %v4936
        %v5097 = vmul.f32 %v4937, %v4937
        %v5098 = vmul.f32 %v4938, %v4938
        %v5099 = vmul.f32 %v4939, %v4939
        %v5100 = vsub.f32 %v5036, %v5068
        %v5101 = vsub.f32 %v5037, %v5069
        %v5102 = vsub.f32 %v5038, %v5070
        %v5103 = vsub.f32 %v5039, %v5071
        %v5104 = vsub.f32 %v5040, %v5072
        %v5105 = vsub.f32 %v5041, %v5073
        %v5106 = vsub.f32 %v5042, %v5074
        %v5107 = vsub.f32 %v5043, %v5075
        %v5108 = vsub.f32 %v5044, %v5076
        %v5109 = vsub.f32 %v5045, %v5077
        %v5110 = vsub.f32 %v5046, %v5078
        %v5111 = vsub.f32 %v5047, %v5079
        %v5112 = vsub.f32 %v5048, %v5080
        %v5113 = vsub.f32 %v5049, %v5081
        %v5114 = vsub.f32 %v5050, %v5082
        %v5115 = vsub.f32 %v5051, %v5083
        %v5116 = vsub.f32 %v5052, %v5084
        %v5117 = vsub.f32 %v5053, %v5085
        %v5118 = vsub.f32 %v5054, %v5086
        %v5119 = vsub.f32 %v5055, %v5087
        %v5120 = vsub.f32 %v5056, %v5088
        %v5121 = vsub.f32 %v5057, %v5089
        %v5122 = vsub.f32 %v5058, %v5090
        %v5123 = vsub.f32 %v5059, %v5091
        %v5124 = vsub.f32 %v5060, %v5092
        %v5125 = vsub.f32 %v5061, %v5093
        %v5126 = vsub.f32 %v5062, %v5094
        %v5127 = vsub.f32 %v5063, %v5095
        %v5128 = vsub.f32 %v5064, %v5096
        %v5129 = vsub.f32 %v5065, %v5097
        %v5130 = vsub.f32 %v5066, %v5098
        %v5131 = vsub.f32 %v5067, %v5099
        %v5132 = vmax.f32 %v5100, 0.0
        %v5133 = vmax.f32 %v5101, 0.0
        %v5134 = vmax.f32 %v5102, 0.0
        %v5135 = vmax.f32 %v5103, 0.0
        %v5136 = vmax.f32 %v5104, 0.0
        %v5137 = vmax.f32 %v5105, 0.0
        %v5138 = vmax.f32 %v5106, 0.0
        %v5139 = vmax.f32 %v5107, 0.0
        %v5140 = vmax.f32 %v5108, 0.0
        %v5141 = vmax.f32 %v5109, 0.0
        %v5142 = vmax.f32 %v5110, 0.0
        %v5143 = vmax.f32 %v5111, 0.0
        %v5144 = vmax.f32 %v5112, 0.0
        %v5145 = vmax.f32 %v5113, 0.0
        %v5146 = vmax.f32 %v5114, 0.0
        %v5147 = vmax.f32 %v5115, 0.0
        %v5148 = vmax.f32 %v5116, 0.0
        %v5149 = vmax.f32 %v5117, 0.0
        %v5150 = vmax.f32 %v5118, 0.0
        %v5151 = vmax.f32 %v5119, 0.0
        %v5152 = vmax.f32 %v5120, 0.0
        %v5153 = vmax.f32 %v5121, 0.0
        %v5154 = vmax.f32 %v5122, 0.0
        %v5155 = vmax.f32 %v5123, 0.0
        %v5156 = vmax.f32 %v5124, 0.0
        %v5157 = vmax.f32 %v5125, 0.0
        %v5158 = vmax.f32 %v5126, 0.0
        %v5159 = vmax.f32 %v5127, 0.0
        %v5160 = vmax.f32 %v5128, 0.0
        %v5161 = vmax.f32 %v5129, 0.0
        %v5162 = vmax.f32 %v5130, 0.0
        %v5163 = vmax.f32 %v5131, 0.0
        %v5164 = vsub.f32 %v4777, %v4908
        %v5165 = vsub.f32 %v4778, %v4909
        %v5166 = vsub.f32 %v4779, %v4910
        %v5167 = vsub.f32 %v4780, %v4911
        %v5168 = vsub.f32 %v4781, %v4912
        %v5169 = vsub.f32 %v4782, %v4913
        %v5170 = vsub.f32 %v4783, %v4914
        %v5171 = vsub.f32 %v4784, %v4915
        %v5172 = vsub.f32 %v4785, %v4916
        %v5173 = vsub.f32 %v4786, %v4917
        %v5174 = vsub.f32 %v4787, %v4918
        %v5175 = vsub.f32 %v4788, %v4919
        %v5176 = vsub.f32 %v4789, %v4920
        %v5177 = vsub.f32 %v4790, %v4921
        %v5178 = vsub.f32 %v4791, %v4922
        %v5179 = vsub.f32 %v4792, %v4923
        %v5180 = vsub.f32 %v4793, %v4924
        %v5181 = vsub.f32 %v4794, %v4925
        %v5182 = vsub.f32 %v4795, %v4926
        %v5183 = vsub.f32 %v4796, %v4927
        %v5184 = vsub.f32 %v4797, %v4928
        %v5185 = vsub.f32 %v4798, %v4929
        %v5186 = vsub.f32 %v4799, %v4930
        %v5187 = vsub.f32 %v4800, %v4931
        %v5188 = vsub.f32 %v4801, %v4932
        %v5189 = vsub.f32 %v4802, %v4933
        %v5190 = vsub.f32 %v4803, %v4934
        %v5191 = vsub.f32 %v4804, %v4935
        %v5192 = vsub.f32 %v4805, %v4936
        %v5193 = vsub.f32 %v4806, %v4937
        %v5194 = vsub.f32 %v4807, %v4938
        %v5195 = vsub.f32 %v4808, %v4939
        %v5196 = vadd.f32 %v5132, 1e-05
        %v5197 = vadd.f32 %v5133, 1e-05
        %v5198 = vadd.f32 %v5134, 1e-05
        %v5199 = vadd.f32 %v5135, 1e-05
        %v5200 = vadd.f32 %v5136, 1e-05
        %v5201 = vadd.f32 %v5137, 1e-05
        %v5202 = vadd.f32 %v5138, 1e-05
        %v5203 = vadd.f32 %v5139, 1e-05
        %v5204 = vadd.f32 %v5140, 1e-05
        %v5205 = vadd.f32 %v5141, 1e-05
        %v5206 = vadd.f32 %v5142, 1e-05
        %v5207 = vadd.f32 %v5143, 1e-05
        %v5208 = vadd.f32 %v5144, 1e-05
        %v5209 = vadd.f32 %v5145, 1e-05
        %v5210 = vadd.f32 %v5146, 1e-05
        %v5211 = vadd.f32 %v5147, 1e-05
        %v5212 = vadd.f32 %v5148, 1e-05
        %v5213 = vadd.f32 %v5149, 1e-05
        %v5214 = vadd.f32 %v5150, 1e-05
        %v5215 = vadd.f32 %v5151, 1e-05
        %v5216 = vadd.f32 %v5152, 1e-05
        %v5217 = vadd.f32 %v5153, 1e-05
        %v5218 = vadd.f32 %v5154, 1e-05
        %v5219 = vadd.f32 %v5155, 1e-05
        %v5220 = vadd.f32 %v5156, 1e-05
        %v5221 = vadd.f32 %v5157, 1e-05
        %v5222 = vadd.f32 %v5158, 1e-05
        %v5223 = vadd.f32 %v5159, 1e-05
        %v5224 = vadd.f32 %v5160, 1e-05
        %v5225 = vadd.f32 %v5161, 1e-05
        %v5226 = vadd.f32 %v5162, 1e-05
        %v5227 = vadd.f32 %v5163, 1e-05
        %v5228 = vrsqrt.pop %v5196
        %v5229 = vrsqrt.pop %v5197
        %v5230 = vrsqrt.pop %v5198
        %v5231 = vrsqrt.pop %v5199
        %v5232 = vrsqrt.pop %v5200
        %v5233 = vrsqrt.pop %v5201
        %v5234 = vrsqrt.pop %v5202
        %v5235 = vrsqrt.pop %v5203
        %v5236 = vrsqrt.pop %v5204
        %v5237 = vrsqrt.pop %v5205
        %v5238 = vrsqrt.pop %v5206
        %v5239 = vrsqrt.pop %v5207
        %v5240 = vrsqrt.pop %v5208
        %v5241 = vrsqrt.pop %v5209
        %v5242 = vrsqrt.pop %v5210
        %v5243 = vrsqrt.pop %v5211
        %v5244 = vrsqrt.pop %v5212
        %v5245 = vrsqrt.pop %v5213
        %v5246 = vrsqrt.pop %v5214
        %v5247 = vrsqrt.pop %v5215
        %v5248 = vrsqrt.pop %v5216
        %v5249 = vrsqrt.pop %v5217
        %v5250 = vrsqrt.pop %v5218
        %v5251 = vrsqrt.pop %v5219
        %v5252 = vrsqrt.pop %v5220
        %v5253 = vrsqrt.pop %v5221
        %v5254 = vrsqrt.pop %v5222
        %v5255 = vrsqrt.pop %v5223
        %v5256 = vrsqrt.pop %v5224
        %v5257 = vrsqrt.pop %v5225
        %v5258 = vrsqrt.pop %v5226
        %v5259 = vrsqrt.pop %v5227
        %v5260 = vmul.f32 %v5164, %v5228
        %v5261 = vmul.f32 %v5165, %v5229
        %v5262 = vmul.f32 %v5166, %v5230
        %v5263 = vmul.f32 %v5167, %v5231
        %v5264 = vmul.f32 %v5168, %v5232
        %v5265 = vmul.f32 %v5169, %v5233
        %v5266 = vmul.f32 %v5170, %v5234
        %v5267 = vmul.f32 %v5171, %v5235
        %v5268 = vmul.f32 %v5172, %v5236
        %v5269 = vmul.f32 %v5173, %v5237
        %v5270 = vmul.f32 %v5174, %v5238
        %v5271 = vmul.f32 %v5175, %v5239
        %v5272 = vmul.f32 %v5176, %v5240
        %v5273 = vmul.f32 %v5177, %v5241
        %v5274 = vmul.f32 %v5178, %v5242
        %v5275 = vmul.f32 %v5179, %v5243
        %v5276 = vmul.f32 %v5180, %v5244
        %v5277 = vmul.f32 %v5181, %v5245
        %v5278 = vmul.f32 %v5182, %v5246
        %v5279 = vmul.f32 %v5183, %v5247
        %v5280 = vmul.f32 %v5184, %v5248
        %v5281 = vmul.f32 %v5185, %v5249
        %v5282 = vmul.f32 %v5186, %v5250
        %v5283 = vmul.f32 %v5187, %v5251
        %v5284 = vmul.f32 %v5188, %v5252
        %v5285 = vmul.f32 %v5189, %v5253
        %v5286 = vmul.f32 %v5190, %v5254
        %v5287 = vmul.f32 %v5191, %v5255
        %v5288 = vmul.f32 %v5192, %v5256
        %v5289 = vmul.f32 %v5193, %v5257
        %v5290 = vmul.f32 %v5194, %v5258
        %v5291 = vmul.f32 %v5195, %v5259
        %5292 = vst [vmem:[%s203] sm:$0xff] %v5260
        %5293 = vst [vmem:[%s203 + $0x8] sm:$0xff] %v5261
        %5294 = vst [vmem:[%s203 + $0x10] sm:$0xff] %v5262
        %5295 = vst [vmem:[%s203 + $0x18] sm:$0xff] %v5263
        %5296 = vst [vmem:[%s203 + $0x20] sm:$0xff] %v5264
        %5297 = vst [vmem:[%s203 + $0x28] sm:$0xff] %v5265
        %5298 = vst [vmem:[%s203 + $0x30] sm:$0xff] %v5266
        %5299 = vst [vmem:[%s203 + $0x38] sm:$0xff] %v5267
        %5300 = vst [vmem:[%s203 + $0x40] sm:$0xff] %v5268
        %5301 = vst [vmem:[%s203 + $0x48] sm:$0xff] %v5269
        %5302 = vst [vmem:[%s203 + $0x50] sm:$0xff] %v5270
        %5303 = vst [vmem:[%s203 + $0x58] sm:$0xff] %v5271
        %5304 = vst [vmem:[%s203 + $0x60] sm:$0xff] %v5272
        %5305 = vst [vmem:[%s203 + $0x68] sm:$0xff] %v5273
        %5306 = vst [vmem:[%s203 + $0x70] sm:$0xff] %v5274
        %5307 = vst [vmem:[%s203 + $0x78] sm:$0xff] %v5275
        %5308 = vst [vmem:[%s203 + $0x80] sm:$0xff] %v5276
        %5309 = vst [vmem:[%s203 + $0x88] sm:$0xff] %v5277
        %5310 = vst [vmem:[%s203 + $0x90] sm:$0xff] %v5278
        %5311 = vst [vmem:[%s203 + $0x98] sm:$0xff] %v5279
        %5312 = vst [vmem:[%s203 + $0xa0] sm:$0xff] %v5280
        %5313 = vst [vmem:[%s203 + $0xa8] sm:$0xff] %v5281
        %5314 = vst [vmem:[%s203 + $0xb0] sm:$0xff] %v5282
        %5315 = vst [vmem:[%s203 + $0xb8] sm:$0xff] %v5283
        %5316 = vst [vmem:[%s203 + $0xc0] sm:$0xff] %v5284
        %5317 = vst [vmem:[%s203 + $0xc8] sm:$0xff] %v5285
        %5318 = vst [vmem:[%s203 + $0xd0] sm:$0xff] %v5286
        %5319 = vst [vmem:[%s203 + $0xd8] sm:$0xff] %v5287
        %5320 = vst [vmem:[%s203 + $0xe0] sm:$0xff] %v5288
        %5321 = vst [vmem:[%s203 + $0xe8] sm:$0xff] %v5289
        %5322 = vst [vmem:[%s203 + $0xf0] sm:$0xff] %v5290
        %5323 = vst [vmem:[%s203 + $0xf8] sm:$0xff] %v5291
        %s5324 = sand.u32 %s97, 1
        %s5325 = scalar_lea.sflag [#allocation4], %s5324
        %s5326 = sand.u32 %s97, 1
        %s5327 = smul.addr %s5326, 256
        %s5328 = scalar_lea.vmem [#allocation7], %s5327
        // Predicated region
        $region41: #{tpu_custom_call.1} parent=31 // pred_check
          %p5329 = pneg %p107
        $region42: #{tpu_custom_call.1} parent=31 // pred_check_branch
          %5331 = sbr.rel (%p5329) target = $region44
        $region43: #{tpu_custom_call.1} parent=31 // pred_region
          %s5333 = ssub.s32 4096, 4096
          %5334 = vsyncadd %s5325, %s5333
          %s5335 = smul.addr %s21, 32
          %s5336 = smul.addr %s5335, 128
          %s5337 = scalar_lea.hbm %s3, %s5336
          %s5338 = sshll.u32 %s5328, 4
          %s5339 = int_to_ptr.vmem [resolvable:$true] %s5338
          %5344 = dma.vmem_to_hbm [thread:$0]  %s5339, 4096, %s5337, %s5325, 128, 128, 8
        $region44: #{tpu_custom_call.1} parent=31 // pred_fallthru
          _
      $region32: #{tpu_custom_call.1} parent=5 // pred_fallthru
        _
      %p5345 = scmp.le.s32.totalorder 2, %s16
      // Predicated region
      $region45: #{tpu_custom_call.1} parent=5 // pred_check
        %p5346 = pneg %p5345
      $region46: #{tpu_custom_call.1} parent=5 // pred_check_branch
        %5348 = sbr.rel (%p5346) target = $region48
      $region47: #{tpu_custom_call.1} parent=5 // pred_region
        %s5349 = ssub.s32 %s16, 2
        // Predicated region
        $region49: #{tpu_custom_call.1} parent=47 // pred_check
          %p5350 = pneg %p113
        $region50: #{tpu_custom_call.1} parent=47 // pred_check_branch
          %5352 = sbr.rel (%p5350) target = $region52
        $region51: #{tpu_custom_call.1} parent=47 // pred_region
          %s5353 = sand.u32 %s98, 1
          %s5354 = scalar_lea.sflag [#allocation4], %s5353
          %s5355 = sand.u32 %s98, 1
          %s5356 = smul.addr %s5355, 256
          %s5357 = scalar_lea.vmem [#allocation7], %s5356
          %5358 = dma.done %s5354, 4096
        $region52: #{tpu_custom_call.1} parent=47 // pred_fallthru
          _
      $region48: #{tpu_custom_call.1} parent=5 // pred_fallthru
        _
    $region6: #{tpu_custom_call.1} parent=1 // loop_footer
      %s20 = sadd.s32 1, %s16
    $region7: #{tpu_custom_call.1} parent=1 // loop_footer_branch
      %15 = sbr.rel target = $region3
    $region8: #{tpu_custom_call.1} parent=1 // loop_exit
      _
    %5359 = vsyncpa [#allocation3], 1
    %s5360 = scalar_lea.sflag [#allocation3], 1
    %5361 = vsyncpa %s5360, 1
    %5362 = vsyncpa [#allocation6], 1
    %5363 = vsyncpa [#allocation4], 1
    %s5364 = scalar_lea.sflag [#allocation4], 1
    %5365 = vsyncpa %s5364, 1

</llo_original>
